<compile_context>
chip_gen: v7x
topology: tpu7x:2x2x1
jax: 0.10.0
libtpu: 0.0.40
codegen_flags: <defaults>
</compile_context>

<pallas_src>
import jax
import jax.numpy as jnp
from jax.experimental import pallas as pl
from jax.experimental.pallas import tpu as pltpu

# ---- small sizes, structurally identical to VQAModel (torch sizes in comments) ----
B        = 8      # batch
SEQ      = 8      # question length
VOCAB    = 256    # vocab_size      (torch: 10000)
WORD_EMB = 128    # word_emb_size   (torch: 300)
HIDDEN   = 128    # LSTM hidden     (torch: 512)
EMB      = 256    # emb_size        (torch: 1024)   == 2*HIDDEN (fflayer input)
IMG_FEAT = 512    # image features  (torch: 4096)
MLP_HID  = 256    # mlp hidden      (torch: 1000)
OUT      = 128    # output_size     (torch: 1000)

assert EMB == 2 * HIDDEN  # Linear(2*num_layers*hidden, emb), num_layers=1, fwd dir


# ----------------------------- fused Pallas kernel ------------------------------

def _vqa_fused_kernel(img_ref, q_ref, emb_tbl_ref,
                      w_img_ref, b_img_ref,
                      w_ih_ref, b_gate_ref, w_hh_ref,
                      w_ff_ref, b_ff_ref,
                      w1_ref, b1_ref, w2_ref, b2_ref,
                      o_ref,
                      xp_scr):
    f32 = jnp.float32
    bf16 = jnp.bfloat16

    # --- ImageEmbedding: tanh(images @ W_img^T + b_img) -------------------------
    img_emb = jnp.tanh(
        jnp.dot(img_ref[...], w_img_ref[...], preferred_element_type=f32)
        + b_img_ref[...])                                         # (B, EMB) f32

    # --- Embedding(questions) fused in-kernel: one_hot @ table on the MXU -------
    # q_ref is (SEQ*B, 1) int32; one_hot is (SEQ*B, VOCAB) bf16.
    vocab_iota = jax.lax.broadcasted_iota(jnp.int32, (SEQ * B, VOCAB), 1)
    onehot = jnp.where(vocab_iota == q_ref[...], 1.0, 0.0).astype(bf16)
    embeds = jnp.dot(onehot, emb_tbl_ref[...],
                     preferred_element_type=f32)                  # (SEQ*B, WORD_EMB)

    # --- LSTM input projection for all timesteps in one (SEQ*B, 4H) matmul ------
    # gate bias (b_ih + b_hh) pre-summed outside; result parked in VMEM scratch.
    xp_scr[...] = (
        jnp.dot(embeds.astype(bf16), w_ih_ref[...], preferred_element_type=f32)
        + b_gate_ref[...])                                        # (SEQ*B, 4H) f32

    # --- forward-direction LSTM recurrence, fully unrolled (SEQ=8) --------------
    # h/c are each exactly one (8,128) f32 vreg; the MXU RHS (w_hh) is sourced
    # from VMEM inside the loop instead of being held live as 32 vregs.
    h = jnp.zeros((B, HIDDEN), f32)
    c = jnp.zeros((B, HIDDEN), f32)
    for t in range(SEQ):
        gates = xp_scr[pl.ds(t * B, B), :] + jnp.dot(
            h.astype(bf16), w_hh_ref[...], preferred_element_type=f32)  # (B, 4H)
        # 128-lane-aligned gate slices (PyTorch gate order: i, f, g, o)
        i = jax.nn.sigmoid(gates[:, 0 * HIDDEN:1 * HIDDEN])
        f = jax.nn.sigmoid(gates[:, 1 * HIDDEN:2 * HIDDEN])
        g = jnp.tanh(gates[:, 2 * HIDDEN:3 * HIDDEN])
        o = jax.nn.sigmoid(gates[:, 3 * HIDDEN:4 * HIDDEN])
        c = f * c + i * g
        h = o * jnp.tanh(c)

    # --- QuesEmbedding fflayer: tanh([h || c] @ W_ff^T + b_ff) -------------------
    # cat([h, c], dim=1) @ W_ff == h @ W_ff[:H] + c @ W_ff[H:]  (no lane-concat).
    ques_pre = (jnp.dot(h.astype(bf16), w_ff_ref[pl.ds(0, HIDDEN), :],
                        preferred_element_type=f32)
                + jnp.dot(c.astype(bf16), w_ff_ref[pl.ds(HIDDEN, HIDDEN), :],
                          preferred_element_type=f32))
    ques_emb = jnp.tanh(ques_pre + b_ff_ref[...])                 # (B, EMB) f32

    # --- combined + MLP head (Dropout(p=0.5) is identity in eval mode) ----------
    combined = img_emb * ques_emb                                 # (B, EMB) f32
    hid = jnp.tanh(
        jnp.dot(combined.astype(bf16), w1_ref[...], preferred_element_type=f32)
        + b1_ref[...])                                            # (B, MLP_HID) f32
    o_ref[...] = (
        jnp.dot(hid.astype(bf16), w2_ref[...], preferred_element_type=f32)
        + b2_ref[...])                                            # (B, OUT) f32, lane-dense


# ------------------------ one-time param preparation -----------------------------

def prepare_params(params):
    """One-time conversion of torch-layout f32 params into kernel-ready arrays
    (bf16 weights, pre-summed gate bias, (1, N) bias rows).  Do NOT call per
    forward -- this is exactly the per-call overhead the review flagged."""
    bf16 = jnp.bfloat16
    return dict(
        emb_table=params["emb_table"].astype(bf16),                       # (VOCAB, WORD_EMB)
        w_img=params["w_img"].astype(bf16),                               # (IMG_FEAT, EMB)
        b_img=params["b_img"].reshape(1, EMB),
        w_ih_t=params["w_ih_t"].astype(bf16),                             # (WORD_EMB, 4H)
        b_gate=(params["b_ih"] + params["b_hh"]).reshape(1, 4 * HIDDEN),
        w_hh_t=params["w_hh_t"].astype(bf16),                             # (HIDDEN, 4H)
        w_ff=params["w_ff"].astype(bf16),                                 # (2H, EMB)
        b_ff=params["b_ff"].reshape(1, EMB),
        w1=params["w1"].astype(bf16),                                     # (EMB, MLP_HID)
        b1=params["b1"].reshape(1, MLP_HID),
        w2=params["w2"].astype(bf16),                                     # (MLP_HID, OUT)
        b2=params["b2"].reshape(1, OUT),
    )


# --------------------------------- forward --------------------------------------

def vqa_forward(kparams, images_bf16, questions, image_ids=None):
    """Fused forward.

    kparams:     output of prepare_params() (kernel-ready, bf16 weights)
    images_bf16: (B, IMG_FEAT) bf16   -- caller casts once, not per call
    questions:   (SEQ, B) int32       -- batch_first=False, like the PyTorch model
    image_ids:   unused (kept for API parity with the PyTorch forward)
    """
    # Only per-call prep: 256-byte reshape of the question ids for the in-kernel
    # one-hot gather (lane-broadcast column vector).
    q2d = questions.reshape(SEQ * B, 1)

    full = lambda i: (0, 0)
    return pl.pallas_call(
        _vqa_fused_kernel,
        out_shape=jax.ShapeDtypeStruct((B, OUT), jnp.float32),
        grid=(1,),
        in_specs=[
            pl.BlockSpec((B, IMG_FEAT), full),            # images (bf16)
            pl.BlockSpec((SEQ * B, 1), full),             # question ids (int32)
            pl.BlockSpec((VOCAB, WORD_EMB), full),        # embedding table (bf16)
            pl.BlockSpec((IMG_FEAT, EMB), full),          # w_img (bf16)
            pl.BlockSpec((1, EMB), full),                 # b_img (f32)
            pl.BlockSpec((WORD_EMB, 4 * HIDDEN), full),   # w_ih^T (bf16)
            pl.BlockSpec((1, 4 * HIDDEN), full),          # b_ih + b_hh (f32)
            pl.BlockSpec((HIDDEN, 4 * HIDDEN), full),     # w_hh^T (bf16)
            pl.BlockSpec((2 * HIDDEN, EMB), full),        # w_ff^T (bf16)
            pl.BlockSpec((1, EMB), full),                 # b_ff (f32)
            pl.BlockSpec((EMB, MLP_HID), full),           # w1^T (bf16)
            pl.BlockSpec((1, MLP_HID), full),             # b1 (f32)
            pl.BlockSpec((MLP_HID, OUT), full),           # w2^T (bf16)
            pl.BlockSpec((1, OUT), full),                 # b2 (f32)
        ],
        out_specs=pl.BlockSpec((B, OUT), full),
        scratch_shapes=[pltpu.VMEM((SEQ * B, 4 * HIDDEN), jnp.float32)],
        compiler_params=pltpu.CompilerParams(
            dimension_semantics=("arbitrary",),
            vmem_limit_bytes=32 * 1024 * 1024),
    )(
        images_bf16,
        q2d,
        kparams["emb_table"],
        kparams["w_img"], kparams["b_img"],
        kparams["w_ih_t"], kparams["b_gate"], kparams["w_hh_t"],
        kparams["w_ff"], kparams["b_ff"],
        kparams["w1"], kparams["b1"], kparams["w2"], kparams["b2"],
    )


# ----------------------------- params & reference -------------------------------

def init_params(key):
    def u(key, shape, fan_in):
        k = 1.0 / jnp.sqrt(fan_in)
        return jax.random.uniform(key, shape, jnp.float32, -k, k)

    ks = jax.random.split(key, 12)
    return dict(
        # ImageEmbedding: Linear(IMG_FEAT, EMB) + Tanh   (weights stored transposed)
        w_img=u(ks[0], (IMG_FEAT, EMB), IMG_FEAT),
        b_img=u(ks[1], (EMB,), IMG_FEAT),
        # nn.Embedding(VOCAB, WORD_EMB)
        emb_table=jax.random.normal(ks[2], (VOCAB, WORD_EMB), jnp.float32),
        # LSTM forward direction (backward direction unused by the model output)
        w_ih_t=u(ks[3], (WORD_EMB, 4 * HIDDEN), HIDDEN),
        w_hh_t=u(ks[4], (HIDDEN, 4 * HIDDEN), HIDDEN),
        b_ih=u(ks[5], (4 * HIDDEN,), HIDDEN),
        b_hh=u(ks[6], (4 * HIDDEN,), HIDDEN),
        # QuesEmbedding fflayer: Linear(2*HIDDEN, EMB) + Tanh
        w_ff=u(ks[7], (2 * HIDDEN, EMB), 2 * HIDDEN),
        b_ff=u(ks[8], (EMB,), 2 * HIDDEN),
        # mlp: Linear(EMB, MLP_HID), Dropout, Tanh, Linear(MLP_HID, OUT)
        w1=u(ks[9], (EMB, MLP_HID), EMB),
        b1=u(ks[10], (MLP_HID,), EMB),
        w2=u(ks[11], (MLP_HID, OUT), MLP_HID),
        b2=u(jax.random.fold_in(key, 99), (OUT,), MLP_HID),
    )


def vqa_forward_ref(params, images, questions, matmul_dtype=jnp.float32):
    """Pure-JAX reference.  matmul_dtype=bfloat16 mirrors the kernel's mixed
    precision exactly; float32 is the exact PyTorch-semantics reference."""
    md = matmul_dtype

    def mm(a, b):
        return jnp.dot(a.astype(md), b.astype(md), preferred_element_type=jnp.float32)

    img_emb = jnp.tanh(mm(images, params["w_img"]) + params["b_img"])
    embeds = jnp.take(params["emb_table"], questions, axis=0)       # (SEQ, B, WORD_EMB)
    b_gate = params["b_ih"] + params["b_hh"]
    xp = mm(embeds.reshape(SEQ * B, WORD_EMB), params["w_ih_t"]
            ).reshape(SEQ, B, 4 * HIDDEN) + b_gate

    def step(carry, x_t):
        h, c = carry
        gates = x_t + mm(h, params["w_hh_t"])
        i = jax.nn.sigmoid(gates[:, 0 * HIDDEN:1 * HIDDEN])
        f = jax.nn.sigmoid(gates[:, 1 * HIDDEN:2 * HIDDEN])
        g = jnp.tanh(gates[:, 2 * HIDDEN:3 * HIDDEN])
        o = jax.nn.sigmoid(gates[:, 3 * HIDDEN:4 * HIDDEN])
        c = f * c + i * g
        h = o * jnp.tanh(c)
        return (h, c), None

    (h, c), _ = jax.lax.scan(
        step, (jnp.zeros((B, HIDDEN)), jnp.zeros((B, HIDDEN))), xp)
    hc = jnp.concatenate([h, c], axis=1)
    ques_emb = jnp.tanh(mm(hc, params["w_ff"]) + params["b_ff"])
    combined = img_emb * ques_emb
    hid = jnp.tanh(mm(combined, params["w1"]) + params["b1"])
    return mm(hid, params["w2"]) + params["b2"]


# ----------------------------------- main ---------------------------------------

if __name__ == "__main__":
    key = jax.random.PRNGKey(0)
    k_img, k_q, k_p = jax.random.split(key, 3)

    params = init_params(k_p)
    kparams = prepare_params(params)                 # ONE-TIME weight prep (not per call)

    images = jax.random.normal(k_img, (B, IMG_FEAT), jnp.float32)
    images_bf16 = images.astype(jnp.bfloat16)        # ONE-TIME cast (not per call)
    questions = jax.random.randint(k_q, (SEQ, B), 0, VOCAB, jnp.int32)  # batch_first=False
    image_ids = jnp.arange(B, dtype=jnp.int32)       # unused by the forward, like PyTorch

    fwd = jax.jit(vqa_forward)
    out = jax.block_until_ready(fwd(kparams, images_bf16, questions, image_ids))

    # Tight check against a reference that uses the same bf16-in / f32-accum matmuls.
    ref_mixed = jax.block_until_ready(
        vqa_forward_ref(params, images, questions, matmul_dtype=jnp.bfloat16))
    # Looser sanity check against the exact f32 (PyTorch-semantics) reference;
    # the gap here is purely bf16 MXU-input quantization.
    ref_f32 = jax.block_until_ready(
        vqa_forward_ref(params, images, questions, matmul_dtype=jnp.float32))

    assert out.shape == (B, OUT) and out.dtype == jnp.float32
    assert jnp.allclose(out, ref_mixed, atol=2e-3, rtol=2e-3), \
        "mismatch vs mixed-precision reference"
    assert jnp.allclose(out, ref_f32, atol=1e-1, rtol=1e-1), \
        "mismatch vs f32 reference beyond bf16 quantization tolerance"
    print("KERNEL_OK")
</pallas_src>

<mosaic_0001>
module attributes {stable_mosaic.version = 11 : i64} {
  func.func @_vqa_fused_kernel(%arg0: i32, %arg1: memref<8x512xbf16, #tpu.memory_space<vmem>>, %arg2: memref<64x1xi32, #tpu.memory_space<vmem>>, %arg3: memref<256x128xbf16, #tpu.memory_space<vmem>>, %arg4: memref<512x256xbf16, #tpu.memory_space<vmem>>, %arg5: memref<1x256xf32, #tpu.memory_space<vmem>>, %arg6: memref<128x512xbf16, #tpu.memory_space<vmem>>, %arg7: memref<1x512xf32, #tpu.memory_space<vmem>>, %arg8: memref<128x512xbf16, #tpu.memory_space<vmem>>, %arg9: memref<256x256xbf16, #tpu.memory_space<vmem>>, %arg10: memref<1x256xf32, #tpu.memory_space<vmem>>, %arg11: memref<256x256xbf16, #tpu.memory_space<vmem>>, %arg12: memref<1x256xf32, #tpu.memory_space<vmem>>, %arg13: memref<256x128xbf16, #tpu.memory_space<vmem>>, %arg14: memref<1x128xf32, #tpu.memory_space<vmem>>, %arg15: memref<8x128xf32, #tpu.memory_space<vmem>>, %arg16: memref<64x512xf32, #tpu.memory_space<vmem>>) attributes {dimension_semantics = [#tpu.dimension_semantics<arbitrary>], iteration_bounds = array<i64: 1>, scalar_prefetch = 0 : i64, scratch_operands = 1 : i64, tpu.core_type = #tpu.core_type<tc>, window_params = [{pipeline_mode = #tpu.pipeline_mode<synchronous>, transform_indices = @transform_0, window_bounds = array<i64: 8, 512>}, {pipeline_mode = #tpu.pipeline_mode<synchronous>, transform_indices = @transform_1, window_bounds = array<i64: 64, 1>}, {pipeline_mode = #tpu.pipeline_mode<synchronous>, transform_indices = @transform_2, window_bounds = array<i64: 256, 128>}, {pipeline_mode = #tpu.pipeline_mode<synchronous>, transform_indices = @transform_3, window_bounds = array<i64: 512, 256>}, {pipeline_mode = #tpu.pipeline_mode<synchronous>, transform_indices = @transform_4, window_bounds = array<i64: 1, 256>}, {pipeline_mode = #tpu.pipeline_mode<synchronous>, transform_indices = @transform_5, window_bounds = array<i64: 128, 512>}, {pipeline_mode = #tpu.pipeline_mode<synchronous>, transform_indices = @transform_6, window_bounds = array<i64: 1, 512>}, {pipeline_mode = #tpu.pipeline_mode<synchronous>, transform_indices = @transform_7, window_bounds = array<i64: 128, 512>}, {pipeline_mode = #tpu.pipeline_mode<synchronous>, transform_indices = @transform_8, window_bounds = array<i64: 256, 256>}, {pipeline_mode = #tpu.pipeline_mode<synchronous>, transform_indices = @transform_9, window_bounds = array<i64: 1, 256>}, {pipeline_mode = #tpu.pipeline_mode<synchronous>, transform_indices = @transform_10, window_bounds = array<i64: 256, 256>}, {pipeline_mode = #tpu.pipeline_mode<synchronous>, transform_indices = @transform_11, window_bounds = array<i64: 1, 256>}, {pipeline_mode = #tpu.pipeline_mode<synchronous>, transform_indices = @transform_12, window_bounds = array<i64: 256, 128>}, {pipeline_mode = #tpu.pipeline_mode<synchronous>, transform_indices = @transform_13, window_bounds = array<i64: 1, 128>}, {pipeline_mode = #tpu.pipeline_mode<synchronous>, transform_indices = @transform_14, window_bounds = array<i64: 8, 128>}]} {
    %c0 = arith.constant 0 : index
    %c0_0 = arith.constant 0 : index
    %0 = vector.load %arg1[%c0, %c0_0] : memref<8x512xbf16, #tpu.memory_space<vmem>>, vector<8x512xbf16>
    %c0_1 = arith.constant 0 : index
    %c0_2 = arith.constant 0 : index
    %1 = vector.load %arg4[%c0_1, %c0_2] : memref<512x256xbf16, #tpu.memory_space<vmem>>, vector<512x256xbf16>
    %cst = arith.constant dense<0.000000e+00> : vector<8x256xf32>
    %2 = tpu.matmul %0, %1, %cst {dimension_numbers = #tpu.dot_dimension_numbers<[1], [0], [0], [1], [0, 0, 1, 1], [], []>} : vector<8x512xbf16>, vector<512x256xbf16>, vector<8x256xf32> -> vector<8x256xf32>
    %c0_3 = arith.constant 0 : index
    %c0_4 = arith.constant 0 : index
    %3 = vector.load %arg5[%c0_3, %c0_4] : memref<1x256xf32, #tpu.memory_space<vmem>>, vector<1x256xf32>
    %4 = vector.broadcast %3 : vector<1x256xf32> to vector<8x256xf32>
    %5 = arith.addf %2, %4 : vector<8x256xf32>
    %6 = math.tanh %5 : vector<8x256xf32>
    %7 = tpu.iota {dimensions = array<i32: 1>} : vector<64x256xi32>
    %c0_5 = arith.constant 0 : index
    %c0_6 = arith.constant 0 : index
    %8 = vector.load %arg2[%c0_5, %c0_6] : memref<64x1xi32, #tpu.memory_space<vmem>>, vector<64x1xi32>
    %9 = vector.broadcast %8 : vector<64x1xi32> to vector<64x256xi32>
    %10 = arith.cmpi eq, %7, %9 : vector<64x256xi32>
    %cst_7 = arith.constant 1.000000e+00 : f32
    %cst_8 = arith.constant 0.000000e+00 : f32
    %11 = vector.broadcast %cst_7 : f32 to vector<64x256xf32>
    %12 = vector.broadcast %cst_8 : f32 to vector<64x256xf32>
    %13 = arith.select %10, %11, %12 : vector<64x256xi1>, vector<64x256xf32>
    %14 = arith.truncf %13 : vector<64x256xf32> to vector<64x256xbf16>
    %c0_9 = arith.constant 0 : index
    %c0_10 = arith.constant 0 : index
    %15 = vector.load %arg3[%c0_9, %c0_10] : memref<256x128xbf16, #tpu.memory_space<vmem>>, vector<256x128xbf16>
    %cst_11 = arith.constant dense<0.000000e+00> : vector<64x128xf32>
    %16 = tpu.matmul %14, %15, %cst_11 {dimension_numbers = #tpu.dot_dimension_numbers<[1], [0], [0], [1], [0, 0, 1, 1], [], []>} : vector<64x256xbf16>, vector<256x128xbf16>, vector<64x128xf32> -> vector<64x128xf32>
    %17 = arith.truncf %16 : vector<64x128xf32> to vector<64x128xbf16>
    %c0_12 = arith.constant 0 : index
    %c0_13 = arith.constant 0 : index
    %18 = vector.load %arg6[%c0_12, %c0_13] : memref<128x512xbf16, #tpu.memory_space<vmem>>, vector<128x512xbf16>
    %cst_14 = arith.constant dense<0.000000e+00> : vector<64x512xf32>
    %19 = tpu.matmul %17, %18, %cst_14 {dimension_numbers = #tpu.dot_dimension_numbers<[1], [0], [0], [1], [0, 0, 1, 1], [], []>} : vector<64x128xbf16>, vector<128x512xbf16>, vector<64x512xf32> -> vector<64x512xf32>
    %c0_15 = arith.constant 0 : index
    %c0_16 = arith.constant 0 : index
    %20 = vector.load %arg7[%c0_15, %c0_16] : memref<1x512xf32, #tpu.memory_space<vmem>>, vector<1x512xf32>
    %21 = vector.broadcast %20 : vector<1x512xf32> to vector<64x512xf32>
    %22 = arith.addf %19, %21 : vector<64x512xf32>
    %c0_17 = arith.constant 0 : index
    %c0_18 = arith.constant 0 : index
    %23 = vector.load %arg16[%c0_17, %c0_18] : memref<64x512xf32, #tpu.memory_space<vmem>>, vector<64x512xf32>
    tpu.vector_store %arg16[%c0_17, %c0_18], %22 {strides = array<i32>} : memref<64x512xf32, #tpu.memory_space<vmem>>, vector<64x512xf32>,
    %cst_19 = arith.constant 0.000000e+00 : f32
    %24 = vector.broadcast %cst_19 : f32 to vector<8x128xf32>
    %cst_20 = arith.constant 0.000000e+00 : f32
    %25 = vector.broadcast %cst_20 : f32 to vector<8x128xf32>
    %c0_21 = arith.constant 0 : index
    %c0_22 = arith.constant 0 : index
    %26 = vector.load %arg16[%c0_21, %c0_22] : memref<64x512xf32, #tpu.memory_space<vmem>>, vector<8x512xf32>
    %27 = arith.truncf %24 : vector<8x128xf32> to vector<8x128xbf16>
    %c0_23 = arith.constant 0 : index
    %c0_24 = arith.constant 0 : index
    %28 = vector.load %arg8[%c0_23, %c0_24] : memref<128x512xbf16, #tpu.memory_space<vmem>>, vector<128x512xbf16>
    %cst_25 = arith.constant dense<0.000000e+00> : vector<8x512xf32>
    %29 = tpu.matmul %27, %28, %cst_25 {dimension_numbers = #tpu.dot_dimension_numbers<[1], [0], [0], [1], [0, 0, 1, 1], [], []>} : vector<8x128xbf16>, vector<128x512xbf16>, vector<8x512xf32> -> vector<8x512xf32>
    %30 = arith.addf %26, %29 : vector<8x512xf32>
    %31 = vector.extract_strided_slice %30 {offsets = [0, 0], sizes = [8, 128], strides = [1, 1]} : vector<8x512xf32> to vector<8x128xf32>
    %32 = arith.negf %31 : vector<8x128xf32>
    %33 = math.exp %32 : vector<8x128xf32>
    %cst_26 = arith.constant 1.000000e+00 : f32
    %34 = vector.broadcast %cst_26 : f32 to vector<8x128xf32>
    %35 = arith.addf %34, %33 : vector<8x128xf32>
    %36 = arith.divf %34, %35 : vector<8x128xf32>
    %37 = vector.extract_strided_slice %30 {offsets = [0, 128], sizes = [8, 128], strides = [1, 1]} : vector<8x512xf32> to vector<8x128xf32>
    %38 = arith.negf %37 : vector<8x128xf32>
    %39 = math.exp %38 : vector<8x128xf32>
    %cst_27 = arith.constant 1.000000e+00 : f32
    %40 = vector.broadcast %cst_27 : f32 to vector<8x128xf32>
    %41 = arith.addf %40, %39 : vector<8x128xf32>
    %42 = arith.divf %40, %41 : vector<8x128xf32>
    %43 = vector.extract_strided_slice %30 {offsets = [0, 256], sizes = [8, 128], strides = [1, 1]} : vector<8x512xf32> to vector<8x128xf32>
    %44 = math.tanh %43 : vector<8x128xf32>
    %45 = vector.extract_strided_slice %30 {offsets = [0, 384], sizes = [8, 128], strides = [1, 1]} : vector<8x512xf32> to vector<8x128xf32>
    %46 = arith.negf %45 : vector<8x128xf32>
    %47 = math.exp %46 : vector<8x128xf32>
    %cst_28 = arith.constant 1.000000e+00 : f32
    %48 = vector.broadcast %cst_28 : f32 to vector<8x128xf32>
    %49 = arith.addf %48, %47 : vector<8x128xf32>
    %50 = arith.divf %48, %49 : vector<8x128xf32>
    %51 = arith.mulf %42, %25 : vector<8x128xf32>
    %52 = arith.mulf %36, %44 : vector<8x128xf32>
    %53 = arith.addf %51, %52 : vector<8x128xf32>
    %54 = math.tanh %53 : vector<8x128xf32>
    %55 = arith.mulf %50, %54 : vector<8x128xf32>
    %c8 = arith.constant 8 : index
    %c0_29 = arith.constant 0 : index
    %56 = vector.load %arg16[%c8, %c0_29] : memref<64x512xf32, #tpu.memory_space<vmem>>, vector<8x512xf32>
    %57 = arith.truncf %55 : vector<8x128xf32> to vector<8x128xbf16>
    %c0_30 = arith.constant 0 : index
    %c0_31 = arith.constant 0 : index
    %58 = vector.load %arg8[%c0_30, %c0_31] : memref<128x512xbf16, #tpu.memory_space<vmem>>, vector<128x512xbf16>
    %cst_32 = arith.constant dense<0.000000e+00> : vector<8x512xf32>
    %59 = tpu.matmul %57, %58, %cst_32 {dimension_numbers = #tpu.dot_dimension_numbers<[1], [0], [0], [1], [0, 0, 1, 1], [], []>} : vector<8x128xbf16>, vector<128x512xbf16>, vector<8x512xf32> -> vector<8x512xf32>
    %60 = arith.addf %56, %59 : vector<8x512xf32>
    %61 = vector.extract_strided_slice %60 {offsets = [0, 0], sizes = [8, 128], strides = [1, 1]} : vector<8x512xf32> to vector<8x128xf32>
    %62 = arith.negf %61 : vector<8x128xf32>
    %63 = math.exp %62 : vector<8x128xf32>
    %cst_33 = arith.constant 1.000000e+00 : f32
    %64 = vector.broadcast %cst_33 : f32 to vector<8x128xf32>
    %65 = arith.addf %64, %63 : vector<8x128xf32>
    %66 = arith.divf %64, %65 : vector<8x128xf32>
    %67 = vector.extract_strided_slice %60 {offsets = [0, 128], sizes = [8, 128], strides = [1, 1]} : vector<8x512xf32> to vector<8x128xf32>
    %68 = arith.negf %67 : vector<8x128xf32>
    %69 = math.exp %68 : vector<8x128xf32>
    %cst_34 = arith.constant 1.000000e+00 : f32
    %70 = vector.broadcast %cst_34 : f32 to vector<8x128xf32>
    %71 = arith.addf %70, %69 : vector<8x128xf32>
    %72 = arith.divf %70, %71 : vector<8x128xf32>
    %73 = vector.extract_strided_slice %60 {offsets = [0, 256], sizes = [8, 128], strides = [1, 1]} : vector<8x512xf32> to vector<8x128xf32>
    %74 = math.tanh %73 : vector<8x128xf32>
    %75 = vector.extract_strided_slice %60 {offsets = [0, 384], sizes = [8, 128], strides = [1, 1]} : vector<8x512xf32> to vector<8x128xf32>
    %76 = arith.negf %75 : vector<8x128xf32>
    %77 = math.exp %76 : vector<8x128xf32>
    %cst_35 = arith.constant 1.000000e+00 : f32
    %78 = vector.broadcast %cst_35 : f32 to vector<8x128xf32>
    %79 = arith.addf %78, %77 : vector<8x128xf32>
    %80 = arith.divf %78, %79 : vector<8x128xf32>
    %81 = arith.mulf %72, %53 : vector<8x128xf32>
    %82 = arith.mulf %66, %74 : vector<8x128xf32>
    %83 = arith.addf %81, %82 : vector<8x128xf32>
    %84 = math.tanh %83 : vector<8x128xf32>
    %85 = arith.mulf %80, %84 : vector<8x128xf32>
    %c16 = arith.constant 16 : index
    %c0_36 = arith.constant 0 : index
    %86 = vector.load %arg16[%c16, %c0_36] : memref<64x512xf32, #tpu.memory_space<vmem>>, vector<8x512xf32>
    %87 = arith.truncf %85 : vector<8x128xf32> to vector<8x128xbf16>
    %c0_37 = arith.constant 0 : index
    %c0_38 = arith.constant 0 : index
    %88 = vector.load %arg8[%c0_37, %c0_38] : memref<128x512xbf16, #tpu.memory_space<vmem>>, vector<128x512xbf16>
    %cst_39 = arith.constant dense<0.000000e+00> : vector<8x512xf32>
    %89 = tpu.matmul %87, %88, %cst_39 {dimension_numbers = #tpu.dot_dimension_numbers<[1], [0], [0], [1], [0, 0, 1, 1], [], []>} : vector<8x128xbf16>, vector<128x512xbf16>, vector<8x512xf32> -> vector<8x512xf32>
    %90 = arith.addf %86, %89 : vector<8x512xf32>
    %91 = vector.extract_strided_slice %90 {offsets = [0, 0], sizes = [8, 128], strides = [1, 1]} : vector<8x512xf32> to vector<8x128xf32>
    %92 = arith.negf %91 : vector<8x128xf32>
    %93 = math.exp %92 : vector<8x128xf32>
    %cst_40 = arith.constant 1.000000e+00 : f32
    %94 = vector.broadcast %cst_40 : f32 to vector<8x128xf32>
    %95 = arith.addf %94, %93 : vector<8x128xf32>
    %96 = arith.divf %94, %95 : vector<8x128xf32>
    %97 = vector.extract_strided_slice %90 {offsets = [0, 128], sizes = [8, 128], strides = [1, 1]} : vector<8x512xf32> to vector<8x128xf32>
    %98 = arith.negf %97 : vector<8x128xf32>
    %99 = math.exp %98 : vector<8x128xf32>
    %cst_41 = arith.constant 1.000000e+00 : f32
    %100 = vector.broadcast %cst_41 : f32 to vector<8x128xf32>
    %101 = arith.addf %100, %99 : vector<8x128xf32>
    %102 = arith.divf %100, %101 : vector<8x128xf32>
    %103 = vector.extract_strided_slice %90 {offsets = [0, 256], sizes = [8, 128], strides = [1, 1]} : vector<8x512xf32> to vector<8x128xf32>
    %104 = math.tanh %103 : vector<8x128xf32>
    %105 = vector.extract_strided_slice %90 {offsets = [0, 384], sizes = [8, 128], strides = [1, 1]} : vector<8x512xf32> to vector<8x128xf32>
    %106 = arith.negf %105 : vector<8x128xf32>
    %107 = math.exp %106 : vector<8x128xf32>
    %cst_42 = arith.constant 1.000000e+00 : f32
    %108 = vector.broadcast %cst_42 : f32 to vector<8x128xf32>
    %109 = arith.addf %108, %107 : vector<8x128xf32>
    %110 = arith.divf %108, %109 : vector<8x128xf32>
    %111 = arith.mulf %102, %83 : vector<8x128xf32>
    %112 = arith.mulf %96, %104 : vector<8x128xf32>
    %113 = arith.addf %111, %112 : vector<8x128xf32>
    %114 = math.tanh %113 : vector<8x128xf32>
    %115 = arith.mulf %110, %114 : vector<8x128xf32>
    %c24 = arith.constant 24 : index
    %c0_43 = arith.constant 0 : index
    %116 = vector.load %arg16[%c24, %c0_43] : memref<64x512xf32, #tpu.memory_space<vmem>>, vector<8x512xf32>
    %117 = arith.truncf %115 : vector<8x128xf32> to vector<8x128xbf16>
    %c0_44 = arith.constant 0 : index
    %c0_45 = arith.constant 0 : index
    %118 = vector.load %arg8[%c0_44, %c0_45] : memref<128x512xbf16, #tpu.memory_space<vmem>>, vector<128x512xbf16>
    %cst_46 = arith.constant dense<0.000000e+00> : vector<8x512xf32>
    %119 = tpu.matmul %117, %118, %cst_46 {dimension_numbers = #tpu.dot_dimension_numbers<[1], [0], [0], [1], [0, 0, 1, 1], [], []>} : vector<8x128xbf16>, vector<128x512xbf16>, vector<8x512xf32> -> vector<8x512xf32>
    %120 = arith.addf %116, %119 : vector<8x512xf32>
    %121 = vector.extract_strided_slice %120 {offsets = [0, 0], sizes = [8, 128], strides = [1, 1]} : vector<8x512xf32> to vector<8x128xf32>
    %122 = arith.negf %121 : vector<8x128xf32>
    %123 = math.exp %122 : vector<8x128xf32>
    %cst_47 = arith.constant 1.000000e+00 : f32
    %124 = vector.broadcast %cst_47 : f32 to vector<8x128xf32>
    %125 = arith.addf %124, %123 : vector<8x128xf32>
    %126 = arith.divf %124, %125 : vector<8x128xf32>
    %127 = vector.extract_strided_slice %120 {offsets = [0, 128], sizes = [8, 128], strides = [1, 1]} : vector<8x512xf32> to vector<8x128xf32>
    %128 = arith.negf %127 : vector<8x128xf32>
    %129 = math.exp %128 : vector<8x128xf32>
    %cst_48 = arith.constant 1.000000e+00 : f32
    %130 = vector.broadcast %cst_48 : f32 to vector<8x128xf32>
    %131 = arith.addf %130, %129 : vector<8x128xf32>
    %132 = arith.divf %130, %131 : vector<8x128xf32>
    %133 = vector.extract_strided_slice %120 {offsets = [0, 256], sizes = [8, 128], strides = [1, 1]} : vector<8x512xf32> to vector<8x128xf32>
    %134 = math.tanh %133 : vector<8x128xf32>
    %135 = vector.extract_strided_slice %120 {offsets = [0, 384], sizes = [8, 128], strides = [1, 1]} : vector<8x512xf32> to vector<8x128xf32>
    %136 = arith.negf %135 : vector<8x128xf32>
    %137 = math.exp %136 : vector<8x128xf32>
    %cst_49 = arith.constant 1.000000e+00 : f32
    %138 = vector.broadcast %cst_49 : f32 to vector<8x128xf32>
    %139 = arith.addf %138, %137 : vector<8x128xf32>
    %140 = arith.divf %138, %139 : vector<8x128xf32>
    %141 = arith.mulf %132, %113 : vector<8x128xf32>
    %142 = arith.mulf %126, %134 : vector<8x128xf32>
    %143 = arith.addf %141, %142 : vector<8x128xf32>
    %144 = math.tanh %143 : vector<8x128xf32>
    %145 = arith.mulf %140, %144 : vector<8x128xf32>
    %c32 = arith.constant 32 : index
    %c0_50 = arith.constant 0 : index
    %146 = vector.load %arg16[%c32, %c0_50] : memref<64x512xf32, #tpu.memory_space<vmem>>, vector<8x512xf32>
    %147 = arith.truncf %145 : vector<8x128xf32> to vector<8x128xbf16>
    %c0_51 = arith.constant 0 : index
    %c0_52 = arith.constant 0 : index
    %148 = vector.load %arg8[%c0_51, %c0_52] : memref<128x512xbf16, #tpu.memory_space<vmem>>, vector<128x512xbf16>
    %cst_53 = arith.constant dense<0.000000e+00> : vector<8x512xf32>
    %149 = tpu.matmul %147, %148, %cst_53 {dimension_numbers = #tpu.dot_dimension_numbers<[1], [0], [0], [1], [0, 0, 1, 1], [], []>} : vector<8x128xbf16>, vector<128x512xbf16>, vector<8x512xf32> -> vector<8x512xf32>
    %150 = arith.addf %146, %149 : vector<8x512xf32>
    %151 = vector.extract_strided_slice %150 {offsets = [0, 0], sizes = [8, 128], strides = [1, 1]} : vector<8x512xf32> to vector<8x128xf32>
    %152 = arith.negf %151 : vector<8x128xf32>
    %153 = math.exp %152 : vector<8x128xf32>
    %cst_54 = arith.constant 1.000000e+00 : f32
    %154 = vector.broadcast %cst_54 : f32 to vector<8x128xf32>
    %155 = arith.addf %154, %153 : vector<8x128xf32>
    %156 = arith.divf %154, %155 : vector<8x128xf32>
    %157 = vector.extract_strided_slice %150 {offsets = [0, 128], sizes = [8, 128], strides = [1, 1]} : vector<8x512xf32> to vector<8x128xf32>
    %158 = arith.negf %157 : vector<8x128xf32>
    %159 = math.exp %158 : vector<8x128xf32>
    %cst_55 = arith.constant 1.000000e+00 : f32
    %160 = vector.broadcast %cst_55 : f32 to vector<8x128xf32>
    %161 = arith.addf %160, %159 : vector<8x128xf32>
    %162 = arith.divf %160, %161 : vector<8x128xf32>
    %163 = vector.extract_strided_slice %150 {offsets = [0, 256], sizes = [8, 128], strides = [1, 1]} : vector<8x512xf32> to vector<8x128xf32>
    %164 = math.tanh %163 : vector<8x128xf32>
    %165 = vector.extract_strided_slice %150 {offsets = [0, 384], sizes = [8, 128], strides = [1, 1]} : vector<8x512xf32> to vector<8x128xf32>
    %166 = arith.negf %165 : vector<8x128xf32>
    %167 = math.exp %166 : vector<8x128xf32>
    %cst_56 = arith.constant 1.000000e+00 : f32
    %168 = vector.broadcast %cst_56 : f32 to vector<8x128xf32>
    %169 = arith.addf %168, %167 : vector<8x128xf32>
    %170 = arith.divf %168, %169 : vector<8x128xf32>
    %171 = arith.mulf %162, %143 : vector<8x128xf32>
    %172 = arith.mulf %156, %164 : vector<8x128xf32>
    %173 = arith.addf %171, %172 : vector<8x128xf32>
    %174 = math.tanh %173 : vector<8x128xf32>
    %175 = arith.mulf %170, %174 : vector<8x128xf32>
    %c40 = arith.constant 40 : index
    %c0_57 = arith.constant 0 : index
    %176 = vector.load %arg16[%c40, %c0_57] : memref<64x512xf32, #tpu.memory_space<vmem>>, vector<8x512xf32>
    %177 = arith.truncf %175 : vector<8x128xf32> to vector<8x128xbf16>
    %c0_58 = arith.constant 0 : index
    %c0_59 = arith.constant 0 : index
    %178 = vector.load %arg8[%c0_58, %c0_59] : memref<128x512xbf16, #tpu.memory_space<vmem>>, vector<128x512xbf16>
    %cst_60 = arith.constant dense<0.000000e+00> : vector<8x512xf32>
    %179 = tpu.matmul %177, %178, %cst_60 {dimension_numbers = #tpu.dot_dimension_numbers<[1], [0], [0], [1], [0, 0, 1, 1], [], []>} : vector<8x128xbf16>, vector<128x512xbf16>, vector<8x512xf32> -> vector<8x512xf32>
    %180 = arith.addf %176, %179 : vector<8x512xf32>
    %181 = vector.extract_strided_slice %180 {offsets = [0, 0], sizes = [8, 128], strides = [1, 1]} : vector<8x512xf32> to vector<8x128xf32>
    %182 = arith.negf %181 : vector<8x128xf32>
    %183 = math.exp %182 : vector<8x128xf32>
    %cst_61 = arith.constant 1.000000e+00 : f32
    %184 = vector.broadcast %cst_61 : f32 to vector<8x128xf32>
    %185 = arith.addf %184, %183 : vector<8x128xf32>
    %186 = arith.divf %184, %185 : vector<8x128xf32>
    %187 = vector.extract_strided_slice %180 {offsets = [0, 128], sizes = [8, 128], strides = [1, 1]} : vector<8x512xf32> to vector<8x128xf32>
    %188 = arith.negf %187 : vector<8x128xf32>
    %189 = math.exp %188 : vector<8x128xf32>
    %cst_62 = arith.constant 1.000000e+00 : f32
    %190 = vector.broadcast %cst_62 : f32 to vector<8x128xf32>
    %191 = arith.addf %190, %189 : vector<8x128xf32>
    %192 = arith.divf %190, %191 : vector<8x128xf32>
    %193 = vector.extract_strided_slice %180 {offsets = [0, 256], sizes = [8, 128], strides = [1, 1]} : vector<8x512xf32> to vector<8x128xf32>
    %194 = math.tanh %193 : vector<8x128xf32>
    %195 = vector.extract_strided_slice %180 {offsets = [0, 384], sizes = [8, 128], strides = [1, 1]} : vector<8x512xf32> to vector<8x128xf32>
    %196 = arith.negf %195 : vector<8x128xf32>
    %197 = math.exp %196 : vector<8x128xf32>
    %cst_63 = arith.constant 1.000000e+00 : f32
    %198 = vector.broadcast %cst_63 : f32 to vector<8x128xf32>
    %199 = arith.addf %198, %197 : vector<8x128xf32>
    %200 = arith.divf %198, %199 : vector<8x128xf32>
    %201 = arith.mulf %192, %173 : vector<8x128xf32>
    %202 = arith.mulf %186, %194 : vector<8x128xf32>
    %203 = arith.addf %201, %202 : vector<8x128xf32>
    %204 = math.tanh %203 : vector<8x128xf32>
    %205 = arith.mulf %200, %204 : vector<8x128xf32>
    %c48 = arith.constant 48 : index
    %c0_64 = arith.constant 0 : index
    %206 = vector.load %arg16[%c48, %c0_64] : memref<64x512xf32, #tpu.memory_space<vmem>>, vector<8x512xf32>
    %207 = arith.truncf %205 : vector<8x128xf32> to vector<8x128xbf16>
    %c0_65 = arith.constant 0 : index
    %c0_66 = arith.constant 0 : index
    %208 = vector.load %arg8[%c0_65, %c0_66] : memref<128x512xbf16, #tpu.memory_space<vmem>>, vector<128x512xbf16>
    %cst_67 = arith.constant dense<0.000000e+00> : vector<8x512xf32>
    %209 = tpu.matmul %207, %208, %cst_67 {dimension_numbers = #tpu.dot_dimension_numbers<[1], [0], [0], [1], [0, 0, 1, 1], [], []>} : vector<8x128xbf16>, vector<128x512xbf16>, vector<8x512xf32> -> vector<8x512xf32>
    %210 = arith.addf %206, %209 : vector<8x512xf32>
    %211 = vector.extract_strided_slice %210 {offsets = [0, 0], sizes = [8, 128], strides = [1, 1]} : vector<8x512xf32> to vector<8x128xf32>
    %212 = arith.negf %211 : vector<8x128xf32>
    %213 = math.exp %212 : vector<8x128xf32>
    %cst_68 = arith.constant 1.000000e+00 : f32
    %214 = vector.broadcast %cst_68 : f32 to vector<8x128xf32>
    %215 = arith.addf %214, %213 : vector<8x128xf32>
    %216 = arith.divf %214, %215 : vector<8x128xf32>
    %217 = vector.extract_strided_slice %210 {offsets = [0, 128], sizes = [8, 128], strides = [1, 1]} : vector<8x512xf32> to vector<8x128xf32>
    %218 = arith.negf %217 : vector<8x128xf32>
    %219 = math.exp %218 : vector<8x128xf32>
    %cst_69 = arith.constant 1.000000e+00 : f32
    %220 = vector.broadcast %cst_69 : f32 to vector<8x128xf32>
    %221 = arith.addf %220, %219 : vector<8x128xf32>
    %222 = arith.divf %220, %221 : vector<8x128xf32>
    %223 = vector.extract_strided_slice %210 {offsets = [0, 256], sizes = [8, 128], strides = [1, 1]} : vector<8x512xf32> to vector<8x128xf32>
    %224 = math.tanh %223 : vector<8x128xf32>
    %225 = vector.extract_strided_slice %210 {offsets = [0, 384], sizes = [8, 128], strides = [1, 1]} : vector<8x512xf32> to vector<8x128xf32>
    %226 = arith.negf %225 : vector<8x128xf32>
    %227 = math.exp %226 : vector<8x128xf32>
    %cst_70 = arith.constant 1.000000e+00 : f32
    %228 = vector.broadcast %cst_70 : f32 to vector<8x128xf32>
    %229 = arith.addf %228, %227 : vector<8x128xf32>
    %230 = arith.divf %228, %229 : vector<8x128xf32>
    %231 = arith.mulf %222, %203 : vector<8x128xf32>
    %232 = arith.mulf %216, %224 : vector<8x128xf32>
    %233 = arith.addf %231, %232 : vector<8x128xf32>
    %234 = math.tanh %233 : vector<8x128xf32>
    %235 = arith.mulf %230, %234 : vector<8x128xf32>
    %c56 = arith.constant 56 : index
    %c0_71 = arith.constant 0 : index
    %236 = vector.load %arg16[%c56, %c0_71] : memref<64x512xf32, #tpu.memory_space<vmem>>, vector<8x512xf32>
    %237 = arith.truncf %235 : vector<8x128xf32> to vector<8x128xbf16>
    %c0_72 = arith.constant 0 : index
    %c0_73 = arith.constant 0 : index
    %238 = vector.load %arg8[%c0_72, %c0_73] : memref<128x512xbf16, #tpu.memory_space<vmem>>, vector<128x512xbf16>
    %cst_74 = arith.constant dense<0.000000e+00> : vector<8x512xf32>
    %239 = tpu.matmul %237, %238, %cst_74 {dimension_numbers = #tpu.dot_dimension_numbers<[1], [0], [0], [1], [0, 0, 1, 1], [], []>} : vector<8x128xbf16>, vector<128x512xbf16>, vector<8x512xf32> -> vector<8x512xf32>
    %240 = arith.addf %236, %239 : vector<8x512xf32>
    %241 = vector.extract_strided_slice %240 {offsets = [0, 0], sizes = [8, 128], strides = [1, 1]} : vector<8x512xf32> to vector<8x128xf32>
    %242 = arith.negf %241 : vector<8x128xf32>
    %243 = math.exp %242 : vector<8x128xf32>
    %cst_75 = arith.constant 1.000000e+00 : f32
    %244 = vector.broadcast %cst_75 : f32 to vector<8x128xf32>
    %245 = arith.addf %244, %243 : vector<8x128xf32>
    %246 = arith.divf %244, %245 : vector<8x128xf32>
    %247 = vector.extract_strided_slice %240 {offsets = [0, 128], sizes = [8, 128], strides = [1, 1]} : vector<8x512xf32> to vector<8x128xf32>
    %248 = arith.negf %247 : vector<8x128xf32>
    %249 = math.exp %248 : vector<8x128xf32>
    %cst_76 = arith.constant 1.000000e+00 : f32
    %250 = vector.broadcast %cst_76 : f32 to vector<8x128xf32>
    %251 = arith.addf %250, %249 : vector<8x128xf32>
    %252 = arith.divf %250, %251 : vector<8x128xf32>
    %253 = vector.extract_strided_slice %240 {offsets = [0, 256], sizes = [8, 128], strides = [1, 1]} : vector<8x512xf32> to vector<8x128xf32>
    %254 = math.tanh %253 : vector<8x128xf32>
    %255 = vector.extract_strided_slice %240 {offsets = [0, 384], sizes = [8, 128], strides = [1, 1]} : vector<8x512xf32> to vector<8x128xf32>
    %256 = arith.negf %255 : vector<8x128xf32>
    %257 = math.exp %256 : vector<8x128xf32>
    %cst_77 = arith.constant 1.000000e+00 : f32
    %258 = vector.broadcast %cst_77 : f32 to vector<8x128xf32>
    %259 = arith.addf %258, %257 : vector<8x128xf32>
    %260 = arith.divf %258, %259 : vector<8x128xf32>
    %261 = arith.mulf %252, %233 : vector<8x128xf32>
    %262 = arith.mulf %246, %254 : vector<8x128xf32>
    %263 = arith.addf %261, %262 : vector<8x128xf32>
    %264 = math.tanh %263 : vector<8x128xf32>
    %265 = arith.mulf %260, %264 : vector<8x128xf32>
    %266 = arith.truncf %265 : vector<8x128xf32> to vector<8x128xbf16>
    %c0_78 = arith.constant 0 : index
    %c0_79 = arith.constant 0 : index
    %267 = vector.load %arg9[%c0_78, %c0_79] : memref<256x256xbf16, #tpu.memory_space<vmem>>, vector<128x256xbf16>
    %cst_80 = arith.constant dense<0.000000e+00> : vector<8x256xf32>
    %268 = tpu.matmul %266, %267, %cst_80 {dimension_numbers = #tpu.dot_dimension_numbers<[1], [0], [0], [1], [0, 0, 1, 1], [], []>} : vector<8x128xbf16>, vector<128x256xbf16>, vector<8x256xf32> -> vector<8x256xf32>
    %269 = arith.truncf %263 : vector<8x128xf32> to vector<8x128xbf16>
    %c128 = arith.constant 128 : index
    %c0_81 = arith.constant 0 : index
    %270 = vector.load %arg9[%c128, %c0_81] : memref<256x256xbf16, #tpu.memory_space<vmem>>, vector<128x256xbf16>
    %cst_82 = arith.constant dense<0.000000e+00> : vector<8x256xf32>
    %271 = tpu.matmul %269, %270, %cst_82 {dimension_numbers = #tpu.dot_dimension_numbers<[1], [0], [0], [1], [0, 0, 1, 1], [], []>} : vector<8x128xbf16>, vector<128x256xbf16>, vector<8x256xf32> -> vector<8x256xf32>
    %272 = arith.addf %268, %271 : vector<8x256xf32>
    %c0_83 = arith.constant 0 : index
    %c0_84 = arith.constant 0 : index
    %273 = vector.load %arg10[%c0_83, %c0_84] : memref<1x256xf32, #tpu.memory_space<vmem>>, vector<1x256xf32>
    %274 = vector.broadcast %273 : vector<1x256xf32> to vector<8x256xf32>
    %275 = arith.addf %272, %274 : vector<8x256xf32>
    %276 = math.tanh %275 : vector<8x256xf32>
    %277 = arith.mulf %6, %276 : vector<8x256xf32>
    %278 = arith.truncf %277 : vector<8x256xf32> to vector<8x256xbf16>
    %c0_85 = arith.constant 0 : index
    %c0_86 = arith.constant 0 : index
    %279 = vector.load %arg11[%c0_85, %c0_86] : memref<256x256xbf16, #tpu.memory_space<vmem>>, vector<256x256xbf16>
    %cst_87 = arith.constant dense<0.000000e+00> : vector<8x256xf32>
    %280 = tpu.matmul %278, %279, %cst_87 {dimension_numbers = #tpu.dot_dimension_numbers<[1], [0], [0], [1], [0, 0, 1, 1], [], []>} : vector<8x256xbf16>, vector<256x256xbf16>, vector<8x256xf32> -> vector<8x256xf32>
    %c0_88 = arith.constant 0 : index
    %c0_89 = arith.constant 0 : index
    %281 = vector.load %arg12[%c0_88, %c0_89] : memref<1x256xf32, #tpu.memory_space<vmem>>, vector<1x256xf32>
    %282 = vector.broadcast %281 : vector<1x256xf32> to vector<8x256xf32>
    %283 = arith.addf %280, %282 : vector<8x256xf32>
    %284 = math.tanh %283 : vector<8x256xf32>
    %285 = arith.truncf %284 : vector<8x256xf32> to vector<8x256xbf16>
    %c0_90 = arith.constant 0 : index
    %c0_91 = arith.constant 0 : index
    %286 = vector.load %arg13[%c0_90, %c0_91] : memref<256x128xbf16, #tpu.memory_space<vmem>>, vector<256x128xbf16>
    %cst_92 = arith.constant dense<0.000000e+00> : vector<8x128xf32>
    %287 = tpu.matmul %285, %286, %cst_92 {dimension_numbers = #tpu.dot_dimension_numbers<[1], [0], [0], [1], [0, 0, 1, 1], [], []>} : vector<8x256xbf16>, vector<256x128xbf16>, vector<8x128xf32> -> vector<8x128xf32>
    %c0_93 = arith.constant 0 : index
    %c0_94 = arith.constant 0 : index
    %288 = vector.load %arg14[%c0_93, %c0_94] : memref<1x128xf32, #tpu.memory_space<vmem>>, vector<1x128xf32>
    %289 = vector.broadcast %288 : vector<1x128xf32> to vector<8x128xf32>
    %290 = arith.addf %287, %289 : vector<8x128xf32>
    %c0_95 = arith.constant 0 : index
    %c0_96 = arith.constant 0 : index
    %291 = vector.load %arg15[%c0_95, %c0_96] : memref<8x128xf32, #tpu.memory_space<vmem>>, vector<8x128xf32>
    tpu.vector_store %arg15[%c0_95, %c0_96], %290 {strides = array<i32>} : memref<8x128xf32, #tpu.memory_space<vmem>>, vector<8x128xf32>,
    return
  }
  func.func @transform_0(%arg0: i32) -> (i32, i32) {
    %c0_i32 = arith.constant 0 : i32
    %c0_i32_0 = arith.constant 0 : i32
    %c0_i32_1 = arith.constant 0 : i32
    return %c0_i32, %c0_i32_0 : i32, i32
  }
  func.func @transform_1(%arg0: i32) -> (i32, i32) {
    %c0_i32 = arith.constant 0 : i32
    %c0_i32_0 = arith.constant 0 : i32
    %c0_i32_1 = arith.constant 0 : i32
    return %c0_i32, %c0_i32_0 : i32, i32
  }
  func.func @transform_2(%arg0: i32) -> (i32, i32) {
    %c0_i32 = arith.constant 0 : i32
    %c0_i32_0 = arith.constant 0 : i32
    %c0_i32_1 = arith.constant 0 : i32
    return %c0_i32, %c0_i32_0 : i32, i32
  }
  func.func @transform_3(%arg0: i32) -> (i32, i32) {
    %c0_i32 = arith.constant 0 : i32
    %c0_i32_0 = arith.constant 0 : i32
    %c0_i32_1 = arith.constant 0 : i32
    return %c0_i32, %c0_i32_0 : i32, i32
  }
  func.func @transform_4(%arg0: i32) -> (i32, i32) {
    %c0_i32 = arith.constant 0 : i32
    %c0_i32_0 = arith.constant 0 : i32
    %c0_i32_1 = arith.constant 0 : i32
    return %c0_i32, %c0_i32_0 : i32, i32
  }
  func.func @transform_5(%arg0: i32) -> (i32, i32) {
    %c0_i32 = arith.constant 0 : i32
    %c0_i32_0 = arith.constant 0 : i32
    %c0_i32_1 = arith.constant 0 : i32
    return %c0_i32, %c0_i32_0 : i32, i32
  }
  func.func @transform_6(%arg0: i32) -> (i32, i32) {
    %c0_i32 = arith.constant 0 : i32
    %c0_i32_0 = arith.constant 0 : i32
    %c0_i32_1 = arith.constant 0 : i32
    return %c0_i32, %c0_i32_0 : i32, i32
  }
  func.func @transform_7(%arg0: i32) -> (i32, i32) {
    %c0_i32 = arith.constant 0 : i32
    %c0_i32_0 = arith.constant 0 : i32
    %c0_i32_1 = arith.constant 0 : i32
    return %c0_i32, %c0_i32_0 : i32, i32
  }
  func.func @transform_8(%arg0: i32) -> (i32, i32) {
    %c0_i32 = arith.constant 0 : i32
    %c0_i32_0 = arith.constant 0 : i32
    %c0_i32_1 = arith.constant 0 : i32
    return %c0_i32, %c0_i32_0 : i32, i32
  }
  func.func @transform_9(%arg0: i32) -> (i32, i32) {
    %c0_i32 = arith.constant 0 : i32
    %c0_i32_0 = arith.constant 0 : i32
    %c0_i32_1 = arith.constant 0 : i32
    return %c0_i32, %c0_i32_0 : i32, i32
  }
  func.func @transform_10(%arg0: i32) -> (i32, i32) {
    %c0_i32 = arith.constant 0 : i32
    %c0_i32_0 = arith.constant 0 : i32
    %c0_i32_1 = arith.constant 0 : i32
    return %c0_i32, %c0_i32_0 : i32, i32
  }
  func.func @transform_11(%arg0: i32) -> (i32, i32) {
    %c0_i32 = arith.constant 0 : i32
    %c0_i32_0 = arith.constant 0 : i32
    %c0_i32_1 = arith.constant 0 : i32
    return %c0_i32, %c0_i32_0 : i32, i32
  }
  func.func @transform_12(%arg0: i32) -> (i32, i32) {
    %c0_i32 = arith.constant 0 : i32
    %c0_i32_0 = arith.constant 0 : i32
    %c0_i32_1 = arith.constant 0 : i32
    return %c0_i32, %c0_i32_0 : i32, i32
  }
  func.func @transform_13(%arg0: i32) -> (i32, i32) {
    %c0_i32 = arith.constant 0 : i32
    %c0_i32_0 = arith.constant 0 : i32
    %c0_i32_1 = arith.constant 0 : i32
    return %c0_i32, %c0_i32_0 : i32, i32
  }
  func.func @transform_14(%arg0: i32) -> (i32, i32) {
    %c0_i32 = arith.constant 0 : i32
    %c0_i32_0 = arith.constant 0 : i32
    %c0_i32_1 = arith.constant 0 : i32
    return %c0_i32, %c0_i32_0 : i32, i32
  }
}

</mosaic_0001>

<llo_original>
// kernel: vqa_forward.1
$region0: #{vqa_forward.1}
  #allocation0 [shape = 'u32[]', space=smem, size = 0x4, offset = 0x4, fixed_abs, tag = 'smem constant byte address 0x4 - core index']
  #allocation1 [shape = 'u32[144,128]{1,0:T(1,128)}', space=vmem, size = 0x12000, scoped, tag = 'internal scratch']
  #allocation2 [shape = 'f32[64,512]{1,0:T(8,128)}', space=vmem, size = 0x20000, scoped, tag = 'scratch operand']
  %s0 = inlined_call_operand.vmem [shape: bf16[8,512], index: 0, kind: input, shape index: {}]
  %s1 = inlined_call_operand.vmem [shape: s32[64,1], index: 1, kind: input, shape index: {}]
  %s2 = inlined_call_operand.hbm [shape: bf16[256,128], index: 2, kind: input, shape index: {}]
  %s3 = inlined_call_operand.hbm [shape: bf16[512,256], index: 3, kind: input, shape index: {}]
  %s4 = inlined_call_operand.vmem [shape: f32[1,256], index: 4, kind: input, shape index: {}]
  %s5 = inlined_call_operand.hbm [shape: bf16[128,512], index: 5, kind: input, shape index: {}]
  %s6 = inlined_call_operand.vmem [shape: f32[1,512], index: 6, kind: input, shape index: {}]
  %s7 = inlined_call_operand.hbm [shape: bf16[128,512], index: 7, kind: input, shape index: {}]
  %s8 = inlined_call_operand.hbm [shape: bf16[256,256], index: 8, kind: input, shape index: {}]
  %s9 = inlined_call_operand.vmem [shape: f32[1,256], index: 9, kind: input, shape index: {}]
  %s10 = inlined_call_operand.hbm [shape: bf16[256,256], index: 10, kind: input, shape index: {}]
  %s11 = inlined_call_operand.vmem [shape: f32[1,256], index: 11, kind: input, shape index: {}]
  %s12 = inlined_call_operand.hbm [shape: bf16[256,128], index: 12, kind: input, shape index: {}]
  %s13 = inlined_call_operand.vmem [shape: f32[1,128], index: 13, kind: input, shape index: {}]
  %s14 = inlined_call_operand.hbm [shape: f32[8,128], index: 14, kind: output, shape index: {}]
  %s15 = sld [smem:[#allocation0]]
  $region94: #{vqa_forward.1} parent=0
    _
  %s17 = ssub.s32 1, %s15
  %s18 = scalar_select 0, %s17, %s15
  $region1: #{vqa_forward.1} parent=0
    #allocation3 [shape = 'u8[65536]{0}', space=vmem, size = 0x10000, scoped, tag = 'input window, operand 2, single buffered']
    #allocation4 [shape = 's32[1]{0}', space=sflag, size = 0x4, scoped, tag = 'scoped memory for vqa_forward.1']
    #allocation5 [shape = 's32[1]{0}', space=sflag, size = 0x4, scoped, tag = 'scoped memory for vqa_forward.1']
    #allocation6 [shape = 'u8[262144]{0}', space=vmem, size = 0x40000, scoped, tag = 'input window, operand 3, single buffered']
    #allocation7 [shape = 's32[1]{0}', space=sflag, size = 0x4, scoped, tag = 'scoped memory for vqa_forward.1']
    #allocation8 [shape = 'u8[131072]{0}', space=vmem, size = 0x20000, scoped, tag = 'input window, operand 5, single buffered']
    #allocation9 [shape = 'u8[131072]{0}', space=vmem, size = 0x20000, scoped, tag = 'input window, operand 7, single buffered']
    #allocation10 [shape = 's32[1]{0}', space=sflag, size = 0x4, scoped, tag = 'scoped memory for vqa_forward.1']
    #allocation11 [shape = 'u8[131072]{0}', space=vmem, size = 0x20000, scoped, tag = 'input window, operand 8, single buffered']
    #allocation12 [shape = 'u8[131072]{0}', space=vmem, size = 0x20000, scoped, tag = 'input window, operand 10, single buffered']
    #allocation13 [shape = 's32[1]{0}', space=sflag, size = 0x4, scoped, tag = 'scoped memory for vqa_forward.1']
    #allocation14 [shape = 'u8[65536]{0}', space=vmem, size = 0x10000, scoped, tag = 'input window, operand 12, single buffered']
    #allocation15 [shape = 'u8[4096]{0}', space=vmem, size = 0x1000, scoped, tag = 'output window, operand 0, single buffered']
    %19 = vsyncpa [#allocation4], 0
    %20 = vsyncpa [#allocation7], 0
    %21 = vsyncpa [#allocation10], 0
    %22 = vsyncpa [#allocation13], 0
    %23 = vsyncpa [#allocation5], 0
    // Predicated region
    $region2: #{vqa_forward.1} parent=1 // pred_check
      _
    $region3: #{vqa_forward.1} parent=1 // pred_check_branch
      %25 = sbr.rel (0) target = $region5
    $region4: #{vqa_forward.1} parent=1 // pred_region
      _
    $region5: #{vqa_forward.1} parent=1 // pred_fallthru
      _
    // Predicated region
    $region6: #{vqa_forward.1} parent=1 // pred_check
      _
    $region7: #{vqa_forward.1} parent=1 // pred_check_branch
      %27 = sbr.rel (0) target = $region9
    $region8: #{vqa_forward.1} parent=1 // pred_region
      _
    $region9: #{vqa_forward.1} parent=1 // pred_fallthru
      _
    // Predicated region
    $region10: #{vqa_forward.1} parent=1 // pred_check
      _
    $region11: #{vqa_forward.1} parent=1 // pred_check_branch
      %29 = sbr.rel (0) target = $region13
    $region12: #{vqa_forward.1} parent=1 // pred_region
      %s31 = ssub.s32 2048, 2048
      %32 = vsyncadd [#allocation4], %s31
      %s33 = sshll.u32 [#allocation3], 4
      %s34 = int_to_ptr.vmem [resolvable:$true] %s33
      %39 = dma.hbm_to_vmem [thread:$0]  %s2, 2048, %s34, [#allocation4], 64, 64, 4
    $region13: #{vqa_forward.1} parent=1 // pred_fallthru
      _
    // Predicated region
    $region14: #{vqa_forward.1} parent=1 // pred_check
      _
    $region15: #{vqa_forward.1} parent=1 // pred_check_branch
      %41 = sbr.rel (0) target = $region17
    $region16: #{vqa_forward.1} parent=1 // pred_region
      %s43 = ssub.s32 8192, 8192
      %44 = vsyncadd [#allocation7], %s43
      %s45 = sshll.u32 [#allocation6], 4
      %s46 = int_to_ptr.vmem [resolvable:$true] %s45
      %51 = dma.hbm_to_vmem [thread:$0]  %s3, 8192, %s46, [#allocation7], 128, 128, 8
    $region17: #{vqa_forward.1} parent=1 // pred_fallthru
      _
    // Predicated region
    $region18: #{vqa_forward.1} parent=1 // pred_check
      _
    $region19: #{vqa_forward.1} parent=1 // pred_check_branch
      %53 = sbr.rel (0) target = $region21
    $region20: #{vqa_forward.1} parent=1 // pred_region
      _
    $region21: #{vqa_forward.1} parent=1 // pred_fallthru
      _
    // Predicated region
    $region22: #{vqa_forward.1} parent=1 // pred_check
      _
    $region23: #{vqa_forward.1} parent=1 // pred_check_branch
      %55 = sbr.rel (0) target = $region25
    $region24: #{vqa_forward.1} parent=1 // pred_region
      %s57 = ssub.s32 4096, 4096
      %58 = vsyncadd [#allocation7], %s57
      %s59 = sshll.u32 [#allocation8], 4
      %s60 = int_to_ptr.vmem [resolvable:$true] %s59
      %65 = dma.hbm_to_vmem [thread:$0]  %s5, 4096, %s60, [#allocation7], 256, 256, 16
    $region25: #{vqa_forward.1} parent=1 // pred_fallthru
      _
    // Predicated region
    $region26: #{vqa_forward.1} parent=1 // pred_check
      _
    $region27: #{vqa_forward.1} parent=1 // pred_check_branch
      %67 = sbr.rel (0) target = $region29
    $region28: #{vqa_forward.1} parent=1 // pred_region
      _
    $region29: #{vqa_forward.1} parent=1 // pred_fallthru
      _
    // Predicated region
    $region30: #{vqa_forward.1} parent=1 // pred_check
      _
    $region31: #{vqa_forward.1} parent=1 // pred_check_branch
      %69 = sbr.rel (0) target = $region33
    $region32: #{vqa_forward.1} parent=1 // pred_region
      %s71 = ssub.s32 4096, 4096
      %72 = vsyncadd [#allocation10], %s71
      %s73 = sshll.u32 [#allocation9], 4
      %s74 = int_to_ptr.vmem [resolvable:$true] %s73
      %79 = dma.hbm_to_vmem [thread:$0]  %s7, 4096, %s74, [#allocation10], 256, 256, 16
    $region33: #{vqa_forward.1} parent=1 // pred_fallthru
      _
    // Predicated region
    $region34: #{vqa_forward.1} parent=1 // pred_check
      _
    $region35: #{vqa_forward.1} parent=1 // pred_check_branch
      %81 = sbr.rel (0) target = $region37
    $region36: #{vqa_forward.1} parent=1 // pred_region
      %s83 = ssub.s32 4096, 4096
      %84 = vsyncadd [#allocation10], %s83
      %s85 = sshll.u32 [#allocation11], 4
      %s86 = int_to_ptr.vmem [resolvable:$true] %s85
      %91 = dma.hbm_to_vmem [thread:$0]  %s8, 4096, %s86, [#allocation10], 128, 128, 8
    $region37: #{vqa_forward.1} parent=1 // pred_fallthru
      _
    // Predicated region
    $region38: #{vqa_forward.1} parent=1 // pred_check
      _
    $region39: #{vqa_forward.1} parent=1 // pred_check_branch
      %93 = sbr.rel (0) target = $region41
    $region40: #{vqa_forward.1} parent=1 // pred_region
      _
    $region41: #{vqa_forward.1} parent=1 // pred_fallthru
      _
    // Predicated region
    $region42: #{vqa_forward.1} parent=1 // pred_check
      _
    $region43: #{vqa_forward.1} parent=1 // pred_check_branch
      %95 = sbr.rel (0) target = $region45
    $region44: #{vqa_forward.1} parent=1 // pred_region
      %s97 = ssub.s32 4096, 4096
      %98 = vsyncadd [#allocation13], %s97
      %s99 = sshll.u32 [#allocation12], 4
      %s100 = int_to_ptr.vmem [resolvable:$true] %s99
      %105 = dma.hbm_to_vmem [thread:$0]  %s10, 4096, %s100, [#allocation13], 128, 128, 8
    $region45: #{vqa_forward.1} parent=1 // pred_fallthru
      _
    // Predicated region
    $region46: #{vqa_forward.1} parent=1 // pred_check
      _
    $region47: #{vqa_forward.1} parent=1 // pred_check_branch
      %107 = sbr.rel (0) target = $region49
    $region48: #{vqa_forward.1} parent=1 // pred_region
      _
    $region49: #{vqa_forward.1} parent=1 // pred_fallthru
      _
    // Predicated region
    $region50: #{vqa_forward.1} parent=1 // pred_check
      _
    $region51: #{vqa_forward.1} parent=1 // pred_check_branch
      %109 = sbr.rel (0) target = $region53
    $region52: #{vqa_forward.1} parent=1 // pred_region
      %s111 = ssub.s32 2048, 2048
      %112 = vsyncadd [#allocation13], %s111
      %s113 = sshll.u32 [#allocation14], 4
      %s114 = int_to_ptr.vmem [resolvable:$true] %s113
      %119 = dma.hbm_to_vmem [thread:$0]  %s12, 2048, %s114, [#allocation13], 64, 64, 4
    $region53: #{vqa_forward.1} parent=1 // pred_fallthru
      _
    // Predicated region
    $region54: #{vqa_forward.1} parent=1 // pred_check
      _
    $region55: #{vqa_forward.1} parent=1 // pred_check_branch
      %121 = sbr.rel (0) target = $region57
    $region56: #{vqa_forward.1} parent=1 // pred_region
      _
    $region57: #{vqa_forward.1} parent=1 // pred_fallthru
      _
    // Predicated region
    $region58: #{vqa_forward.1} parent=1 // pred_check
      _
    $region59: #{vqa_forward.1} parent=1 // pred_check_branch
      %123 = sbr.rel (0) target = $region61
    $region60: #{vqa_forward.1} parent=1 // pred_region
      %124 = dma.done [#allocation4], 2048
    $region61: #{vqa_forward.1} parent=1 // pred_fallthru
      _
    // Predicated region
    $region62: #{vqa_forward.1} parent=1 // pred_check
      _
    $region63: #{vqa_forward.1} parent=1 // pred_check_branch
      %126 = sbr.rel (0) target = $region65
    $region64: #{vqa_forward.1} parent=1 // pred_region
      %127 = dma.done [#allocation7], 8192
    $region65: #{vqa_forward.1} parent=1 // pred_fallthru
      _
    // Predicated region
    $region66: #{vqa_forward.1} parent=1 // pred_check
      _
    $region67: #{vqa_forward.1} parent=1 // pred_check_branch
      %129 = sbr.rel (0) target = $region69
    $region68: #{vqa_forward.1} parent=1 // pred_region
      %130 = dma.done [#allocation7], 4096
    $region69: #{vqa_forward.1} parent=1 // pred_fallthru
      _
    // Predicated region
    $region70: #{vqa_forward.1} parent=1 // pred_check
      _
    $region71: #{vqa_forward.1} parent=1 // pred_check_branch
      %132 = sbr.rel (0) target = $region73
    $region72: #{vqa_forward.1} parent=1 // pred_region
      %133 = dma.done [#allocation10], 4096
    $region73: #{vqa_forward.1} parent=1 // pred_fallthru
      _
    // Predicated region
    $region74: #{vqa_forward.1} parent=1 // pred_check
      _
    $region75: #{vqa_forward.1} parent=1 // pred_check_branch
      %135 = sbr.rel (0) target = $region77
    $region76: #{vqa_forward.1} parent=1 // pred_region
      %136 = dma.done [#allocation10], 4096
    $region77: #{vqa_forward.1} parent=1 // pred_fallthru
      _
    // Predicated region
    $region78: #{vqa_forward.1} parent=1 // pred_check
      _
    $region79: #{vqa_forward.1} parent=1 // pred_check_branch
      %138 = sbr.rel (0) target = $region81
    $region80: #{vqa_forward.1} parent=1 // pred_region
      %139 = dma.done [#allocation13], 4096
    $region81: #{vqa_forward.1} parent=1 // pred_fallthru
      _
    // Predicated region
    $region82: #{vqa_forward.1} parent=1 // pred_check
      _
    $region83: #{vqa_forward.1} parent=1 // pred_check_branch
      %141 = sbr.rel (0) target = $region85
    $region84: #{vqa_forward.1} parent=1 // pred_region
      %142 = dma.done [#allocation13], 2048
    $region85: #{vqa_forward.1} parent=1 // pred_fallthru
      _
    %v144 = vld [vmem:[%s0] sm:$0xff]
    %v145 = vld [vmem:[%s0 + $0x8] sm:$0xff]
    %v146 = vld [vmem:[#allocation6] sm:$0xff]
    %v147 = vld [vmem:[#allocation6 + $0x8] sm:$0xff]
    %v148 = vld [vmem:[#allocation6 + $0x10] sm:$0xff]
    %v149 = vld [vmem:[#allocation6 + $0x18] sm:$0xff]
    %v150 = vld [vmem:[#allocation6 + $0x20] sm:$0xff]
    %v151 = vld [vmem:[#allocation6 + $0x28] sm:$0xff]
    %v152 = vld [vmem:[#allocation6 + $0x30] sm:$0xff]
    %v153 = vld [vmem:[#allocation6 + $0x38] sm:$0xff]
    %v154 = vld [vmem:[#allocation6 + $0x40] sm:$0xff]
    %v155 = vld [vmem:[#allocation6 + $0x48] sm:$0xff]
    %v156 = vld [vmem:[#allocation6 + $0x50] sm:$0xff]
    %v157 = vld [vmem:[#allocation6 + $0x58] sm:$0xff]
    %v158 = vld [vmem:[#allocation6 + $0x60] sm:$0xff]
    %v159 = vld [vmem:[#allocation6 + $0x68] sm:$0xff]
    %v160 = vld [vmem:[#allocation6 + $0x70] sm:$0xff]
    %v161 = vld [vmem:[#allocation6 + $0x78] sm:$0xff]
    %v162 = vld [vmem:[#allocation6 + $0x80] sm:$0xff]
    %v163 = vld [vmem:[#allocation6 + $0x88] sm:$0xff]
    %v164 = vld [vmem:[#allocation6 + $0x90] sm:$0xff]
    %v165 = vld [vmem:[#allocation6 + $0x98] sm:$0xff]
    %v166 = vld [vmem:[#allocation6 + $0xa0] sm:$0xff]
    %v167 = vld [vmem:[#allocation6 + $0xa8] sm:$0xff]
    %v168 = vld [vmem:[#allocation6 + $0xb0] sm:$0xff]
    %v169 = vld [vmem:[#allocation6 + $0xb8] sm:$0xff]
    %v170 = vld [vmem:[#allocation6 + $0xc0] sm:$0xff]
    %v171 = vld [vmem:[#allocation6 + $0xc8] sm:$0xff]
    %v172 = vld [vmem:[#allocation6 + $0xd0] sm:$0xff]
    %v173 = vld [vmem:[#allocation6 + $0xd8] sm:$0xff]
    %v174 = vld [vmem:[#allocation6 + $0xe0] sm:$0xff]
    %v175 = vld [vmem:[#allocation6 + $0xe8] sm:$0xff]
    %v176 = vld [vmem:[#allocation6 + $0xf0] sm:$0xff]
    %v177 = vld [vmem:[#allocation6 + $0xf8] sm:$0xff]
    %v178 = vld [vmem:[#allocation6 + $0x100] sm:$0xff]
    %v179 = vld [vmem:[#allocation6 + $0x108] sm:$0xff]
    %v180 = vld [vmem:[#allocation6 + $0x110] sm:$0xff]
    %v181 = vld [vmem:[#allocation6 + $0x118] sm:$0xff]
    %v182 = vld [vmem:[#allocation6 + $0x120] sm:$0xff]
    %v183 = vld [vmem:[#allocation6 + $0x128] sm:$0xff]
    %v184 = vld [vmem:[#allocation6 + $0x130] sm:$0xff]
    %v185 = vld [vmem:[#allocation6 + $0x138] sm:$0xff]
    %v186 = vld [vmem:[#allocation6 + $0x140] sm:$0xff]
    %v187 = vld [vmem:[#allocation6 + $0x148] sm:$0xff]
    %v188 = vld [vmem:[#allocation6 + $0x150] sm:$0xff]
    %v189 = vld [vmem:[#allocation6 + $0x158] sm:$0xff]
    %v190 = vld [vmem:[#allocation6 + $0x160] sm:$0xff]
    %v191 = vld [vmem:[#allocation6 + $0x168] sm:$0xff]
    %v192 = vld [vmem:[#allocation6 + $0x170] sm:$0xff]
    %v193 = vld [vmem:[#allocation6 + $0x178] sm:$0xff]
    %v194 = vld [vmem:[#allocation6 + $0x180] sm:$0xff]
    %v195 = vld [vmem:[#allocation6 + $0x188] sm:$0xff]
    %v196 = vld [vmem:[#allocation6 + $0x190] sm:$0xff]
    %v197 = vld [vmem:[#allocation6 + $0x198] sm:$0xff]
    %v198 = vld [vmem:[#allocation6 + $0x1a0] sm:$0xff]
    %v199 = vld [vmem:[#allocation6 + $0x1a8] sm:$0xff]
    %v200 = vld [vmem:[#allocation6 + $0x1b0] sm:$0xff]
    %v201 = vld [vmem:[#allocation6 + $0x1b8] sm:$0xff]
    %v202 = vld [vmem:[#allocation6 + $0x1c0] sm:$0xff]
    %v203 = vld [vmem:[#allocation6 + $0x1c8] sm:$0xff]
    %v204 = vld [vmem:[#allocation6 + $0x1d0] sm:$0xff]
    %v205 = vld [vmem:[#allocation6 + $0x1d8] sm:$0xff]
    %v206 = vld [vmem:[#allocation6 + $0x1e0] sm:$0xff]
    %v207 = vld [vmem:[#allocation6 + $0x1e8] sm:$0xff]
    %v208 = vld [vmem:[#allocation6 + $0x1f0] sm:$0xff]
    %v209 = vld [vmem:[#allocation6 + $0x1f8] sm:$0xff]
    %v210 = vld [vmem:[%s4] sm:$0x3]
    %v212 = vlaneseq
    %v213 = vshrl.u32 %v212, 7
    %v214 = vsub.s32 0, %v213
    %v215 = vrot.slane %v210, %v214
    %v216 = vlaneseq
    %v217 = vshrl.u32 %v216, 7
    %v218 = vsub.s32 1, %v217
    %v219 = vrot.slane %v210, %v218
    %v224 = vunpack.c.l.b16 %v144
    %v225 = vunpack.c.h.b16 %v144
    %v226 = vunpack.c.l.b16 %v145
    %v227 = vunpack.c.h.b16 %v145
    %v228 = vpack.c.b16 %v224, %v224
    %v229 = vpack.c.b16 %v225, %v225
    %v230 = vpack.c.b16 %v226, %v226
    %v231 = vpack.c.b16 %v227, %v227
    %v300 = vunpack.c.l.b16 %v146
    %v301 = vunpack.c.h.b16 %v146
    %v302 = vunpack.c.l.b16 %v147
    %v303 = vunpack.c.h.b16 %v147
    %v304 = vunpack.c.l.b16 %v148
    %v305 = vunpack.c.h.b16 %v148
    %v306 = vunpack.c.l.b16 %v149
    %v307 = vunpack.c.h.b16 %v149
    %v308 = vunpack.c.l.b16 %v150
    %v309 = vunpack.c.h.b16 %v150
    %v310 = vunpack.c.l.b16 %v151
    %v311 = vunpack.c.h.b16 %v151
    %v312 = vunpack.c.l.b16 %v152
    %v313 = vunpack.c.h.b16 %v152
    %v314 = vunpack.c.l.b16 %v153
    %v315 = vunpack.c.h.b16 %v153
    %v316 = vunpack.c.l.b16 %v154
    %v317 = vunpack.c.h.b16 %v154
    %v318 = vunpack.c.l.b16 %v155
    %v319 = vunpack.c.h.b16 %v155
    %v320 = vunpack.c.l.b16 %v156
    %v321 = vunpack.c.h.b16 %v156
    %v322 = vunpack.c.l.b16 %v157
    %v323 = vunpack.c.h.b16 %v157
    %v324 = vunpack.c.l.b16 %v158
    %v325 = vunpack.c.h.b16 %v158
    %v326 = vunpack.c.l.b16 %v159
    %v327 = vunpack.c.h.b16 %v159
    %v328 = vunpack.c.l.b16 %v160
    %v329 = vunpack.c.h.b16 %v160
    %v330 = vunpack.c.l.b16 %v161
    %v331 = vunpack.c.h.b16 %v161
    %v332 = vunpack.c.l.b16 %v162
    %v333 = vunpack.c.h.b16 %v162
    %v334 = vunpack.c.l.b16 %v163
    %v335 = vunpack.c.h.b16 %v163
    %v336 = vunpack.c.l.b16 %v164
    %v337 = vunpack.c.h.b16 %v164
    %v338 = vunpack.c.l.b16 %v165
    %v339 = vunpack.c.h.b16 %v165
    %v340 = vunpack.c.l.b16 %v166
    %v341 = vunpack.c.h.b16 %v166
    %v342 = vunpack.c.l.b16 %v167
    %v343 = vunpack.c.h.b16 %v167
    %v344 = vunpack.c.l.b16 %v168
    %v345 = vunpack.c.h.b16 %v168
    %v346 = vunpack.c.l.b16 %v169
    %v347 = vunpack.c.h.b16 %v169
    %v348 = vunpack.c.l.b16 %v170
    %v349 = vunpack.c.h.b16 %v170
    %v350 = vunpack.c.l.b16 %v171
    %v351 = vunpack.c.h.b16 %v171
    %v352 = vunpack.c.l.b16 %v172
    %v353 = vunpack.c.h.b16 %v172
    %v354 = vunpack.c.l.b16 %v173
    %v355 = vunpack.c.h.b16 %v173
    %v356 = vunpack.c.l.b16 %v174
    %v357 = vunpack.c.h.b16 %v174
    %v358 = vunpack.c.l.b16 %v175
    %v359 = vunpack.c.h.b16 %v175
    %v360 = vunpack.c.l.b16 %v176
    %v361 = vunpack.c.h.b16 %v176
    %v362 = vunpack.c.l.b16 %v177
    %v363 = vunpack.c.h.b16 %v177
    %v364 = vunpack.c.l.b16 %v178
    %v365 = vunpack.c.h.b16 %v178
    %v366 = vunpack.c.l.b16 %v179
    %v367 = vunpack.c.h.b16 %v179
    %v368 = vunpack.c.l.b16 %v180
    %v369 = vunpack.c.h.b16 %v180
    %v370 = vunpack.c.l.b16 %v181
    %v371 = vunpack.c.h.b16 %v181
    %v372 = vunpack.c.l.b16 %v182
    %v373 = vunpack.c.h.b16 %v182
    %v374 = vunpack.c.l.b16 %v183
    %v375 = vunpack.c.h.b16 %v183
    %v376 = vunpack.c.l.b16 %v184
    %v377 = vunpack.c.h.b16 %v184
    %v378 = vunpack.c.l.b16 %v185
    %v379 = vunpack.c.h.b16 %v185
    %v380 = vunpack.c.l.b16 %v186
    %v381 = vunpack.c.h.b16 %v186
    %v382 = vunpack.c.l.b16 %v187
    %v383 = vunpack.c.h.b16 %v187
    %v384 = vunpack.c.l.b16 %v188
    %v385 = vunpack.c.h.b16 %v188
    %v386 = vunpack.c.l.b16 %v189
    %v387 = vunpack.c.h.b16 %v189
    %v388 = vunpack.c.l.b16 %v190
    %v389 = vunpack.c.h.b16 %v190
    %v390 = vunpack.c.l.b16 %v191
    %v391 = vunpack.c.h.b16 %v191
    %v392 = vunpack.c.l.b16 %v192
    %v393 = vunpack.c.h.b16 %v192
    %v394 = vunpack.c.l.b16 %v193
    %v395 = vunpack.c.h.b16 %v193
    %v396 = vunpack.c.l.b16 %v194
    %v397 = vunpack.c.h.b16 %v194
    %v398 = vunpack.c.l.b16 %v195
    %v399 = vunpack.c.h.b16 %v195
    %v400 = vunpack.c.l.b16 %v196
    %v401 = vunpack.c.h.b16 %v196
    %v402 = vunpack.c.l.b16 %v197
    %v403 = vunpack.c.h.b16 %v197
    %v404 = vunpack.c.l.b16 %v198
    %v405 = vunpack.c.h.b16 %v198
    %v406 = vunpack.c.l.b16 %v199
    %v407 = vunpack.c.h.b16 %v199
    %v408 = vunpack.c.l.b16 %v200
    %v409 = vunpack.c.h.b16 %v200
    %v410 = vunpack.c.l.b16 %v201
    %v411 = vunpack.c.h.b16 %v201
    %v412 = vunpack.c.l.b16 %v202
    %v413 = vunpack.c.h.b16 %v202
    %v414 = vunpack.c.l.b16 %v203
    %v415 = vunpack.c.h.b16 %v203
    %v416 = vunpack.c.l.b16 %v204
    %v417 = vunpack.c.h.b16 %v204
    %v418 = vunpack.c.l.b16 %v205
    %v419 = vunpack.c.h.b16 %v205
    %v420 = vunpack.c.l.b16 %v206
    %v421 = vunpack.c.h.b16 %v206
    %v422 = vunpack.c.l.b16 %v207
    %v423 = vunpack.c.h.b16 %v207
    %v424 = vunpack.c.l.b16 %v208
    %v425 = vunpack.c.h.b16 %v208
    %v426 = vunpack.c.l.b16 %v209
    %v427 = vunpack.c.h.b16 %v209
    %v428 = vpack.c.b16 %v302, %v300
    %v429 = vpack.c.b16 %v303, %v301
    %v430 = vpack.c.b16 %v306, %v304
    %v431 = vpack.c.b16 %v307, %v305
    %v432 = vpack.c.b16 %v310, %v308
    %v433 = vpack.c.b16 %v311, %v309
    %v434 = vpack.c.b16 %v314, %v312
    %v435 = vpack.c.b16 %v315, %v313
    %v436 = vpack.c.b16 %v318, %v316
    %v437 = vpack.c.b16 %v319, %v317
    %v438 = vpack.c.b16 %v322, %v320
    %v439 = vpack.c.b16 %v323, %v321
    %v440 = vpack.c.b16 %v326, %v324
    %v441 = vpack.c.b16 %v327, %v325
    %v442 = vpack.c.b16 %v330, %v328
    %v443 = vpack.c.b16 %v331, %v329
    %v444 = vpack.c.b16 %v334, %v332
    %v445 = vpack.c.b16 %v335, %v333
    %v446 = vpack.c.b16 %v338, %v336
    %v447 = vpack.c.b16 %v339, %v337
    %v448 = vpack.c.b16 %v342, %v340
    %v449 = vpack.c.b16 %v343, %v341
    %v450 = vpack.c.b16 %v346, %v344
    %v451 = vpack.c.b16 %v347, %v345
    %v452 = vpack.c.b16 %v350, %v348
    %v453 = vpack.c.b16 %v351, %v349
    %v454 = vpack.c.b16 %v354, %v352
    %v455 = vpack.c.b16 %v355, %v353
    %v456 = vpack.c.b16 %v358, %v356
    %v457 = vpack.c.b16 %v359, %v357
    %v458 = vpack.c.b16 %v362, %v360
    %v459 = vpack.c.b16 %v363, %v361
    %v460 = vpack.c.b16 %v366, %v364
    %v461 = vpack.c.b16 %v367, %v365
    %v462 = vpack.c.b16 %v370, %v368
    %v463 = vpack.c.b16 %v371, %v369
    %v464 = vpack.c.b16 %v374, %v372
    %v465 = vpack.c.b16 %v375, %v373
    %v466 = vpack.c.b16 %v378, %v376
    %v467 = vpack.c.b16 %v379, %v377
    %v468 = vpack.c.b16 %v382, %v380
    %v469 = vpack.c.b16 %v383, %v381
    %v470 = vpack.c.b16 %v386, %v384
    %v471 = vpack.c.b16 %v387, %v385
    %v472 = vpack.c.b16 %v390, %v388
    %v473 = vpack.c.b16 %v391, %v389
    %v474 = vpack.c.b16 %v394, %v392
    %v475 = vpack.c.b16 %v395, %v393
    %v476 = vpack.c.b16 %v398, %v396
    %v477 = vpack.c.b16 %v399, %v397
    %v478 = vpack.c.b16 %v402, %v400
    %v479 = vpack.c.b16 %v403, %v401
    %v480 = vpack.c.b16 %v406, %v404
    %v481 = vpack.c.b16 %v407, %v405
    %v482 = vpack.c.b16 %v410, %v408
    %v483 = vpack.c.b16 %v411, %v409
    %v484 = vpack.c.b16 %v414, %v412
    %v485 = vpack.c.b16 %v415, %v413
    %v486 = vpack.c.b16 %v418, %v416
    %v487 = vpack.c.b16 %v419, %v417
    %v488 = vpack.c.b16 %v422, %v420
    %v489 = vpack.c.b16 %v423, %v421
    %v490 = vpack.c.b16 %v426, %v424
    %v491 = vpack.c.b16 %v427, %v425
    %556 = vmatprep.subr.bf16.mxu0 %v429
    %557 = vmatpush1.bf16.msra.mxu0 %v428
    %558 = vmatprep.subr.bf16.mxu0 %v431
    %559 = vmatpush1.bf16.msra.mxu0 %v430
    %560 = vmatprep.subr.bf16.mxu0 %v433
    %561 = vmatpush1.bf16.msra.mxu0 %v432
    %562 = vmatprep.subr.bf16.mxu0 %v435
    %563 = vmatpush1.bf16.msra.mxu0 %v434
    %564 = vmatprep.subr.bf16.mxu0 %v437
    %565 = vmatpush1.bf16.msra.mxu0 %v436
    %566 = vmatprep.subr.bf16.mxu0 %v439
    %567 = vmatpush1.bf16.msra.mxu0 %v438
    %568 = vmatprep.subr.bf16.mxu0 %v441
    %569 = vmatpush1.bf16.msra.mxu0 %v440
    %570 = vmatprep.subr.bf16.mxu0 %v443
    %571 = vmatpush1.bf16.msra.mxu0 %v442
    %572 = vmatprep.subr.bf16.mxu0 %v445
    %573 = vmatpush1.bf16.msra.mxu0 %v444
    %574 = vmatprep.subr.bf16.mxu0 %v447
    %575 = vmatpush1.bf16.msra.mxu0 %v446
    %576 = vmatprep.subr.bf16.mxu0 %v449
    %577 = vmatpush1.bf16.msra.mxu0 %v448
    %578 = vmatprep.subr.bf16.mxu0 %v451
    %579 = vmatpush1.bf16.msra.mxu0 %v450
    %580 = vmatprep.subr.bf16.mxu0 %v453
    %581 = vmatpush1.bf16.msra.mxu0 %v452
    %582 = vmatprep.subr.bf16.mxu0 %v455
    %583 = vmatpush1.bf16.msra.mxu0 %v454
    %584 = vmatprep.subr.bf16.mxu0 %v457
    %585 = vmatpush1.bf16.msra.mxu0 %v456
    %586 = vmatprep.subr.bf16.mxu0 %v459
    %587 = vmatpush1.bf16.msra.mxu0 %v458
    %588 = vmatprep.mubr.bf16.mxu0 %v229
    %589 = vmatmul.mubr.bf16.gmra.mrb[0].mxu0 %v228
    %v590 = vpop.f32.mrb[0].mxu0
    %v591 = vadd.f32 %v215, %v590
    %v592 = vpop.f32.mrb[0].mxu0
    %v593 = vadd.f32 %v219, %v592
    %v594 = vpop.f32.mrb[0].mxu0
    %v595 = vpop.f32.mrb[0].mxu0
    %596 = vdwg.mxu0
    %597 = vmatprep.subr.bf16.mxu0 %v461
    %598 = vmatpush1.bf16.msra.mxu0 %v460
    %599 = vmatprep.subr.bf16.mxu0 %v463
    %600 = vmatpush1.bf16.msra.mxu0 %v462
    %601 = vmatprep.subr.bf16.mxu0 %v465
    %602 = vmatpush1.bf16.msra.mxu0 %v464
    %603 = vmatprep.subr.bf16.mxu0 %v467
    %604 = vmatpush1.bf16.msra.mxu0 %v466
    %605 = vmatprep.subr.bf16.mxu0 %v469
    %606 = vmatpush1.bf16.msra.mxu0 %v468
    %607 = vmatprep.subr.bf16.mxu0 %v471
    %608 = vmatpush1.bf16.msra.mxu0 %v470
    %609 = vmatprep.subr.bf16.mxu0 %v473
    %610 = vmatpush1.bf16.msra.mxu0 %v472
    %611 = vmatprep.subr.bf16.mxu0 %v475
    %612 = vmatpush1.bf16.msra.mxu0 %v474
    %613 = vmatprep.subr.bf16.mxu0 %v477
    %614 = vmatpush1.bf16.msra.mxu0 %v476
    %615 = vmatprep.subr.bf16.mxu0 %v479
    %616 = vmatpush1.bf16.msra.mxu0 %v478
    %617 = vmatprep.subr.bf16.mxu0 %v481
    %618 = vmatpush1.bf16.msra.mxu0 %v480
    %619 = vmatprep.subr.bf16.mxu0 %v483
    %620 = vmatpush1.bf16.msra.mxu0 %v482
    %621 = vmatprep.subr.bf16.mxu0 %v485
    %622 = vmatpush1.bf16.msra.mxu0 %v484
    %623 = vmatprep.subr.bf16.mxu0 %v487
    %624 = vmatpush1.bf16.msra.mxu0 %v486
    %625 = vmatprep.subr.bf16.mxu0 %v489
    %626 = vmatpush1.bf16.msra.mxu0 %v488
    %627 = vmatprep.subr.bf16.mxu0 %v491
    %628 = vmatpush1.bf16.msra.mxu0 %v490
    %629 = vmatprep.mubr.bf16.mxu0 %v231
    %630 = vmatmul.mubr.bf16.gmra.mrb[0].mxu0 %v230
    %v631 = vpop.f32.mrb[0].mxu0
    %v632 = vadd.f32 %v591, %v631
    %v633 = vpop.f32.mrb[0].mxu0
    %v634 = vadd.f32 %v593, %v633
    %v635 = vpop.f32.mrb[0].mxu0
    %v636 = vpop.f32.mrb[0].mxu0
    %637 = vdwg.mxu0
    %v638 = vtanh.pop %v632
    %v639 = vtanh.pop %v634
    %v640 = vlaneseq
    %v641 = vand.u32 %v640, 127
    %v642 = vadd.s32 %v641, 128
    %v643 = vld [vmem:[%s1] sm:$0xff]
    %v644 = vld [vmem:[%s1 + $0x8] sm:$0xff]
    %v645 = vld [vmem:[%s1 + $0x10] sm:$0xff]
    %v646 = vld [vmem:[%s1 + $0x18] sm:$0xff]
    %v647 = vld [vmem:[%s1 + $0x20] sm:$0xff]
    %v648 = vld [vmem:[%s1 + $0x28] sm:$0xff]
    %v649 = vld [vmem:[%s1 + $0x30] sm:$0xff]
    %v650 = vld [vmem:[%s1 + $0x38] sm:$0xff]
    %651 = vset.pattern.permute.xlu0 0
    %652 = vperm.xlu0 %651, %v643
    %v653 = vpop.permute.xlu0 %652
    %654 = vset.pattern.permute.xlu0 0
    %655 = vperm.xlu0 %654, %v644
    %v656 = vpop.permute.xlu0 %655
    %657 = vset.pattern.permute.xlu0 0
    %658 = vperm.xlu0 %657, %v645
    %v659 = vpop.permute.xlu0 %658
    %660 = vset.pattern.permute.xlu0 0
    %661 = vperm.xlu0 %660, %v646
    %v662 = vpop.permute.xlu0 %661
    %663 = vset.pattern.permute.xlu0 0
    %664 = vperm.xlu0 %663, %v647
    %v665 = vpop.permute.xlu0 %664
    %666 = vset.pattern.permute.xlu0 0
    %667 = vperm.xlu0 %666, %v648
    %v668 = vpop.permute.xlu0 %667
    %669 = vset.pattern.permute.xlu0 0
    %670 = vperm.xlu0 %669, %v649
    %v671 = vpop.permute.xlu0 %670
    %672 = vset.pattern.permute.xlu0 0
    %673 = vperm.xlu0 %672, %v650
    %v674 = vpop.permute.xlu0 %673
    %vm675 = vcmp.eq.s32.totalorder %v641, %v653
    %vm676 = vcmp.eq.s32.totalorder %v642, %v653
    %vm677 = vcmp.eq.s32.totalorder %v641, %v656
    %vm678 = vcmp.eq.s32.totalorder %v642, %v656
    %vm679 = vcmp.eq.s32.totalorder %v641, %v659
    %vm680 = vcmp.eq.s32.totalorder %v642, %v659
    %vm681 = vcmp.eq.s32.totalorder %v641, %v662
    %vm682 = vcmp.eq.s32.totalorder %v642, %v662
    %vm683 = vcmp.eq.s32.totalorder %v641, %v665
    %vm684 = vcmp.eq.s32.totalorder %v642, %v665
    %vm685 = vcmp.eq.s32.totalorder %v641, %v668
    %vm686 = vcmp.eq.s32.totalorder %v642, %v668
    %vm687 = vcmp.eq.s32.totalorder %v641, %v671
    %vm688 = vcmp.eq.s32.totalorder %v642, %v671
    %vm689 = vcmp.eq.s32.totalorder %v641, %v674
    %vm690 = vcmp.eq.s32.totalorder %v642, %v674
    %v691 = vsel %vm675, 1.0, 0.0
    %v692 = vsel %vm676, 1.0, 0.0
    %v693 = vsel %vm677, 1.0, 0.0
    %v694 = vsel %vm678, 1.0, 0.0
    %v695 = vsel %vm679, 1.0, 0.0
    %v696 = vsel %vm680, 1.0, 0.0
    %v697 = vsel %vm681, 1.0, 0.0
    %v698 = vsel %vm682, 1.0, 0.0
    %v699 = vsel %vm683, 1.0, 0.0
    %v700 = vsel %vm684, 1.0, 0.0
    %v701 = vsel %vm685, 1.0, 0.0
    %v702 = vsel %vm686, 1.0, 0.0
    %v703 = vsel %vm687, 1.0, 0.0
    %v704 = vsel %vm688, 1.0, 0.0
    %v705 = vsel %vm689, 1.0, 0.0
    %v706 = vsel %vm690, 1.0, 0.0
    %v707 = vpack.c.bf16 %v693, %v691
    %v708 = vpack.c.bf16 %v694, %v692
    %v709 = vpack.c.bf16 %v697, %v695
    %v710 = vpack.c.bf16 %v698, %v696
    %v711 = vpack.c.bf16 %v701, %v699
    %v712 = vpack.c.bf16 %v702, %v700
    %v713 = vpack.c.bf16 %v705, %v703
    %v714 = vpack.c.bf16 %v706, %v704
    %v715 = vld [vmem:[#allocation3] sm:$0xf]
    %v716 = vld [vmem:[#allocation3 + $0x4] sm:$0xf]
    %v717 = vld [vmem:[#allocation3 + $0x8] sm:$0xf]
    %v718 = vld [vmem:[#allocation3 + $0xc] sm:$0xf]
    %v719 = vld [vmem:[#allocation3 + $0x10] sm:$0xf]
    %v720 = vld [vmem:[#allocation3 + $0x14] sm:$0xf]
    %v721 = vld [vmem:[#allocation3 + $0x18] sm:$0xf]
    %v722 = vld [vmem:[#allocation3 + $0x1c] sm:$0xf]
    %v723 = vld [vmem:[#allocation3 + $0x20] sm:$0xf]
    %v724 = vld [vmem:[#allocation3 + $0x24] sm:$0xf]
    %v725 = vld [vmem:[#allocation3 + $0x28] sm:$0xf]
    %v726 = vld [vmem:[#allocation3 + $0x2c] sm:$0xf]
    %v727 = vld [vmem:[#allocation3 + $0x30] sm:$0xf]
    %v728 = vld [vmem:[#allocation3 + $0x34] sm:$0xf]
    %v729 = vld [vmem:[#allocation3 + $0x38] sm:$0xf]
    %v730 = vld [vmem:[#allocation3 + $0x3c] sm:$0xf]
    %v731 = vld [vmem:[#allocation3 + $0x40] sm:$0xf]
    %v732 = vld [vmem:[#allocation3 + $0x44] sm:$0xf]
    %v733 = vld [vmem:[#allocation3 + $0x48] sm:$0xf]
    %v734 = vld [vmem:[#allocation3 + $0x4c] sm:$0xf]
    %v735 = vld [vmem:[#allocation3 + $0x50] sm:$0xf]
    %v736 = vld [vmem:[#allocation3 + $0x54] sm:$0xf]
    %v737 = vld [vmem:[#allocation3 + $0x58] sm:$0xf]
    %v738 = vld [vmem:[#allocation3 + $0x5c] sm:$0xf]
    %v739 = vld [vmem:[#allocation3 + $0x60] sm:$0xf]
    %v740 = vld [vmem:[#allocation3 + $0x64] sm:$0xf]
    %v741 = vld [vmem:[#allocation3 + $0x68] sm:$0xf]
    %v742 = vld [vmem:[#allocation3 + $0x6c] sm:$0xf]
    %v743 = vld [vmem:[#allocation3 + $0x70] sm:$0xf]
    %v744 = vld [vmem:[#allocation3 + $0x74] sm:$0xf]
    %v745 = vld [vmem:[#allocation3 + $0x78] sm:$0xf]
    %v746 = vld [vmem:[#allocation3 + $0x7c] sm:$0xf]
    %v779 = vunpack.c.l.b16 %v715
    %v780 = vunpack.c.l.b16 %v716
    %v781 = vunpack.c.l.b16 %v717
    %v782 = vunpack.c.l.b16 %v718
    %v783 = vunpack.c.l.b16 %v719
    %v784 = vunpack.c.l.b16 %v720
    %v785 = vunpack.c.l.b16 %v721
    %v786 = vunpack.c.l.b16 %v722
    %v787 = vunpack.c.l.b16 %v723
    %v788 = vunpack.c.l.b16 %v724
    %v789 = vunpack.c.l.b16 %v725
    %v790 = vunpack.c.l.b16 %v726
    %v791 = vunpack.c.l.b16 %v727
    %v792 = vunpack.c.l.b16 %v728
    %v793 = vunpack.c.l.b16 %v729
    %v794 = vunpack.c.l.b16 %v730
    %v795 = vunpack.c.l.b16 %v731
    %v796 = vunpack.c.l.b16 %v732
    %v797 = vunpack.c.l.b16 %v733
    %v798 = vunpack.c.l.b16 %v734
    %v799 = vunpack.c.l.b16 %v735
    %v800 = vunpack.c.l.b16 %v736
    %v801 = vunpack.c.l.b16 %v737
    %v802 = vunpack.c.l.b16 %v738
    %v803 = vunpack.c.l.b16 %v739
    %v804 = vunpack.c.l.b16 %v740
    %v805 = vunpack.c.l.b16 %v741
    %v806 = vunpack.c.l.b16 %v742
    %v807 = vunpack.c.l.b16 %v743
    %v808 = vunpack.c.l.b16 %v744
    %v809 = vunpack.c.l.b16 %v745
    %v810 = vunpack.c.l.b16 %v746
    %v811 = vpack.c.b16 %v780, %v779
    %v812 = vpack.c.b16 %v782, %v781
    %v813 = vpack.c.b16 %v784, %v783
    %v814 = vpack.c.b16 %v786, %v785
    %v815 = vpack.c.b16 %v788, %v787
    %v816 = vpack.c.b16 %v790, %v789
    %v817 = vpack.c.b16 %v792, %v791
    %v818 = vpack.c.b16 %v794, %v793
    %v819 = vpack.c.b16 %v796, %v795
    %v820 = vpack.c.b16 %v798, %v797
    %v821 = vpack.c.b16 %v800, %v799
    %v822 = vpack.c.b16 %v802, %v801
    %v823 = vpack.c.b16 %v804, %v803
    %v824 = vpack.c.b16 %v806, %v805
    %v825 = vpack.c.b16 %v808, %v807
    %v826 = vpack.c.b16 %v810, %v809
    %843 = vmatprep.subr.bf16.mxu0 0
    %844 = vmatpush1.bf16.msra.mxu0 %v811
    %845 = vmatprep.subr.bf16.mxu0 0
    %846 = vmatpush1.bf16.msra.mxu0 %v812
    %847 = vmatprep.subr.bf16.mxu0 0
    %848 = vmatpush1.bf16.msra.mxu0 %v813
    %849 = vmatprep.subr.bf16.mxu0 0
    %850 = vmatpush1.bf16.msra.mxu0 %v814
    %851 = vmatprep.subr.bf16.mxu0 0
    %852 = vmatpush1.bf16.msra.mxu0 %v815
    %853 = vmatprep.subr.bf16.mxu0 0
    %854 = vmatpush1.bf16.msra.mxu0 %v816
    %855 = vmatprep.subr.bf16.mxu0 0
    %856 = vmatpush1.bf16.msra.mxu0 %v817
    %857 = vmatprep.subr.bf16.mxu0 0
    %858 = vmatpush1.bf16.msra.mxu0 %v818
    %859 = vmatprep.subr.bf16.mxu0 0
    %860 = vmatpush1.bf16.msra.mxu0 %v819
    %861 = vmatprep.subr.bf16.mxu0 0
    %862 = vmatpush1.bf16.msra.mxu0 %v820
    %863 = vmatprep.subr.bf16.mxu0 0
    %864 = vmatpush1.bf16.msra.mxu0 %v821
    %865 = vmatprep.subr.bf16.mxu0 0
    %866 = vmatpush1.bf16.msra.mxu0 %v822
    %867 = vmatprep.subr.bf16.mxu0 0
    %868 = vmatpush1.bf16.msra.mxu0 %v823
    %869 = vmatprep.subr.bf16.mxu0 0
    %870 = vmatpush1.bf16.msra.mxu0 %v824
    %871 = vmatprep.subr.bf16.mxu0 0
    %872 = vmatpush1.bf16.msra.mxu0 %v825
    %873 = vmatprep.subr.bf16.mxu0 0
    %874 = vmatpush1.bf16.msra.mxu0 %v826
    %875 = vmatprep.mubr.bf16.mxu0 %v708
    %876 = vmatmul.mubr.bf16.gmra.mrb[0].mxu0 %v707
    %v877 = vpop.f32.mrb[0].mxu0
    %v878 = vadd.f32 0.0, %v877
    %v879 = vpop.f32.mrb[0].mxu0
    %v880 = vpop.f32.mrb[0].mxu0
    %v881 = vadd.f32 0.0, %v880
    %v882 = vpop.f32.mrb[0].mxu0
    %883 = vmatprep.mubr.bf16.mxu0 %v710
    %884 = vmatmul.mubr.bf16.gmra.mrb[0].mxu0 %v709
    %v885 = vpop.f32.mrb[0].mxu0
    %v886 = vadd.f32 0.0, %v885
    %v887 = vpop.f32.mrb[0].mxu0
    %v888 = vpop.f32.mrb[0].mxu0
    %v889 = vadd.f32 0.0, %v888
    %v890 = vpop.f32.mrb[0].mxu0
    %891 = vmatprep.mubr.bf16.mxu0 %v712
    %892 = vmatmul.mubr.bf16.gmra.mrb[0].mxu0 %v711
    %v893 = vpop.f32.mrb[0].mxu0
    %v894 = vadd.f32 0.0, %v893
    %v895 = vpop.f32.mrb[0].mxu0
    %v896 = vpop.f32.mrb[0].mxu0
    %v897 = vadd.f32 0.0, %v896
    %v898 = vpop.f32.mrb[0].mxu0
    %899 = vmatprep.mubr.bf16.mxu0 %v714
    %900 = vmatmul.mubr.bf16.gmra.mrb[0].mxu0 %v713
    %v901 = vpop.f32.mrb[0].mxu0
    %v902 = vadd.f32 0.0, %v901
    %v903 = vpop.f32.mrb[0].mxu0
    %v904 = vpop.f32.mrb[0].mxu0
    %v905 = vadd.f32 0.0, %v904
    %v906 = vpop.f32.mrb[0].mxu0
    %907 = vdwg.mxu0
    %v908 = vpack.c.bf16 %v881, %v878
    %v909 = vpack.c.bf16 %v889, %v886
    %v910 = vpack.c.bf16 %v897, %v894
    %v911 = vpack.c.bf16 %v905, %v902
    %v912 = vld [vmem:[#allocation8] sm:$0xff]
    %v913 = vld [vmem:[#allocation8 + $0x8] sm:$0xff]
    %v914 = vld [vmem:[#allocation8 + $0x10] sm:$0xff]
    %v915 = vld [vmem:[#allocation8 + $0x18] sm:$0xff]
    %v916 = vld [vmem:[#allocation8 + $0x20] sm:$0xff]
    %v917 = vld [vmem:[#allocation8 + $0x28] sm:$0xff]
    %v918 = vld [vmem:[#allocation8 + $0x30] sm:$0xff]
    %v919 = vld [vmem:[#allocation8 + $0x38] sm:$0xff]
    %v920 = vld [vmem:[#allocation8 + $0x40] sm:$0xff]
    %v921 = vld [vmem:[#allocation8 + $0x48] sm:$0xff]
    %v922 = vld [vmem:[#allocation8 + $0x50] sm:$0xff]
    %v923 = vld [vmem:[#allocation8 + $0x58] sm:$0xff]
    %v924 = vld [vmem:[#allocation8 + $0x60] sm:$0xff]
    %v925 = vld [vmem:[#allocation8 + $0x68] sm:$0xff]
    %v926 = vld [vmem:[#allocation8 + $0x70] sm:$0xff]
    %v927 = vld [vmem:[#allocation8 + $0x78] sm:$0xff]
    %v928 = vld [vmem:[#allocation8 + $0x80] sm:$0xff]
    %v929 = vld [vmem:[#allocation8 + $0x88] sm:$0xff]
    %v930 = vld [vmem:[#allocation8 + $0x90] sm:$0xff]
    %v931 = vld [vmem:[#allocation8 + $0x98] sm:$0xff]
    %v932 = vld [vmem:[#allocation8 + $0xa0] sm:$0xff]
    %v933 = vld [vmem:[#allocation8 + $0xa8] sm:$0xff]
    %v934 = vld [vmem:[#allocation8 + $0xb0] sm:$0xff]
    %v935 = vld [vmem:[#allocation8 + $0xb8] sm:$0xff]
    %v936 = vld [vmem:[#allocation8 + $0xc0] sm:$0xff]
    %v937 = vld [vmem:[#allocation8 + $0xc8] sm:$0xff]
    %v938 = vld [vmem:[#allocation8 + $0xd0] sm:$0xff]
    %v939 = vld [vmem:[#allocation8 + $0xd8] sm:$0xff]
    %v940 = vld [vmem:[#allocation8 + $0xe0] sm:$0xff]
    %v941 = vld [vmem:[#allocation8 + $0xe8] sm:$0xff]
    %v942 = vld [vmem:[#allocation8 + $0xf0] sm:$0xff]
    %v943 = vld [vmem:[#allocation8 + $0xf8] sm:$0xff]
    %v944 = vld [vmem:[%s6] sm:$0xf]
    %v946 = vlaneseq
    %v947 = vshrl.u32 %v946, 7
    %v948 = vsub.s32 0, %v947
    %v949 = vrot.slane %v944, %v948
    %v950 = vlaneseq
    %v951 = vshrl.u32 %v950, 7
    %v952 = vsub.s32 1, %v951
    %v953 = vrot.slane %v944, %v952
    %v954 = vlaneseq
    %v955 = vshrl.u32 %v954, 7
    %v956 = vsub.s32 2, %v955
    %v957 = vrot.slane %v944, %v956
    %v958 = vlaneseq
    %v959 = vshrl.u32 %v958, 7
    %v960 = vsub.s32 3, %v959
    %v961 = vrot.slane %v944, %v960
    %v998 = vunpack.c.l.b16 %v912
    %v999 = vunpack.c.h.b16 %v912
    %v1000 = vunpack.c.l.b16 %v913
    %v1001 = vunpack.c.h.b16 %v913
    %v1002 = vunpack.c.l.b16 %v914
    %v1003 = vunpack.c.h.b16 %v914
    %v1004 = vunpack.c.l.b16 %v915
    %v1005 = vunpack.c.h.b16 %v915
    %v1006 = vunpack.c.l.b16 %v916
    %v1007 = vunpack.c.h.b16 %v916
    %v1008 = vunpack.c.l.b16 %v917
    %v1009 = vunpack.c.h.b16 %v917
    %v1010 = vunpack.c.l.b16 %v918
    %v1011 = vunpack.c.h.b16 %v918
    %v1012 = vunpack.c.l.b16 %v919
    %v1013 = vunpack.c.h.b16 %v919
    %v1014 = vunpack.c.l.b16 %v920
    %v1015 = vunpack.c.h.b16 %v920
    %v1016 = vunpack.c.l.b16 %v921
    %v1017 = vunpack.c.h.b16 %v921
    %v1018 = vunpack.c.l.b16 %v922
    %v1019 = vunpack.c.h.b16 %v922
    %v1020 = vunpack.c.l.b16 %v923
    %v1021 = vunpack.c.h.b16 %v923
    %v1022 = vunpack.c.l.b16 %v924
    %v1023 = vunpack.c.h.b16 %v924
    %v1024 = vunpack.c.l.b16 %v925
    %v1025 = vunpack.c.h.b16 %v925
    %v1026 = vunpack.c.l.b16 %v926
    %v1027 = vunpack.c.h.b16 %v926
    %v1028 = vunpack.c.l.b16 %v927
    %v1029 = vunpack.c.h.b16 %v927
    %v1030 = vunpack.c.l.b16 %v928
    %v1031 = vunpack.c.h.b16 %v928
    %v1032 = vunpack.c.l.b16 %v929
    %v1033 = vunpack.c.h.b16 %v929
    %v1034 = vunpack.c.l.b16 %v930
    %v1035 = vunpack.c.h.b16 %v930
    %v1036 = vunpack.c.l.b16 %v931
    %v1037 = vunpack.c.h.b16 %v931
    %v1038 = vunpack.c.l.b16 %v932
    %v1039 = vunpack.c.h.b16 %v932
    %v1040 = vunpack.c.l.b16 %v933
    %v1041 = vunpack.c.h.b16 %v933
    %v1042 = vunpack.c.l.b16 %v934
    %v1043 = vunpack.c.h.b16 %v934
    %v1044 = vunpack.c.l.b16 %v935
    %v1045 = vunpack.c.h.b16 %v935
    %v1046 = vunpack.c.l.b16 %v936
    %v1047 = vunpack.c.h.b16 %v936
    %v1048 = vunpack.c.l.b16 %v937
    %v1049 = vunpack.c.h.b16 %v937
    %v1050 = vunpack.c.l.b16 %v938
    %v1051 = vunpack.c.h.b16 %v938
    %v1052 = vunpack.c.l.b16 %v939
    %v1053 = vunpack.c.h.b16 %v939
    %v1054 = vunpack.c.l.b16 %v940
    %v1055 = vunpack.c.h.b16 %v940
    %v1056 = vunpack.c.l.b16 %v941
    %v1057 = vunpack.c.h.b16 %v941
    %v1058 = vunpack.c.l.b16 %v942
    %v1059 = vunpack.c.h.b16 %v942
    %v1060 = vunpack.c.l.b16 %v943
    %v1061 = vunpack.c.h.b16 %v943
    %v1062 = vpack.c.b16 %v1002, %v998
    %v1063 = vpack.c.b16 %v1003, %v999
    %v1064 = vpack.c.b16 %v1004, %v1000
    %v1065 = vpack.c.b16 %v1005, %v1001
    %v1066 = vpack.c.b16 %v1010, %v1006
    %v1067 = vpack.c.b16 %v1011, %v1007
    %v1068 = vpack.c.b16 %v1012, %v1008
    %v1069 = vpack.c.b16 %v1013, %v1009
    %v1070 = vpack.c.b16 %v1018, %v1014
    %v1071 = vpack.c.b16 %v1019, %v1015
    %v1072 = vpack.c.b16 %v1020, %v1016
    %v1073 = vpack.c.b16 %v1021, %v1017
    %v1074 = vpack.c.b16 %v1026, %v1022
    %v1075 = vpack.c.b16 %v1027, %v1023
    %v1076 = vpack.c.b16 %v1028, %v1024
    %v1077 = vpack.c.b16 %v1029, %v1025
    %v1078 = vpack.c.b16 %v1034, %v1030
    %v1079 = vpack.c.b16 %v1035, %v1031
    %v1080 = vpack.c.b16 %v1036, %v1032
    %v1081 = vpack.c.b16 %v1037, %v1033
    %v1082 = vpack.c.b16 %v1042, %v1038
    %v1083 = vpack.c.b16 %v1043, %v1039
    %v1084 = vpack.c.b16 %v1044, %v1040
    %v1085 = vpack.c.b16 %v1045, %v1041
    %v1086 = vpack.c.b16 %v1050, %v1046
    %v1087 = vpack.c.b16 %v1051, %v1047
    %v1088 = vpack.c.b16 %v1052, %v1048
    %v1089 = vpack.c.b16 %v1053, %v1049
    %v1090 = vpack.c.b16 %v1058, %v1054
    %v1091 = vpack.c.b16 %v1059, %v1055
    %v1092 = vpack.c.b16 %v1060, %v1056
    %v1093 = vpack.c.b16 %v1061, %v1057
    %1126 = vmatprep.subr.bf16.mxu0 %v1063
    %1127 = vmatpush1.bf16.msra.mxu0 %v1062
    %1128 = vmatprep.subr.bf16.mxu0 %v1067
    %1129 = vmatpush1.bf16.msra.mxu0 %v1066
    %1130 = vmatprep.subr.bf16.mxu0 %v1071
    %1131 = vmatpush1.bf16.msra.mxu0 %v1070
    %1132 = vmatprep.subr.bf16.mxu0 %v1075
    %1133 = vmatpush1.bf16.msra.mxu0 %v1074
    %1134 = vmatprep.subr.bf16.mxu0 %v1079
    %1135 = vmatpush1.bf16.msra.mxu0 %v1078
    %1136 = vmatprep.subr.bf16.mxu0 %v1083
    %1137 = vmatpush1.bf16.msra.mxu0 %v1082
    %1138 = vmatprep.subr.bf16.mxu0 %v1087
    %1139 = vmatpush1.bf16.msra.mxu0 %v1086
    %1140 = vmatprep.subr.bf16.mxu0 %v1091
    %1141 = vmatpush1.bf16.msra.mxu0 %v1090
    %1142 = vmatprep.subr.bf16.mxu0 0
    %1143 = vmatpush1.bf16.msra.mxu0 0
    %1144 = vmatprep.subr.bf16.mxu0 0
    %1145 = vmatpush1.bf16.msra.mxu0 0
    %1146 = vmatprep.subr.bf16.mxu0 0
    %1147 = vmatpush1.bf16.msra.mxu0 0
    %1148 = vmatprep.subr.bf16.mxu0 0
    %1149 = vmatpush1.bf16.msra.mxu0 0
    %1150 = vmatprep.subr.bf16.mxu0 0
    %1151 = vmatpush1.bf16.msra.mxu0 0
    %1152 = vmatprep.subr.bf16.mxu0 0
    %1153 = vmatpush1.bf16.msra.mxu0 0
    %1154 = vmatprep.subr.bf16.mxu0 0
    %1155 = vmatpush1.bf16.msra.mxu0 0
    %1156 = vmatprep.subr.bf16.mxu0 0
    %1157 = vmatpush1.bf16.msra.mxu0 0
    %1158 = vmatprep.mubr.bf16.mxu0 0
    %1159 = vmatmul.mubr.bf16.gmra.mrb[0].mxu0 %v908
    %v1160 = vpop.f32.mrb[0].mxu0
    %v1161 = vadd.f32 %v949, %v1160
    %v1162 = vpop.f32.mrb[0].mxu0
    %v1163 = vadd.f32 %v953, %v1162
    %v1164 = vpop.f32.mrb[0].mxu0
    %v1165 = vadd.f32 %v949, %v1164
    %v1166 = vpop.f32.mrb[0].mxu0
    %v1167 = vadd.f32 %v953, %v1166
    %1168 = vmatprep.mubr.bf16.mxu0 0
    %1169 = vmatmul.mubr.bf16.gmra.mrb[0].mxu0 %v909
    %v1170 = vpop.f32.mrb[0].mxu0
    %v1171 = vadd.f32 %v949, %v1170
    %v1172 = vpop.f32.mrb[0].mxu0
    %v1173 = vadd.f32 %v953, %v1172
    %v1174 = vpop.f32.mrb[0].mxu0
    %v1175 = vadd.f32 %v949, %v1174
    %v1176 = vpop.f32.mrb[0].mxu0
    %v1177 = vadd.f32 %v953, %v1176
    %1178 = vmatprep.mubr.bf16.mxu0 0
    %1179 = vmatmul.mubr.bf16.gmra.mrb[0].mxu0 %v910
    %v1180 = vpop.f32.mrb[0].mxu0
    %v1181 = vadd.f32 %v949, %v1180
    %v1182 = vpop.f32.mrb[0].mxu0
    %v1183 = vadd.f32 %v953, %v1182
    %v1184 = vpop.f32.mrb[0].mxu0
    %v1185 = vadd.f32 %v949, %v1184
    %v1186 = vpop.f32.mrb[0].mxu0
    %v1187 = vadd.f32 %v953, %v1186
    %1188 = vmatprep.mubr.bf16.mxu0 0
    %1189 = vmatmul.mubr.bf16.gmra.mrb[0].mxu0 %v911
    %v1190 = vpop.f32.mrb[0].mxu0
    %v1191 = vadd.f32 %v949, %v1190
    %v1192 = vpop.f32.mrb[0].mxu0
    %v1193 = vadd.f32 %v953, %v1192
    %v1194 = vpop.f32.mrb[0].mxu0
    %v1195 = vadd.f32 %v949, %v1194
    %v1196 = vpop.f32.mrb[0].mxu0
    %v1197 = vadd.f32 %v953, %v1196
    %1198 = vdwg.mxu0
    %1199 = vmatprep.subr.bf16.mxu0 %v1065
    %1200 = vmatpush1.bf16.msra.mxu0 %v1064
    %1201 = vmatprep.subr.bf16.mxu0 %v1069
    %1202 = vmatpush1.bf16.msra.mxu0 %v1068
    %1203 = vmatprep.subr.bf16.mxu0 %v1073
    %1204 = vmatpush1.bf16.msra.mxu0 %v1072
    %1205 = vmatprep.subr.bf16.mxu0 %v1077
    %1206 = vmatpush1.bf16.msra.mxu0 %v1076
    %1207 = vmatprep.subr.bf16.mxu0 %v1081
    %1208 = vmatpush1.bf16.msra.mxu0 %v1080
    %1209 = vmatprep.subr.bf16.mxu0 %v1085
    %1210 = vmatpush1.bf16.msra.mxu0 %v1084
    %1211 = vmatprep.subr.bf16.mxu0 %v1089
    %1212 = vmatpush1.bf16.msra.mxu0 %v1088
    %1213 = vmatprep.subr.bf16.mxu0 %v1093
    %1214 = vmatpush1.bf16.msra.mxu0 %v1092
    %1215 = vmatprep.subr.bf16.mxu0 0
    %1216 = vmatpush1.bf16.msra.mxu0 0
    %1217 = vmatprep.subr.bf16.mxu0 0
    %1218 = vmatpush1.bf16.msra.mxu0 0
    %1219 = vmatprep.subr.bf16.mxu0 0
    %1220 = vmatpush1.bf16.msra.mxu0 0
    %1221 = vmatprep.subr.bf16.mxu0 0
    %1222 = vmatpush1.bf16.msra.mxu0 0
    %1223 = vmatprep.subr.bf16.mxu0 0
    %1224 = vmatpush1.bf16.msra.mxu0 0
    %1225 = vmatprep.subr.bf16.mxu0 0
    %1226 = vmatpush1.bf16.msra.mxu0 0
    %1227 = vmatprep.subr.bf16.mxu0 0
    %1228 = vmatpush1.bf16.msra.mxu0 0
    %1229 = vmatprep.subr.bf16.mxu0 0
    %1230 = vmatpush1.bf16.msra.mxu0 0
    %1231 = vmatprep.mubr.bf16.mxu0 0
    %1232 = vmatmul.mubr.bf16.gmra.mrb[0].mxu0 %v908
    %v1233 = vpop.f32.mrb[0].mxu0
    %v1234 = vadd.f32 %v957, %v1233
    %v1235 = vpop.f32.mrb[0].mxu0
    %v1236 = vadd.f32 %v961, %v1235
    %v1237 = vpop.f32.mrb[0].mxu0
    %v1238 = vadd.f32 %v957, %v1237
    %v1239 = vpop.f32.mrb[0].mxu0
    %v1240 = vadd.f32 %v961, %v1239
    %1241 = vmatprep.mubr.bf16.mxu0 0
    %1242 = vmatmul.mubr.bf16.gmra.mrb[0].mxu0 %v909
    %v1243 = vpop.f32.mrb[0].mxu0
    %v1244 = vadd.f32 %v957, %v1243
    %v1245 = vpop.f32.mrb[0].mxu0
    %v1246 = vadd.f32 %v961, %v1245
    %v1247 = vpop.f32.mrb[0].mxu0
    %v1248 = vadd.f32 %v957, %v1247
    %v1249 = vpop.f32.mrb[0].mxu0
    %v1250 = vadd.f32 %v961, %v1249
    %1251 = vmatprep.mubr.bf16.mxu0 0
    %1252 = vmatmul.mubr.bf16.gmra.mrb[0].mxu0 %v910
    %v1253 = vpop.f32.mrb[0].mxu0
    %v1254 = vadd.f32 %v957, %v1253
    %v1255 = vpop.f32.mrb[0].mxu0
    %v1256 = vadd.f32 %v961, %v1255
    %v1257 = vpop.f32.mrb[0].mxu0
    %v1258 = vadd.f32 %v957, %v1257
    %v1259 = vpop.f32.mrb[0].mxu0
    %v1260 = vadd.f32 %v961, %v1259
    %1261 = vmatprep.mubr.bf16.mxu0 0
    %1262 = vmatmul.mubr.bf16.gmra.mrb[0].mxu0 %v911
    %v1263 = vpop.f32.mrb[0].mxu0
    %v1264 = vadd.f32 %v957, %v1263
    %v1265 = vpop.f32.mrb[0].mxu0
    %v1266 = vadd.f32 %v961, %v1265
    %v1267 = vpop.f32.mrb[0].mxu0
    %v1268 = vadd.f32 %v957, %v1267
    %v1269 = vpop.f32.mrb[0].mxu0
    %v1270 = vadd.f32 %v961, %v1269
    %1271 = vdwg.mxu0
    %1272 = vst [vmem:[#allocation2] sm:$0xff] %v1161
    %1273 = vst [vmem:[#allocation2 + $0x8] sm:$0xff] %v1163
    %1274 = vst [vmem:[#allocation2 + $0x10] sm:$0xff] %v1234
    %1275 = vst [vmem:[#allocation2 + $0x18] sm:$0xff] %v1236
    %1276 = vst [vmem:[#allocation2 + $0x20] sm:$0xff] %v1165
    %1277 = vst [vmem:[#allocation2 + $0x28] sm:$0xff] %v1167
    %1278 = vst [vmem:[#allocation2 + $0x30] sm:$0xff] %v1238
    %1279 = vst [vmem:[#allocation2 + $0x38] sm:$0xff] %v1240
    %1280 = vst [vmem:[#allocation2 + $0x40] sm:$0xff] %v1171
    %1281 = vst [vmem:[#allocation2 + $0x48] sm:$0xff] %v1173
    %1282 = vst [vmem:[#allocation2 + $0x50] sm:$0xff] %v1244
    %1283 = vst [vmem:[#allocation2 + $0x58] sm:$0xff] %v1246
    %1284 = vst [vmem:[#allocation2 + $0x60] sm:$0xff] %v1175
    %1285 = vst [vmem:[#allocation2 + $0x68] sm:$0xff] %v1177
    %1286 = vst [vmem:[#allocation2 + $0x70] sm:$0xff] %v1248
    %1287 = vst [vmem:[#allocation2 + $0x78] sm:$0xff] %v1250
    %1288 = vst [vmem:[#allocation2 + $0x80] sm:$0xff] %v1181
    %1289 = vst [vmem:[#allocation2 + $0x88] sm:$0xff] %v1183
    %1290 = vst [vmem:[#allocation2 + $0x90] sm:$0xff] %v1254
    %1291 = vst [vmem:[#allocation2 + $0x98] sm:$0xff] %v1256
    %1292 = vst [vmem:[#allocation2 + $0xa0] sm:$0xff] %v1185
    %1293 = vst [vmem:[#allocation2 + $0xa8] sm:$0xff] %v1187
    %1294 = vst [vmem:[#allocation2 + $0xb0] sm:$0xff] %v1258
    %1295 = vst [vmem:[#allocation2 + $0xb8] sm:$0xff] %v1260
    %1296 = vst [vmem:[#allocation2 + $0xc0] sm:$0xff] %v1191
    %1297 = vst [vmem:[#allocation2 + $0xc8] sm:$0xff] %v1193
    %1298 = vst [vmem:[#allocation2 + $0xd0] sm:$0xff] %v1264
    %1299 = vst [vmem:[#allocation2 + $0xd8] sm:$0xff] %v1266
    %1300 = vst [vmem:[#allocation2 + $0xe0] sm:$0xff] %v1195
    %1301 = vst [vmem:[#allocation2 + $0xe8] sm:$0xff] %v1197
    %1302 = vst [vmem:[#allocation2 + $0xf0] sm:$0xff] %v1268
    %1303 = vst [vmem:[#allocation2 + $0xf8] sm:$0xff] %v1270
    %v1304 = vld [vmem:[#allocation2] sm:$0xff]
    %v1305 = vld [vmem:[#allocation2 + $0x8] sm:$0xff]
    %v1306 = vld [vmem:[#allocation2 + $0x10] sm:$0xff]
    %v1307 = vld [vmem:[#allocation2 + $0x18] sm:$0xff]
    %v1308 = vld [vmem:[#allocation9] sm:$0xff]
    %v1309 = vld [vmem:[#allocation9 + $0x8] sm:$0xff]
    %v1310 = vld [vmem:[#allocation9 + $0x10] sm:$0xff]
    %v1311 = vld [vmem:[#allocation9 + $0x18] sm:$0xff]
    %v1312 = vld [vmem:[#allocation9 + $0x20] sm:$0xff]
    %v1313 = vld [vmem:[#allocation9 + $0x28] sm:$0xff]
    %v1314 = vld [vmem:[#allocation9 + $0x30] sm:$0xff]
    %v1315 = vld [vmem:[#allocation9 + $0x38] sm:$0xff]
    %v1316 = vld [vmem:[#allocation9 + $0x40] sm:$0xff]
    %v1317 = vld [vmem:[#allocation9 + $0x48] sm:$0xff]
    %v1318 = vld [vmem:[#allocation9 + $0x50] sm:$0xff]
    %v1319 = vld [vmem:[#allocation9 + $0x58] sm:$0xff]
    %v1320 = vld [vmem:[#allocation9 + $0x60] sm:$0xff]
    %v1321 = vld [vmem:[#allocation9 + $0x68] sm:$0xff]
    %v1322 = vld [vmem:[#allocation9 + $0x70] sm:$0xff]
    %v1323 = vld [vmem:[#allocation9 + $0x78] sm:$0xff]
    %v1324 = vld [vmem:[#allocation9 + $0x80] sm:$0xff]
    %v1325 = vld [vmem:[#allocation9 + $0x88] sm:$0xff]
    %v1326 = vld [vmem:[#allocation9 + $0x90] sm:$0xff]
    %v1327 = vld [vmem:[#allocation9 + $0x98] sm:$0xff]
    %v1328 = vld [vmem:[#allocation9 + $0xa0] sm:$0xff]
    %v1329 = vld [vmem:[#allocation9 + $0xa8] sm:$0xff]
    %v1330 = vld [vmem:[#allocation9 + $0xb0] sm:$0xff]
    %v1331 = vld [vmem:[#allocation9 + $0xb8] sm:$0xff]
    %v1332 = vld [vmem:[#allocation9 + $0xc0] sm:$0xff]
    %v1333 = vld [vmem:[#allocation9 + $0xc8] sm:$0xff]
    %v1334 = vld [vmem:[#allocation9 + $0xd0] sm:$0xff]
    %v1335 = vld [vmem:[#allocation9 + $0xd8] sm:$0xff]
    %v1336 = vld [vmem:[#allocation9 + $0xe0] sm:$0xff]
    %v1337 = vld [vmem:[#allocation9 + $0xe8] sm:$0xff]
    %v1338 = vld [vmem:[#allocation9 + $0xf0] sm:$0xff]
    %v1339 = vld [vmem:[#allocation9 + $0xf8] sm:$0xff]
    %v1372 = vunpack.c.l.b16 %v1308
    %v1373 = vunpack.c.h.b16 %v1308
    %v1374 = vunpack.c.l.b16 %v1309
    %v1375 = vunpack.c.h.b16 %v1309
    %v1376 = vunpack.c.l.b16 %v1310
    %v1377 = vunpack.c.h.b16 %v1310
    %v1378 = vunpack.c.l.b16 %v1311
    %v1379 = vunpack.c.h.b16 %v1311
    %v1380 = vunpack.c.l.b16 %v1312
    %v1381 = vunpack.c.h.b16 %v1312
    %v1382 = vunpack.c.l.b16 %v1313
    %v1383 = vunpack.c.h.b16 %v1313
    %v1384 = vunpack.c.l.b16 %v1314
    %v1385 = vunpack.c.h.b16 %v1314
    %v1386 = vunpack.c.l.b16 %v1315
    %v1387 = vunpack.c.h.b16 %v1315
    %v1388 = vunpack.c.l.b16 %v1316
    %v1389 = vunpack.c.h.b16 %v1316
    %v1390 = vunpack.c.l.b16 %v1317
    %v1391 = vunpack.c.h.b16 %v1317
    %v1392 = vunpack.c.l.b16 %v1318
    %v1393 = vunpack.c.h.b16 %v1318
    %v1394 = vunpack.c.l.b16 %v1319
    %v1395 = vunpack.c.h.b16 %v1319
    %v1396 = vunpack.c.l.b16 %v1320
    %v1397 = vunpack.c.h.b16 %v1320
    %v1398 = vunpack.c.l.b16 %v1321
    %v1399 = vunpack.c.h.b16 %v1321
    %v1400 = vunpack.c.l.b16 %v1322
    %v1401 = vunpack.c.h.b16 %v1322
    %v1402 = vunpack.c.l.b16 %v1323
    %v1403 = vunpack.c.h.b16 %v1323
    %v1404 = vunpack.c.l.b16 %v1324
    %v1405 = vunpack.c.h.b16 %v1324
    %v1406 = vunpack.c.l.b16 %v1325
    %v1407 = vunpack.c.h.b16 %v1325
    %v1408 = vunpack.c.l.b16 %v1326
    %v1409 = vunpack.c.h.b16 %v1326
    %v1410 = vunpack.c.l.b16 %v1327
    %v1411 = vunpack.c.h.b16 %v1327
    %v1412 = vunpack.c.l.b16 %v1328
    %v1413 = vunpack.c.h.b16 %v1328
    %v1414 = vunpack.c.l.b16 %v1329
    %v1415 = vunpack.c.h.b16 %v1329
    %v1416 = vunpack.c.l.b16 %v1330
    %v1417 = vunpack.c.h.b16 %v1330
    %v1418 = vunpack.c.l.b16 %v1331
    %v1419 = vunpack.c.h.b16 %v1331
    %v1420 = vunpack.c.l.b16 %v1332
    %v1421 = vunpack.c.h.b16 %v1332
    %v1422 = vunpack.c.l.b16 %v1333
    %v1423 = vunpack.c.h.b16 %v1333
    %v1424 = vunpack.c.l.b16 %v1334
    %v1425 = vunpack.c.h.b16 %v1334
    %v1426 = vunpack.c.l.b16 %v1335
    %v1427 = vunpack.c.h.b16 %v1335
    %v1428 = vunpack.c.l.b16 %v1336
    %v1429 = vunpack.c.h.b16 %v1336
    %v1430 = vunpack.c.l.b16 %v1337
    %v1431 = vunpack.c.h.b16 %v1337
    %v1432 = vunpack.c.l.b16 %v1338
    %v1433 = vunpack.c.h.b16 %v1338
    %v1434 = vunpack.c.l.b16 %v1339
    %v1435 = vunpack.c.h.b16 %v1339
    %v1436 = vpack.c.b16 %v1376, %v1372
    %v1437 = vpack.c.b16 %v1377, %v1373
    %v1438 = vpack.c.b16 %v1378, %v1374
    %v1439 = vpack.c.b16 %v1379, %v1375
    %v1440 = vpack.c.b16 %v1384, %v1380
    %v1441 = vpack.c.b16 %v1385, %v1381
    %v1442 = vpack.c.b16 %v1386, %v1382
    %v1443 = vpack.c.b16 %v1387, %v1383
    %v1444 = vpack.c.b16 %v1392, %v1388
    %v1445 = vpack.c.b16 %v1393, %v1389
    %v1446 = vpack.c.b16 %v1394, %v1390
    %v1447 = vpack.c.b16 %v1395, %v1391
    %v1448 = vpack.c.b16 %v1400, %v1396
    %v1449 = vpack.c.b16 %v1401, %v1397
    %v1450 = vpack.c.b16 %v1402, %v1398
    %v1451 = vpack.c.b16 %v1403, %v1399
    %v1452 = vpack.c.b16 %v1408, %v1404
    %v1453 = vpack.c.b16 %v1409, %v1405
    %v1454 = vpack.c.b16 %v1410, %v1406
    %v1455 = vpack.c.b16 %v1411, %v1407
    %v1456 = vpack.c.b16 %v1416, %v1412
    %v1457 = vpack.c.b16 %v1417, %v1413
    %v1458 = vpack.c.b16 %v1418, %v1414
    %v1459 = vpack.c.b16 %v1419, %v1415
    %v1460 = vpack.c.b16 %v1424, %v1420
    %v1461 = vpack.c.b16 %v1425, %v1421
    %v1462 = vpack.c.b16 %v1426, %v1422
    %v1463 = vpack.c.b16 %v1427, %v1423
    %v1464 = vpack.c.b16 %v1432, %v1428
    %v1465 = vpack.c.b16 %v1433, %v1429
    %v1466 = vpack.c.b16 %v1434, %v1430
    %v1467 = vpack.c.b16 %v1435, %v1431
    %1500 = vmatprep.subr.bf16.mxu0 %v1437
    %1501 = vmatpush1.bf16.msra.mxu0 %v1436
    %1502 = vmatprep.subr.bf16.mxu0 %v1441
    %1503 = vmatpush1.bf16.msra.mxu0 %v1440
    %1504 = vmatprep.subr.bf16.mxu0 %v1445
    %1505 = vmatpush1.bf16.msra.mxu0 %v1444
    %1506 = vmatprep.subr.bf16.mxu0 %v1449
    %1507 = vmatpush1.bf16.msra.mxu0 %v1448
    %1508 = vmatprep.subr.bf16.mxu0 %v1453
    %1509 = vmatpush1.bf16.msra.mxu0 %v1452
    %1510 = vmatprep.subr.bf16.mxu0 %v1457
    %1511 = vmatpush1.bf16.msra.mxu0 %v1456
    %1512 = vmatprep.subr.bf16.mxu0 %v1461
    %1513 = vmatpush1.bf16.msra.mxu0 %v1460
    %1514 = vmatprep.subr.bf16.mxu0 %v1465
    %1515 = vmatpush1.bf16.msra.mxu0 %v1464
    %1516 = vmatprep.subr.bf16.mxu0 0
    %1517 = vmatpush1.bf16.msra.mxu0 0
    %1518 = vmatprep.subr.bf16.mxu0 0
    %1519 = vmatpush1.bf16.msra.mxu0 0
    %1520 = vmatprep.subr.bf16.mxu0 0
    %1521 = vmatpush1.bf16.msra.mxu0 0
    %1522 = vmatprep.subr.bf16.mxu0 0
    %1523 = vmatpush1.bf16.msra.mxu0 0
    %1524 = vmatprep.subr.bf16.mxu0 0
    %1525 = vmatpush1.bf16.msra.mxu0 0
    %1526 = vmatprep.subr.bf16.mxu0 0
    %1527 = vmatpush1.bf16.msra.mxu0 0
    %1528 = vmatprep.subr.bf16.mxu0 0
    %1529 = vmatpush1.bf16.msra.mxu0 0
    %1530 = vmatprep.subr.bf16.mxu0 0
    %1531 = vmatpush1.bf16.msra.mxu0 0
    %1532 = vmatprep.mubr.bf16.mxu0 0
    %1533 = vmatmul.mubr.bf16.gmra.mrb[0].mxu0 0
    %v1534 = vpop.f32.mrb[0].mxu0
    %v1535 = vadd.f32 0.0, %v1534
    %v1536 = vpop.f32.mrb[0].mxu0
    %v1537 = vadd.f32 0.0, %v1536
    %v1538 = vpop.f32.mrb[0].mxu0
    %v1539 = vpop.f32.mrb[0].mxu0
    %1540 = vdwg.mxu0
    %1541 = vmatprep.subr.bf16.mxu0 %v1439
    %1542 = vmatpush1.bf16.msra.mxu0 %v1438
    %1543 = vmatprep.subr.bf16.mxu0 %v1443
    %1544 = vmatpush1.bf16.msra.mxu0 %v1442
    %1545 = vmatprep.subr.bf16.mxu0 %v1447
    %1546 = vmatpush1.bf16.msra.mxu0 %v1446
    %1547 = vmatprep.subr.bf16.mxu0 %v1451
    %1548 = vmatpush1.bf16.msra.mxu0 %v1450
    %1549 = vmatprep.subr.bf16.mxu0 %v1455
    %1550 = vmatpush1.bf16.msra.mxu0 %v1454
    %1551 = vmatprep.subr.bf16.mxu0 %v1459
    %1552 = vmatpush1.bf16.msra.mxu0 %v1458
    %1553 = vmatprep.subr.bf16.mxu0 %v1463
    %1554 = vmatpush1.bf16.msra.mxu0 %v1462
    %1555 = vmatprep.subr.bf16.mxu0 %v1467
    %1556 = vmatpush1.bf16.msra.mxu0 %v1466
    %1557 = vmatprep.subr.bf16.mxu0 0
    %1558 = vmatpush1.bf16.msra.mxu0 0
    %1559 = vmatprep.subr.bf16.mxu0 0
    %1560 = vmatpush1.bf16.msra.mxu0 0
    %1561 = vmatprep.subr.bf16.mxu0 0
    %1562 = vmatpush1.bf16.msra.mxu0 0
    %1563 = vmatprep.subr.bf16.mxu0 0
    %1564 = vmatpush1.bf16.msra.mxu0 0
    %1565 = vmatprep.subr.bf16.mxu0 0
    %1566 = vmatpush1.bf16.msra.mxu0 0
    %1567 = vmatprep.subr.bf16.mxu0 0
    %1568 = vmatpush1.bf16.msra.mxu0 0
    %1569 = vmatprep.subr.bf16.mxu0 0
    %1570 = vmatpush1.bf16.msra.mxu0 0
    %1571 = vmatprep.subr.bf16.mxu0 0
    %1572 = vmatpush1.bf16.msra.mxu0 0
    %1573 = vmatprep.mubr.bf16.mxu0 0
    %1574 = vmatmul.mubr.bf16.gmra.mrb[0].mxu0 0
    %v1575 = vpop.f32.mrb[0].mxu0
    %v1576 = vadd.f32 0.0, %v1575
    %v1577 = vpop.f32.mrb[0].mxu0
    %v1578 = vadd.f32 0.0, %v1577
    %v1579 = vpop.f32.mrb[0].mxu0
    %v1580 = vpop.f32.mrb[0].mxu0
    %1581 = vdwg.mxu0
    %v1582 = vadd.f32 %v1304, %v1535
    %v1583 = vadd.f32 %v1305, %v1537
    %v1584 = vadd.f32 %v1306, %v1576
    %v1585 = vadd.f32 %v1307, %v1578
    %v1586 = vxor.u32 %v1582, 2147483648
    %v1587 = vmul.f32 %v1586, 1.442695
    %v1588 = vpow.pop %v1587
    %v1589 = vadd.f32 %v1588, 1.0
    %v1590 = vrcp.pop %v1589
    %v1591 = vmul.f32 1.0, %v1590
    %v1592 = vxor.u32 %v1583, 2147483648
    %v1593 = vmul.f32 %v1592, 1.442695
    %v1594 = vpow.pop %v1593
    %v1595 = vadd.f32 %v1594, 1.0
    %v1596 = vrcp.pop %v1595
    %v1597 = vmul.f32 1.0, %v1596
    %v1598 = vtanh.pop %v1584
    %v1599 = vxor.u32 %v1585, 2147483648
    %v1600 = vmul.f32 %v1599, 1.442695
    %v1601 = vpow.pop %v1600
    %v1602 = vadd.f32 %v1601, 1.0
    %v1603 = vrcp.pop %v1602
    %v1604 = vmul.f32 1.0, %v1603
    %v1605 = vmul.f32 %v1597, 0.0
    %v1606 = vmul.f32 %v1591, %v1598
    %v1607 = vadd.f32 %v1605, %v1606
    %v1608 = vtanh.pop %v1607
    %v1609 = vmul.f32 %v1604, %v1608
    %v1610 = vld [vmem:[#allocation2 + $0x20] sm:$0xff]
    %v1611 = vld [vmem:[#allocation2 + $0x28] sm:$0xff]
    %v1612 = vld [vmem:[#allocation2 + $0x30] sm:$0xff]
    %v1613 = vld [vmem:[#allocation2 + $0x38] sm:$0xff]
    %v1614 = vpack.c.bf16 %v1609, %v1609
    %1615 = vmatprep.subr.bf16.mxu0 %v1437
    %1616 = vmatpush1.bf16.msra.mxu0 %v1436
    %1617 = vmatprep.subr.bf16.mxu0 %v1441
    %1618 = vmatpush1.bf16.msra.mxu0 %v1440
    %1619 = vmatprep.subr.bf16.mxu0 %v1445
    %1620 = vmatpush1.bf16.msra.mxu0 %v1444
    %1621 = vmatprep.subr.bf16.mxu0 %v1449
    %1622 = vmatpush1.bf16.msra.mxu0 %v1448
    %1623 = vmatprep.subr.bf16.mxu0 %v1453
    %1624 = vmatpush1.bf16.msra.mxu0 %v1452
    %1625 = vmatprep.subr.bf16.mxu0 %v1457
    %1626 = vmatpush1.bf16.msra.mxu0 %v1456
    %1627 = vmatprep.subr.bf16.mxu0 %v1461
    %1628 = vmatpush1.bf16.msra.mxu0 %v1460
    %1629 = vmatprep.subr.bf16.mxu0 %v1465
    %1630 = vmatpush1.bf16.msra.mxu0 %v1464
    %1631 = vmatprep.subr.bf16.mxu0 0
    %1632 = vmatpush1.bf16.msra.mxu0 0
    %1633 = vmatprep.subr.bf16.mxu0 0
    %1634 = vmatpush1.bf16.msra.mxu0 0
    %1635 = vmatprep.subr.bf16.mxu0 0
    %1636 = vmatpush1.bf16.msra.mxu0 0
    %1637 = vmatprep.subr.bf16.mxu0 0
    %1638 = vmatpush1.bf16.msra.mxu0 0
    %1639 = vmatprep.subr.bf16.mxu0 0
    %1640 = vmatpush1.bf16.msra.mxu0 0
    %1641 = vmatprep.subr.bf16.mxu0 0
    %1642 = vmatpush1.bf16.msra.mxu0 0
    %1643 = vmatprep.subr.bf16.mxu0 0
    %1644 = vmatpush1.bf16.msra.mxu0 0
    %1645 = vmatprep.subr.bf16.mxu0 0
    %1646 = vmatpush1.bf16.msra.mxu0 0
    %1647 = vmatprep.mubr.bf16.mxu0 0
    %1648 = vmatmul.mubr.bf16.gmra.mrb[0].mxu0 %v1614
    %v1649 = vpop.f32.mrb[0].mxu0
    %v1650 = vadd.f32 0.0, %v1649
    %v1651 = vpop.f32.mrb[0].mxu0
    %v1652 = vadd.f32 0.0, %v1651
    %v1653 = vpop.f32.mrb[0].mxu0
    %v1654 = vpop.f32.mrb[0].mxu0
    %1655 = vdwg.mxu0
    %1656 = vmatprep.subr.bf16.mxu0 %v1439
    %1657 = vmatpush1.bf16.msra.mxu0 %v1438
    %1658 = vmatprep.subr.bf16.mxu0 %v1443
    %1659 = vmatpush1.bf16.msra.mxu0 %v1442
    %1660 = vmatprep.subr.bf16.mxu0 %v1447
    %1661 = vmatpush1.bf16.msra.mxu0 %v1446
    %1662 = vmatprep.subr.bf16.mxu0 %v1451
    %1663 = vmatpush1.bf16.msra.mxu0 %v1450
    %1664 = vmatprep.subr.bf16.mxu0 %v1455
    %1665 = vmatpush1.bf16.msra.mxu0 %v1454
    %1666 = vmatprep.subr.bf16.mxu0 %v1459
    %1667 = vmatpush1.bf16.msra.mxu0 %v1458
    %1668 = vmatprep.subr.bf16.mxu0 %v1463
    %1669 = vmatpush1.bf16.msra.mxu0 %v1462
    %1670 = vmatprep.subr.bf16.mxu0 %v1467
    %1671 = vmatpush1.bf16.msra.mxu0 %v1466
    %1672 = vmatprep.subr.bf16.mxu0 0
    %1673 = vmatpush1.bf16.msra.mxu0 0
    %1674 = vmatprep.subr.bf16.mxu0 0
    %1675 = vmatpush1.bf16.msra.mxu0 0
    %1676 = vmatprep.subr.bf16.mxu0 0
    %1677 = vmatpush1.bf16.msra.mxu0 0
    %1678 = vmatprep.subr.bf16.mxu0 0
    %1679 = vmatpush1.bf16.msra.mxu0 0
    %1680 = vmatprep.subr.bf16.mxu0 0
    %1681 = vmatpush1.bf16.msra.mxu0 0
    %1682 = vmatprep.subr.bf16.mxu0 0
    %1683 = vmatpush1.bf16.msra.mxu0 0
    %1684 = vmatprep.subr.bf16.mxu0 0
    %1685 = vmatpush1.bf16.msra.mxu0 0
    %1686 = vmatprep.subr.bf16.mxu0 0
    %1687 = vmatpush1.bf16.msra.mxu0 0
    %1688 = vmatprep.mubr.bf16.mxu0 0
    %1689 = vmatmul.mubr.bf16.gmra.mrb[0].mxu0 %v1614
    %v1690 = vpop.f32.mrb[0].mxu0
    %v1691 = vadd.f32 0.0, %v1690
    %v1692 = vpop.f32.mrb[0].mxu0
    %v1693 = vadd.f32 0.0, %v1692
    %v1694 = vpop.f32.mrb[0].mxu0
    %v1695 = vpop.f32.mrb[0].mxu0
    %1696 = vdwg.mxu0
    %v1697 = vadd.f32 %v1610, %v1650
    %v1698 = vadd.f32 %v1611, %v1652
    %v1699 = vadd.f32 %v1612, %v1691
    %v1700 = vadd.f32 %v1613, %v1693
    %v1701 = vxor.u32 %v1697, 2147483648
    %v1702 = vmul.f32 %v1701, 1.442695
    %v1703 = vpow.pop %v1702
    %v1704 = vadd.f32 %v1703, 1.0
    %v1705 = vrcp.pop %v1704
    %v1706 = vmul.f32 1.0, %v1705
    %v1707 = vxor.u32 %v1698, 2147483648
    %v1708 = vmul.f32 %v1707, 1.442695
    %v1709 = vpow.pop %v1708
    %v1710 = vadd.f32 %v1709, 1.0
    %v1711 = vrcp.pop %v1710
    %v1712 = vmul.f32 1.0, %v1711
    %v1713 = vtanh.pop %v1699
    %v1714 = vxor.u32 %v1700, 2147483648
    %v1715 = vmul.f32 %v1714, 1.442695
    %v1716 = vpow.pop %v1715
    %v1717 = vadd.f32 %v1716, 1.0
    %v1718 = vrcp.pop %v1717
    %v1719 = vmul.f32 1.0, %v1718
    %v1720 = vmul.f32 %v1712, %v1607
    %v1721 = vmul.f32 %v1706, %v1713
    %v1722 = vadd.f32 %v1720, %v1721
    %v1723 = vtanh.pop %v1722
    %v1724 = vmul.f32 %v1719, %v1723
    %v1725 = vld [vmem:[#allocation2 + $0x40] sm:$0xff]
    %v1726 = vld [vmem:[#allocation2 + $0x48] sm:$0xff]
    %v1727 = vld [vmem:[#allocation2 + $0x50] sm:$0xff]
    %v1728 = vld [vmem:[#allocation2 + $0x58] sm:$0xff]
    %v1729 = vpack.c.bf16 %v1724, %v1724
    %1730 = vmatprep.subr.bf16.mxu0 %v1437
    %1731 = vmatpush1.bf16.msra.mxu0 %v1436
    %1732 = vmatprep.subr.bf16.mxu0 %v1441
    %1733 = vmatpush1.bf16.msra.mxu0 %v1440
    %1734 = vmatprep.subr.bf16.mxu0 %v1445
    %1735 = vmatpush1.bf16.msra.mxu0 %v1444
    %1736 = vmatprep.subr.bf16.mxu0 %v1449
    %1737 = vmatpush1.bf16.msra.mxu0 %v1448
    %1738 = vmatprep.subr.bf16.mxu0 %v1453
    %1739 = vmatpush1.bf16.msra.mxu0 %v1452
    %1740 = vmatprep.subr.bf16.mxu0 %v1457
    %1741 = vmatpush1.bf16.msra.mxu0 %v1456
    %1742 = vmatprep.subr.bf16.mxu0 %v1461
    %1743 = vmatpush1.bf16.msra.mxu0 %v1460
    %1744 = vmatprep.subr.bf16.mxu0 %v1465
    %1745 = vmatpush1.bf16.msra.mxu0 %v1464
    %1746 = vmatprep.subr.bf16.mxu0 0
    %1747 = vmatpush1.bf16.msra.mxu0 0
    %1748 = vmatprep.subr.bf16.mxu0 0
    %1749 = vmatpush1.bf16.msra.mxu0 0
    %1750 = vmatprep.subr.bf16.mxu0 0
    %1751 = vmatpush1.bf16.msra.mxu0 0
    %1752 = vmatprep.subr.bf16.mxu0 0
    %1753 = vmatpush1.bf16.msra.mxu0 0
    %1754 = vmatprep.subr.bf16.mxu0 0
    %1755 = vmatpush1.bf16.msra.mxu0 0
    %1756 = vmatprep.subr.bf16.mxu0 0
    %1757 = vmatpush1.bf16.msra.mxu0 0
    %1758 = vmatprep.subr.bf16.mxu0 0
    %1759 = vmatpush1.bf16.msra.mxu0 0
    %1760 = vmatprep.subr.bf16.mxu0 0
    %1761 = vmatpush1.bf16.msra.mxu0 0
    %1762 = vmatprep.mubr.bf16.mxu0 0
    %1763 = vmatmul.mubr.bf16.gmra.mrb[0].mxu0 %v1729
    %v1764 = vpop.f32.mrb[0].mxu0
    %v1765 = vadd.f32 0.0, %v1764
    %v1766 = vpop.f32.mrb[0].mxu0
    %v1767 = vadd.f32 0.0, %v1766
    %v1768 = vpop.f32.mrb[0].mxu0
    %v1769 = vpop.f32.mrb[0].mxu0
    %1770 = vdwg.mxu0
    %1771 = vmatprep.subr.bf16.mxu0 %v1439
    %1772 = vmatpush1.bf16.msra.mxu0 %v1438
    %1773 = vmatprep.subr.bf16.mxu0 %v1443
    %1774 = vmatpush1.bf16.msra.mxu0 %v1442
    %1775 = vmatprep.subr.bf16.mxu0 %v1447
    %1776 = vmatpush1.bf16.msra.mxu0 %v1446
    %1777 = vmatprep.subr.bf16.mxu0 %v1451
    %1778 = vmatpush1.bf16.msra.mxu0 %v1450
    %1779 = vmatprep.subr.bf16.mxu0 %v1455
    %1780 = vmatpush1.bf16.msra.mxu0 %v1454
    %1781 = vmatprep.subr.bf16.mxu0 %v1459
    %1782 = vmatpush1.bf16.msra.mxu0 %v1458
    %1783 = vmatprep.subr.bf16.mxu0 %v1463
    %1784 = vmatpush1.bf16.msra.mxu0 %v1462
    %1785 = vmatprep.subr.bf16.mxu0 %v1467
    %1786 = vmatpush1.bf16.msra.mxu0 %v1466
    %1787 = vmatprep.subr.bf16.mxu0 0
    %1788 = vmatpush1.bf16.msra.mxu0 0
    %1789 = vmatprep.subr.bf16.mxu0 0
    %1790 = vmatpush1.bf16.msra.mxu0 0
    %1791 = vmatprep.subr.bf16.mxu0 0
    %1792 = vmatpush1.bf16.msra.mxu0 0
    %1793 = vmatprep.subr.bf16.mxu0 0
    %1794 = vmatpush1.bf16.msra.mxu0 0
    %1795 = vmatprep.subr.bf16.mxu0 0
    %1796 = vmatpush1.bf16.msra.mxu0 0
    %1797 = vmatprep.subr.bf16.mxu0 0
    %1798 = vmatpush1.bf16.msra.mxu0 0
    %1799 = vmatprep.subr.bf16.mxu0 0
    %1800 = vmatpush1.bf16.msra.mxu0 0
    %1801 = vmatprep.subr.bf16.mxu0 0
    %1802 = vmatpush1.bf16.msra.mxu0 0
    %1803 = vmatprep.mubr.bf16.mxu0 0
    %1804 = vmatmul.mubr.bf16.gmra.mrb[0].mxu0 %v1729
    %v1805 = vpop.f32.mrb[0].mxu0
    %v1806 = vadd.f32 0.0, %v1805
    %v1807 = vpop.f32.mrb[0].mxu0
    %v1808 = vadd.f32 0.0, %v1807
    %v1809 = vpop.f32.mrb[0].mxu0
    %v1810 = vpop.f32.mrb[0].mxu0
    %1811 = vdwg.mxu0
    %v1812 = vadd.f32 %v1725, %v1765
    %v1813 = vadd.f32 %v1726, %v1767
    %v1814 = vadd.f32 %v1727, %v1806
    %v1815 = vadd.f32 %v1728, %v1808
    %v1816 = vxor.u32 %v1812, 2147483648
    %v1817 = vmul.f32 %v1816, 1.442695
    %v1818 = vpow.pop %v1817
    %v1819 = vadd.f32 %v1818, 1.0
    %v1820 = vrcp.pop %v1819
    %v1821 = vmul.f32 1.0, %v1820
    %v1822 = vxor.u32 %v1813, 2147483648
    %v1823 = vmul.f32 %v1822, 1.442695
    %v1824 = vpow.pop %v1823
    %v1825 = vadd.f32 %v1824, 1.0
    %v1826 = vrcp.pop %v1825
    %v1827 = vmul.f32 1.0, %v1826
    %v1828 = vtanh.pop %v1814
    %v1829 = vxor.u32 %v1815, 2147483648
    %v1830 = vmul.f32 %v1829, 1.442695
    %v1831 = vpow.pop %v1830
    %v1832 = vadd.f32 %v1831, 1.0
    %v1833 = vrcp.pop %v1832
    %v1834 = vmul.f32 1.0, %v1833
    %v1835 = vmul.f32 %v1827, %v1722
    %v1836 = vmul.f32 %v1821, %v1828
    %v1837 = vadd.f32 %v1835, %v1836
    %v1838 = vtanh.pop %v1837
    %v1839 = vmul.f32 %v1834, %v1838
    %v1840 = vld [vmem:[#allocation2 + $0x60] sm:$0xff]
    %v1841 = vld [vmem:[#allocation2 + $0x68] sm:$0xff]
    %v1842 = vld [vmem:[#allocation2 + $0x70] sm:$0xff]
    %v1843 = vld [vmem:[#allocation2 + $0x78] sm:$0xff]
    %v1844 = vpack.c.bf16 %v1839, %v1839
    %1845 = vmatprep.subr.bf16.mxu0 %v1437
    %1846 = vmatpush1.bf16.msra.mxu0 %v1436
    %1847 = vmatprep.subr.bf16.mxu0 %v1441
    %1848 = vmatpush1.bf16.msra.mxu0 %v1440
    %1849 = vmatprep.subr.bf16.mxu0 %v1445
    %1850 = vmatpush1.bf16.msra.mxu0 %v1444
    %1851 = vmatprep.subr.bf16.mxu0 %v1449
    %1852 = vmatpush1.bf16.msra.mxu0 %v1448
    %1853 = vmatprep.subr.bf16.mxu0 %v1453
    %1854 = vmatpush1.bf16.msra.mxu0 %v1452
    %1855 = vmatprep.subr.bf16.mxu0 %v1457
    %1856 = vmatpush1.bf16.msra.mxu0 %v1456
    %1857 = vmatprep.subr.bf16.mxu0 %v1461
    %1858 = vmatpush1.bf16.msra.mxu0 %v1460
    %1859 = vmatprep.subr.bf16.mxu0 %v1465
    %1860 = vmatpush1.bf16.msra.mxu0 %v1464
    %1861 = vmatprep.subr.bf16.mxu0 0
    %1862 = vmatpush1.bf16.msra.mxu0 0
    %1863 = vmatprep.subr.bf16.mxu0 0
    %1864 = vmatpush1.bf16.msra.mxu0 0
    %1865 = vmatprep.subr.bf16.mxu0 0
    %1866 = vmatpush1.bf16.msra.mxu0 0
    %1867 = vmatprep.subr.bf16.mxu0 0
    %1868 = vmatpush1.bf16.msra.mxu0 0
    %1869 = vmatprep.subr.bf16.mxu0 0
    %1870 = vmatpush1.bf16.msra.mxu0 0
    %1871 = vmatprep.subr.bf16.mxu0 0
    %1872 = vmatpush1.bf16.msra.mxu0 0
    %1873 = vmatprep.subr.bf16.mxu0 0
    %1874 = vmatpush1.bf16.msra.mxu0 0
    %1875 = vmatprep.subr.bf16.mxu0 0
    %1876 = vmatpush1.bf16.msra.mxu0 0
    %1877 = vmatprep.mubr.bf16.mxu0 0
    %1878 = vmatmul.mubr.bf16.gmra.mrb[0].mxu0 %v1844
    %v1879 = vpop.f32.mrb[0].mxu0
    %v1880 = vadd.f32 0.0, %v1879
    %v1881 = vpop.f32.mrb[0].mxu0
    %v1882 = vadd.f32 0.0, %v1881
    %v1883 = vpop.f32.mrb[0].mxu0
    %v1884 = vpop.f32.mrb[0].mxu0
    %1885 = vdwg.mxu0
    %1886 = vmatprep.subr.bf16.mxu0 %v1439
    %1887 = vmatpush1.bf16.msra.mxu0 %v1438
    %1888 = vmatprep.subr.bf16.mxu0 %v1443
    %1889 = vmatpush1.bf16.msra.mxu0 %v1442
    %1890 = vmatprep.subr.bf16.mxu0 %v1447
    %1891 = vmatpush1.bf16.msra.mxu0 %v1446
    %1892 = vmatprep.subr.bf16.mxu0 %v1451
    %1893 = vmatpush1.bf16.msra.mxu0 %v1450
    %1894 = vmatprep.subr.bf16.mxu0 %v1455
    %1895 = vmatpush1.bf16.msra.mxu0 %v1454
    %1896 = vmatprep.subr.bf16.mxu0 %v1459
    %1897 = vmatpush1.bf16.msra.mxu0 %v1458
    %1898 = vmatprep.subr.bf16.mxu0 %v1463
    %1899 = vmatpush1.bf16.msra.mxu0 %v1462
    %1900 = vmatprep.subr.bf16.mxu0 %v1467
    %1901 = vmatpush1.bf16.msra.mxu0 %v1466
    %1902 = vmatprep.subr.bf16.mxu0 0
    %1903 = vmatpush1.bf16.msra.mxu0 0
    %1904 = vmatprep.subr.bf16.mxu0 0
    %1905 = vmatpush1.bf16.msra.mxu0 0
    %1906 = vmatprep.subr.bf16.mxu0 0
    %1907 = vmatpush1.bf16.msra.mxu0 0
    %1908 = vmatprep.subr.bf16.mxu0 0
    %1909 = vmatpush1.bf16.msra.mxu0 0
    %1910 = vmatprep.subr.bf16.mxu0 0
    %1911 = vmatpush1.bf16.msra.mxu0 0
    %1912 = vmatprep.subr.bf16.mxu0 0
    %1913 = vmatpush1.bf16.msra.mxu0 0
    %1914 = vmatprep.subr.bf16.mxu0 0
    %1915 = vmatpush1.bf16.msra.mxu0 0
    %1916 = vmatprep.subr.bf16.mxu0 0
    %1917 = vmatpush1.bf16.msra.mxu0 0
    %1918 = vmatprep.mubr.bf16.mxu0 0
    %1919 = vmatmul.mubr.bf16.gmra.mrb[0].mxu0 %v1844
    %v1920 = vpop.f32.mrb[0].mxu0
    %v1921 = vadd.f32 0.0, %v1920
    %v1922 = vpop.f32.mrb[0].mxu0
    %v1923 = vadd.f32 0.0, %v1922
    %v1924 = vpop.f32.mrb[0].mxu0
    %v1925 = vpop.f32.mrb[0].mxu0
    %1926 = vdwg.mxu0
    %v1927 = vadd.f32 %v1840, %v1880
    %v1928 = vadd.f32 %v1841, %v1882
    %v1929 = vadd.f32 %v1842, %v1921
    %v1930 = vadd.f32 %v1843, %v1923
    %v1931 = vxor.u32 %v1927, 2147483648
    %v1932 = vmul.f32 %v1931, 1.442695
    %v1933 = vpow.pop %v1932
    %v1934 = vadd.f32 %v1933, 1.0
    %v1935 = vrcp.pop %v1934
    %v1936 = vmul.f32 1.0, %v1935
    %v1937 = vxor.u32 %v1928, 2147483648
    %v1938 = vmul.f32 %v1937, 1.442695
    %v1939 = vpow.pop %v1938
    %v1940 = vadd.f32 %v1939, 1.0
    %v1941 = vrcp.pop %v1940
    %v1942 = vmul.f32 1.0, %v1941
    %v1943 = vtanh.pop %v1929
    %v1944 = vxor.u32 %v1930, 2147483648
    %v1945 = vmul.f32 %v1944, 1.442695
    %v1946 = vpow.pop %v1945
    %v1947 = vadd.f32 %v1946, 1.0
    %v1948 = vrcp.pop %v1947
    %v1949 = vmul.f32 1.0, %v1948
    %v1950 = vmul.f32 %v1942, %v1837
    %v1951 = vmul.f32 %v1936, %v1943
    %v1952 = vadd.f32 %v1950, %v1951
    %v1953 = vtanh.pop %v1952
    %v1954 = vmul.f32 %v1949, %v1953
    %v1955 = vld [vmem:[#allocation2 + $0x80] sm:$0xff]
    %v1956 = vld [vmem:[#allocation2 + $0x88] sm:$0xff]
    %v1957 = vld [vmem:[#allocation2 + $0x90] sm:$0xff]
    %v1958 = vld [vmem:[#allocation2 + $0x98] sm:$0xff]
    %v1959 = vpack.c.bf16 %v1954, %v1954
    %1960 = vmatprep.subr.bf16.mxu0 %v1437
    %1961 = vmatpush1.bf16.msra.mxu0 %v1436
    %1962 = vmatprep.subr.bf16.mxu0 %v1441
    %1963 = vmatpush1.bf16.msra.mxu0 %v1440
    %1964 = vmatprep.subr.bf16.mxu0 %v1445
    %1965 = vmatpush1.bf16.msra.mxu0 %v1444
    %1966 = vmatprep.subr.bf16.mxu0 %v1449
    %1967 = vmatpush1.bf16.msra.mxu0 %v1448
    %1968 = vmatprep.subr.bf16.mxu0 %v1453
    %1969 = vmatpush1.bf16.msra.mxu0 %v1452
    %1970 = vmatprep.subr.bf16.mxu0 %v1457
    %1971 = vmatpush1.bf16.msra.mxu0 %v1456
    %1972 = vmatprep.subr.bf16.mxu0 %v1461
    %1973 = vmatpush1.bf16.msra.mxu0 %v1460
    %1974 = vmatprep.subr.bf16.mxu0 %v1465
    %1975 = vmatpush1.bf16.msra.mxu0 %v1464
    %1976 = vmatprep.subr.bf16.mxu0 0
    %1977 = vmatpush1.bf16.msra.mxu0 0
    %1978 = vmatprep.subr.bf16.mxu0 0
    %1979 = vmatpush1.bf16.msra.mxu0 0
    %1980 = vmatprep.subr.bf16.mxu0 0
    %1981 = vmatpush1.bf16.msra.mxu0 0
    %1982 = vmatprep.subr.bf16.mxu0 0
    %1983 = vmatpush1.bf16.msra.mxu0 0
    %1984 = vmatprep.subr.bf16.mxu0 0
    %1985 = vmatpush1.bf16.msra.mxu0 0
    %1986 = vmatprep.subr.bf16.mxu0 0
    %1987 = vmatpush1.bf16.msra.mxu0 0
    %1988 = vmatprep.subr.bf16.mxu0 0
    %1989 = vmatpush1.bf16.msra.mxu0 0
    %1990 = vmatprep.subr.bf16.mxu0 0
    %1991 = vmatpush1.bf16.msra.mxu0 0
    %1992 = vmatprep.mubr.bf16.mxu0 0
    %1993 = vmatmul.mubr.bf16.gmra.mrb[0].mxu0 %v1959
    %v1994 = vpop.f32.mrb[0].mxu0
    %v1995 = vadd.f32 0.0, %v1994
    %v1996 = vpop.f32.mrb[0].mxu0
    %v1997 = vadd.f32 0.0, %v1996
    %v1998 = vpop.f32.mrb[0].mxu0
    %v1999 = vpop.f32.mrb[0].mxu0
    %2000 = vdwg.mxu0
    %2001 = vmatprep.subr.bf16.mxu0 %v1439
    %2002 = vmatpush1.bf16.msra.mxu0 %v1438
    %2003 = vmatprep.subr.bf16.mxu0 %v1443
    %2004 = vmatpush1.bf16.msra.mxu0 %v1442
    %2005 = vmatprep.subr.bf16.mxu0 %v1447
    %2006 = vmatpush1.bf16.msra.mxu0 %v1446
    %2007 = vmatprep.subr.bf16.mxu0 %v1451
    %2008 = vmatpush1.bf16.msra.mxu0 %v1450
    %2009 = vmatprep.subr.bf16.mxu0 %v1455
    %2010 = vmatpush1.bf16.msra.mxu0 %v1454
    %2011 = vmatprep.subr.bf16.mxu0 %v1459
    %2012 = vmatpush1.bf16.msra.mxu0 %v1458
    %2013 = vmatprep.subr.bf16.mxu0 %v1463
    %2014 = vmatpush1.bf16.msra.mxu0 %v1462
    %2015 = vmatprep.subr.bf16.mxu0 %v1467
    %2016 = vmatpush1.bf16.msra.mxu0 %v1466
    %2017 = vmatprep.subr.bf16.mxu0 0
    %2018 = vmatpush1.bf16.msra.mxu0 0
    %2019 = vmatprep.subr.bf16.mxu0 0
    %2020 = vmatpush1.bf16.msra.mxu0 0
    %2021 = vmatprep.subr.bf16.mxu0 0
    %2022 = vmatpush1.bf16.msra.mxu0 0
    %2023 = vmatprep.subr.bf16.mxu0 0
    %2024 = vmatpush1.bf16.msra.mxu0 0
    %2025 = vmatprep.subr.bf16.mxu0 0
    %2026 = vmatpush1.bf16.msra.mxu0 0
    %2027 = vmatprep.subr.bf16.mxu0 0
    %2028 = vmatpush1.bf16.msra.mxu0 0
    %2029 = vmatprep.subr.bf16.mxu0 0
    %2030 = vmatpush1.bf16.msra.mxu0 0
    %2031 = vmatprep.subr.bf16.mxu0 0
    %2032 = vmatpush1.bf16.msra.mxu0 0
    %2033 = vmatprep.mubr.bf16.mxu0 0
    %2034 = vmatmul.mubr.bf16.gmra.mrb[0].mxu0 %v1959
    %v2035 = vpop.f32.mrb[0].mxu0
    %v2036 = vadd.f32 0.0, %v2035
    %v2037 = vpop.f32.mrb[0].mxu0
    %v2038 = vadd.f32 0.0, %v2037
    %v2039 = vpop.f32.mrb[0].mxu0
    %v2040 = vpop.f32.mrb[0].mxu0
    %2041 = vdwg.mxu0
    %v2042 = vadd.f32 %v1955, %v1995
    %v2043 = vadd.f32 %v1956, %v1997
    %v2044 = vadd.f32 %v1957, %v2036
    %v2045 = vadd.f32 %v1958, %v2038
    %v2046 = vxor.u32 %v2042, 2147483648
    %v2047 = vmul.f32 %v2046, 1.442695
    %v2048 = vpow.pop %v2047
    %v2049 = vadd.f32 %v2048, 1.0
    %v2050 = vrcp.pop %v2049
    %v2051 = vmul.f32 1.0, %v2050
    %v2052 = vxor.u32 %v2043, 2147483648
    %v2053 = vmul.f32 %v2052, 1.442695
    %v2054 = vpow.pop %v2053
    %v2055 = vadd.f32 %v2054, 1.0
    %v2056 = vrcp.pop %v2055
    %v2057 = vmul.f32 1.0, %v2056
    %v2058 = vtanh.pop %v2044
    %v2059 = vxor.u32 %v2045, 2147483648
    %v2060 = vmul.f32 %v2059, 1.442695
    %v2061 = vpow.pop %v2060
    %v2062 = vadd.f32 %v2061, 1.0
    %v2063 = vrcp.pop %v2062
    %v2064 = vmul.f32 1.0, %v2063
    %v2065 = vmul.f32 %v2057, %v1952
    %v2066 = vmul.f32 %v2051, %v2058
    %v2067 = vadd.f32 %v2065, %v2066
    %v2068 = vtanh.pop %v2067
    %v2069 = vmul.f32 %v2064, %v2068
    %v2070 = vld [vmem:[#allocation2 + $0xa0] sm:$0xff]
    %v2071 = vld [vmem:[#allocation2 + $0xa8] sm:$0xff]
    %v2072 = vld [vmem:[#allocation2 + $0xb0] sm:$0xff]
    %v2073 = vld [vmem:[#allocation2 + $0xb8] sm:$0xff]
    %v2074 = vpack.c.bf16 %v2069, %v2069
    %2075 = vmatprep.subr.bf16.mxu0 %v1437
    %2076 = vmatpush1.bf16.msra.mxu0 %v1436
    %2077 = vmatprep.subr.bf16.mxu0 %v1441
    %2078 = vmatpush1.bf16.msra.mxu0 %v1440
    %2079 = vmatprep.subr.bf16.mxu0 %v1445
    %2080 = vmatpush1.bf16.msra.mxu0 %v1444
    %2081 = vmatprep.subr.bf16.mxu0 %v1449
    %2082 = vmatpush1.bf16.msra.mxu0 %v1448
    %2083 = vmatprep.subr.bf16.mxu0 %v1453
    %2084 = vmatpush1.bf16.msra.mxu0 %v1452
    %2085 = vmatprep.subr.bf16.mxu0 %v1457
    %2086 = vmatpush1.bf16.msra.mxu0 %v1456
    %2087 = vmatprep.subr.bf16.mxu0 %v1461
    %2088 = vmatpush1.bf16.msra.mxu0 %v1460
    %2089 = vmatprep.subr.bf16.mxu0 %v1465
    %2090 = vmatpush1.bf16.msra.mxu0 %v1464
    %2091 = vmatprep.subr.bf16.mxu0 0
    %2092 = vmatpush1.bf16.msra.mxu0 0
    %2093 = vmatprep.subr.bf16.mxu0 0
    %2094 = vmatpush1.bf16.msra.mxu0 0
    %2095 = vmatprep.subr.bf16.mxu0 0
    %2096 = vmatpush1.bf16.msra.mxu0 0
    %2097 = vmatprep.subr.bf16.mxu0 0
    %2098 = vmatpush1.bf16.msra.mxu0 0
    %2099 = vmatprep.subr.bf16.mxu0 0
    %2100 = vmatpush1.bf16.msra.mxu0 0
    %2101 = vmatprep.subr.bf16.mxu0 0
    %2102 = vmatpush1.bf16.msra.mxu0 0
    %2103 = vmatprep.subr.bf16.mxu0 0
    %2104 = vmatpush1.bf16.msra.mxu0 0
    %2105 = vmatprep.subr.bf16.mxu0 0
    %2106 = vmatpush1.bf16.msra.mxu0 0
    %2107 = vmatprep.mubr.bf16.mxu0 0
    %2108 = vmatmul.mubr.bf16.gmra.mrb[0].mxu0 %v2074
    %v2109 = vpop.f32.mrb[0].mxu0
    %v2110 = vadd.f32 0.0, %v2109
    %v2111 = vpop.f32.mrb[0].mxu0
    %v2112 = vadd.f32 0.0, %v2111
    %v2113 = vpop.f32.mrb[0].mxu0
    %v2114 = vpop.f32.mrb[0].mxu0
    %2115 = vdwg.mxu0
    %2116 = vmatprep.subr.bf16.mxu0 %v1439
    %2117 = vmatpush1.bf16.msra.mxu0 %v1438
    %2118 = vmatprep.subr.bf16.mxu0 %v1443
    %2119 = vmatpush1.bf16.msra.mxu0 %v1442
    %2120 = vmatprep.subr.bf16.mxu0 %v1447
    %2121 = vmatpush1.bf16.msra.mxu0 %v1446
    %2122 = vmatprep.subr.bf16.mxu0 %v1451
    %2123 = vmatpush1.bf16.msra.mxu0 %v1450
    %2124 = vmatprep.subr.bf16.mxu0 %v1455
    %2125 = vmatpush1.bf16.msra.mxu0 %v1454
    %2126 = vmatprep.subr.bf16.mxu0 %v1459
    %2127 = vmatpush1.bf16.msra.mxu0 %v1458
    %2128 = vmatprep.subr.bf16.mxu0 %v1463
    %2129 = vmatpush1.bf16.msra.mxu0 %v1462
    %2130 = vmatprep.subr.bf16.mxu0 %v1467
    %2131 = vmatpush1.bf16.msra.mxu0 %v1466
    %2132 = vmatprep.subr.bf16.mxu0 0
    %2133 = vmatpush1.bf16.msra.mxu0 0
    %2134 = vmatprep.subr.bf16.mxu0 0
    %2135 = vmatpush1.bf16.msra.mxu0 0
    %2136 = vmatprep.subr.bf16.mxu0 0
    %2137 = vmatpush1.bf16.msra.mxu0 0
    %2138 = vmatprep.subr.bf16.mxu0 0
    %2139 = vmatpush1.bf16.msra.mxu0 0
    %2140 = vmatprep.subr.bf16.mxu0 0
    %2141 = vmatpush1.bf16.msra.mxu0 0
    %2142 = vmatprep.subr.bf16.mxu0 0
    %2143 = vmatpush1.bf16.msra.mxu0 0
    %2144 = vmatprep.subr.bf16.mxu0 0
    %2145 = vmatpush1.bf16.msra.mxu0 0
    %2146 = vmatprep.subr.bf16.mxu0 0
    %2147 = vmatpush1.bf16.msra.mxu0 0
    %2148 = vmatprep.mubr.bf16.mxu0 0
    %2149 = vmatmul.mubr.bf16.gmra.mrb[0].mxu0 %v2074
    %v2150 = vpop.f32.mrb[0].mxu0
    %v2151 = vadd.f32 0.0, %v2150
    %v2152 = vpop.f32.mrb[0].mxu0
    %v2153 = vadd.f32 0.0, %v2152
    %v2154 = vpop.f32.mrb[0].mxu0
    %v2155 = vpop.f32.mrb[0].mxu0
    %2156 = vdwg.mxu0
    %v2157 = vadd.f32 %v2070, %v2110
    %v2158 = vadd.f32 %v2071, %v2112
    %v2159 = vadd.f32 %v2072, %v2151
    %v2160 = vadd.f32 %v2073, %v2153
    %v2161 = vxor.u32 %v2157, 2147483648
    %v2162 = vmul.f32 %v2161, 1.442695
    %v2163 = vpow.pop %v2162
    %v2164 = vadd.f32 %v2163, 1.0
    %v2165 = vrcp.pop %v2164
    %v2166 = vmul.f32 1.0, %v2165
    %v2167 = vxor.u32 %v2158, 2147483648
    %v2168 = vmul.f32 %v2167, 1.442695
    %v2169 = vpow.pop %v2168
    %v2170 = vadd.f32 %v2169, 1.0
    %v2171 = vrcp.pop %v2170
    %v2172 = vmul.f32 1.0, %v2171
    %v2173 = vtanh.pop %v2159
    %v2174 = vxor.u32 %v2160, 2147483648
    %v2175 = vmul.f32 %v2174, 1.442695
    %v2176 = vpow.pop %v2175
    %v2177 = vadd.f32 %v2176, 1.0
    %v2178 = vrcp.pop %v2177
    %v2179 = vmul.f32 1.0, %v2178
    %v2180 = vmul.f32 %v2172, %v2067
    %v2181 = vmul.f32 %v2166, %v2173
    %v2182 = vadd.f32 %v2180, %v2181
    %v2183 = vtanh.pop %v2182
    %v2184 = vmul.f32 %v2179, %v2183
    %v2185 = vld [vmem:[#allocation2 + $0xc0] sm:$0xff]
    %v2186 = vld [vmem:[#allocation2 + $0xc8] sm:$0xff]
    %v2187 = vld [vmem:[#allocation2 + $0xd0] sm:$0xff]
    %v2188 = vld [vmem:[#allocation2 + $0xd8] sm:$0xff]
    %v2189 = vpack.c.bf16 %v2184, %v2184
    %2190 = vmatprep.subr.bf16.mxu0 %v1437
    %2191 = vmatpush1.bf16.msra.mxu0 %v1436
    %2192 = vmatprep.subr.bf16.mxu0 %v1441
    %2193 = vmatpush1.bf16.msra.mxu0 %v1440
    %2194 = vmatprep.subr.bf16.mxu0 %v1445
    %2195 = vmatpush1.bf16.msra.mxu0 %v1444
    %2196 = vmatprep.subr.bf16.mxu0 %v1449
    %2197 = vmatpush1.bf16.msra.mxu0 %v1448
    %2198 = vmatprep.subr.bf16.mxu0 %v1453
    %2199 = vmatpush1.bf16.msra.mxu0 %v1452
    %2200 = vmatprep.subr.bf16.mxu0 %v1457
    %2201 = vmatpush1.bf16.msra.mxu0 %v1456
    %2202 = vmatprep.subr.bf16.mxu0 %v1461
    %2203 = vmatpush1.bf16.msra.mxu0 %v1460
    %2204 = vmatprep.subr.bf16.mxu0 %v1465
    %2205 = vmatpush1.bf16.msra.mxu0 %v1464
    %2206 = vmatprep.subr.bf16.mxu0 0
    %2207 = vmatpush1.bf16.msra.mxu0 0
    %2208 = vmatprep.subr.bf16.mxu0 0
    %2209 = vmatpush1.bf16.msra.mxu0 0
    %2210 = vmatprep.subr.bf16.mxu0 0
    %2211 = vmatpush1.bf16.msra.mxu0 0
    %2212 = vmatprep.subr.bf16.mxu0 0
    %2213 = vmatpush1.bf16.msra.mxu0 0
    %2214 = vmatprep.subr.bf16.mxu0 0
    %2215 = vmatpush1.bf16.msra.mxu0 0
    %2216 = vmatprep.subr.bf16.mxu0 0
    %2217 = vmatpush1.bf16.msra.mxu0 0
    %2218 = vmatprep.subr.bf16.mxu0 0
    %2219 = vmatpush1.bf16.msra.mxu0 0
    %2220 = vmatprep.subr.bf16.mxu0 0
    %2221 = vmatpush1.bf16.msra.mxu0 0
    %2222 = vmatprep.mubr.bf16.mxu0 0
    %2223 = vmatmul.mubr.bf16.gmra.mrb[0].mxu0 %v2189
    %v2224 = vpop.f32.mrb[0].mxu0
    %v2225 = vadd.f32 0.0, %v2224
    %v2226 = vpop.f32.mrb[0].mxu0
    %v2227 = vadd.f32 0.0, %v2226
    %v2228 = vpop.f32.mrb[0].mxu0
    %v2229 = vpop.f32.mrb[0].mxu0
    %2230 = vdwg.mxu0
    %2231 = vmatprep.subr.bf16.mxu0 %v1439
    %2232 = vmatpush1.bf16.msra.mxu0 %v1438
    %2233 = vmatprep.subr.bf16.mxu0 %v1443
    %2234 = vmatpush1.bf16.msra.mxu0 %v1442
    %2235 = vmatprep.subr.bf16.mxu0 %v1447
    %2236 = vmatpush1.bf16.msra.mxu0 %v1446
    %2237 = vmatprep.subr.bf16.mxu0 %v1451
    %2238 = vmatpush1.bf16.msra.mxu0 %v1450
    %2239 = vmatprep.subr.bf16.mxu0 %v1455
    %2240 = vmatpush1.bf16.msra.mxu0 %v1454
    %2241 = vmatprep.subr.bf16.mxu0 %v1459
    %2242 = vmatpush1.bf16.msra.mxu0 %v1458
    %2243 = vmatprep.subr.bf16.mxu0 %v1463
    %2244 = vmatpush1.bf16.msra.mxu0 %v1462
    %2245 = vmatprep.subr.bf16.mxu0 %v1467
    %2246 = vmatpush1.bf16.msra.mxu0 %v1466
    %2247 = vmatprep.subr.bf16.mxu0 0
    %2248 = vmatpush1.bf16.msra.mxu0 0
    %2249 = vmatprep.subr.bf16.mxu0 0
    %2250 = vmatpush1.bf16.msra.mxu0 0
    %2251 = vmatprep.subr.bf16.mxu0 0
    %2252 = vmatpush1.bf16.msra.mxu0 0
    %2253 = vmatprep.subr.bf16.mxu0 0
    %2254 = vmatpush1.bf16.msra.mxu0 0
    %2255 = vmatprep.subr.bf16.mxu0 0
    %2256 = vmatpush1.bf16.msra.mxu0 0
    %2257 = vmatprep.subr.bf16.mxu0 0
    %2258 = vmatpush1.bf16.msra.mxu0 0
    %2259 = vmatprep.subr.bf16.mxu0 0
    %2260 = vmatpush1.bf16.msra.mxu0 0
    %2261 = vmatprep.subr.bf16.mxu0 0
    %2262 = vmatpush1.bf16.msra.mxu0 0
    %2263 = vmatprep.mubr.bf16.mxu0 0
    %2264 = vmatmul.mubr.bf16.gmra.mrb[0].mxu0 %v2189
    %v2265 = vpop.f32.mrb[0].mxu0
    %v2266 = vadd.f32 0.0, %v2265
    %v2267 = vpop.f32.mrb[0].mxu0
    %v2268 = vadd.f32 0.0, %v2267
    %v2269 = vpop.f32.mrb[0].mxu0
    %v2270 = vpop.f32.mrb[0].mxu0
    %2271 = vdwg.mxu0
    %v2272 = vadd.f32 %v2185, %v2225
    %v2273 = vadd.f32 %v2186, %v2227
    %v2274 = vadd.f32 %v2187, %v2266
    %v2275 = vadd.f32 %v2188, %v2268
    %v2276 = vxor.u32 %v2272, 2147483648
    %v2277 = vmul.f32 %v2276, 1.442695
    %v2278 = vpow.pop %v2277
    %v2279 = vadd.f32 %v2278, 1.0
    %v2280 = vrcp.pop %v2279
    %v2281 = vmul.f32 1.0, %v2280
    %v2282 = vxor.u32 %v2273, 2147483648
    %v2283 = vmul.f32 %v2282, 1.442695
    %v2284 = vpow.pop %v2283
    %v2285 = vadd.f32 %v2284, 1.0
    %v2286 = vrcp.pop %v2285
    %v2287 = vmul.f32 1.0, %v2286
    %v2288 = vtanh.pop %v2274
    %v2289 = vxor.u32 %v2275, 2147483648
    %v2290 = vmul.f32 %v2289, 1.442695
    %v2291 = vpow.pop %v2290
    %v2292 = vadd.f32 %v2291, 1.0
    %v2293 = vrcp.pop %v2292
    %v2294 = vmul.f32 1.0, %v2293
    %v2295 = vmul.f32 %v2287, %v2182
    %v2296 = vmul.f32 %v2281, %v2288
    %v2297 = vadd.f32 %v2295, %v2296
    %v2298 = vtanh.pop %v2297
    %v2299 = vmul.f32 %v2294, %v2298
    %v2300 = vld [vmem:[#allocation2 + $0xe0] sm:$0xff]
    %v2301 = vld [vmem:[#allocation2 + $0xe8] sm:$0xff]
    %v2302 = vld [vmem:[#allocation2 + $0xf0] sm:$0xff]
    %v2303 = vld [vmem:[#allocation2 + $0xf8] sm:$0xff]
    %v2304 = vpack.c.bf16 %v2299, %v2299
    %2305 = vmatprep.subr.bf16.mxu0 %v1437
    %2306 = vmatpush1.bf16.msra.mxu0 %v1436
    %2307 = vmatprep.subr.bf16.mxu0 %v1441
    %2308 = vmatpush1.bf16.msra.mxu0 %v1440
    %2309 = vmatprep.subr.bf16.mxu0 %v1445
    %2310 = vmatpush1.bf16.msra.mxu0 %v1444
    %2311 = vmatprep.subr.bf16.mxu0 %v1449
    %2312 = vmatpush1.bf16.msra.mxu0 %v1448
    %2313 = vmatprep.subr.bf16.mxu0 %v1453
    %2314 = vmatpush1.bf16.msra.mxu0 %v1452
    %2315 = vmatprep.subr.bf16.mxu0 %v1457
    %2316 = vmatpush1.bf16.msra.mxu0 %v1456
    %2317 = vmatprep.subr.bf16.mxu0 %v1461
    %2318 = vmatpush1.bf16.msra.mxu0 %v1460
    %2319 = vmatprep.subr.bf16.mxu0 %v1465
    %2320 = vmatpush1.bf16.msra.mxu0 %v1464
    %2321 = vmatprep.subr.bf16.mxu0 0
    %2322 = vmatpush1.bf16.msra.mxu0 0
    %2323 = vmatprep.subr.bf16.mxu0 0
    %2324 = vmatpush1.bf16.msra.mxu0 0
    %2325 = vmatprep.subr.bf16.mxu0 0
    %2326 = vmatpush1.bf16.msra.mxu0 0
    %2327 = vmatprep.subr.bf16.mxu0 0
    %2328 = vmatpush1.bf16.msra.mxu0 0
    %2329 = vmatprep.subr.bf16.mxu0 0
    %2330 = vmatpush1.bf16.msra.mxu0 0
    %2331 = vmatprep.subr.bf16.mxu0 0
    %2332 = vmatpush1.bf16.msra.mxu0 0
    %2333 = vmatprep.subr.bf16.mxu0 0
    %2334 = vmatpush1.bf16.msra.mxu0 0
    %2335 = vmatprep.subr.bf16.mxu0 0
    %2336 = vmatpush1.bf16.msra.mxu0 0
    %2337 = vmatprep.mubr.bf16.mxu0 0
    %2338 = vmatmul.mubr.bf16.gmra.mrb[0].mxu0 %v2304
    %v2339 = vpop.f32.mrb[0].mxu0
    %v2340 = vadd.f32 0.0, %v2339
    %v2341 = vpop.f32.mrb[0].mxu0
    %v2342 = vadd.f32 0.0, %v2341
    %v2343 = vpop.f32.mrb[0].mxu0
    %v2344 = vpop.f32.mrb[0].mxu0
    %2345 = vdwg.mxu0
    %2346 = vmatprep.subr.bf16.mxu0 %v1439
    %2347 = vmatpush1.bf16.msra.mxu0 %v1438
    %2348 = vmatprep.subr.bf16.mxu0 %v1443
    %2349 = vmatpush1.bf16.msra.mxu0 %v1442
    %2350 = vmatprep.subr.bf16.mxu0 %v1447
    %2351 = vmatpush1.bf16.msra.mxu0 %v1446
    %2352 = vmatprep.subr.bf16.mxu0 %v1451
    %2353 = vmatpush1.bf16.msra.mxu0 %v1450
    %2354 = vmatprep.subr.bf16.mxu0 %v1455
    %2355 = vmatpush1.bf16.msra.mxu0 %v1454
    %2356 = vmatprep.subr.bf16.mxu0 %v1459
    %2357 = vmatpush1.bf16.msra.mxu0 %v1458
    %2358 = vmatprep.subr.bf16.mxu0 %v1463
    %2359 = vmatpush1.bf16.msra.mxu0 %v1462
    %2360 = vmatprep.subr.bf16.mxu0 %v1467
    %2361 = vmatpush1.bf16.msra.mxu0 %v1466
    %2362 = vmatprep.subr.bf16.mxu0 0
    %2363 = vmatpush1.bf16.msra.mxu0 0
    %2364 = vmatprep.subr.bf16.mxu0 0
    %2365 = vmatpush1.bf16.msra.mxu0 0
    %2366 = vmatprep.subr.bf16.mxu0 0
    %2367 = vmatpush1.bf16.msra.mxu0 0
    %2368 = vmatprep.subr.bf16.mxu0 0
    %2369 = vmatpush1.bf16.msra.mxu0 0
    %2370 = vmatprep.subr.bf16.mxu0 0
    %2371 = vmatpush1.bf16.msra.mxu0 0
    %2372 = vmatprep.subr.bf16.mxu0 0
    %2373 = vmatpush1.bf16.msra.mxu0 0
    %2374 = vmatprep.subr.bf16.mxu0 0
    %2375 = vmatpush1.bf16.msra.mxu0 0
    %2376 = vmatprep.subr.bf16.mxu0 0
    %2377 = vmatpush1.bf16.msra.mxu0 0
    %2378 = vmatprep.mubr.bf16.mxu0 0
    %2379 = vmatmul.mubr.bf16.gmra.mrb[0].mxu0 %v2304
    %v2380 = vpop.f32.mrb[0].mxu0
    %v2381 = vadd.f32 0.0, %v2380
    %v2382 = vpop.f32.mrb[0].mxu0
    %v2383 = vadd.f32 0.0, %v2382
    %v2384 = vpop.f32.mrb[0].mxu0
    %v2385 = vpop.f32.mrb[0].mxu0
    %2386 = vdwg.mxu0
    %v2387 = vadd.f32 %v2300, %v2340
    %v2388 = vadd.f32 %v2301, %v2342
    %v2389 = vadd.f32 %v2302, %v2381
    %v2390 = vadd.f32 %v2303, %v2383
    %v2391 = vxor.u32 %v2387, 2147483648
    %v2392 = vmul.f32 %v2391, 1.442695
    %v2393 = vpow.pop %v2392
    %v2394 = vadd.f32 %v2393, 1.0
    %v2395 = vrcp.pop %v2394
    %v2396 = vmul.f32 1.0, %v2395
    %v2397 = vxor.u32 %v2388, 2147483648
    %v2398 = vmul.f32 %v2397, 1.442695
    %v2399 = vpow.pop %v2398
    %v2400 = vadd.f32 %v2399, 1.0
    %v2401 = vrcp.pop %v2400
    %v2402 = vmul.f32 1.0, %v2401
    %v2403 = vtanh.pop %v2389
    %v2404 = vxor.u32 %v2390, 2147483648
    %v2405 = vmul.f32 %v2404, 1.442695
    %v2406 = vpow.pop %v2405
    %v2407 = vadd.f32 %v2406, 1.0
    %v2408 = vrcp.pop %v2407
    %v2409 = vmul.f32 1.0, %v2408
    %v2410 = vmul.f32 %v2402, %v2297
    %v2411 = vmul.f32 %v2396, %v2403
    %v2412 = vadd.f32 %v2410, %v2411
    %v2413 = vtanh.pop %v2412
    %v2414 = vmul.f32 %v2409, %v2413
    %v2415 = vpack.c.bf16 %v2414, %v2414
    %v2416 = vld [vmem:[#allocation11] sm:$0xff]
    %v2417 = vld [vmem:[#allocation11 + $0x8] sm:$0xff]
    %v2418 = vld [vmem:[#allocation11 + $0x10] sm:$0xff]
    %v2419 = vld [vmem:[#allocation11 + $0x18] sm:$0xff]
    %v2420 = vld [vmem:[#allocation11 + $0x20] sm:$0xff]
    %v2421 = vld [vmem:[#allocation11 + $0x28] sm:$0xff]
    %v2422 = vld [vmem:[#allocation11 + $0x30] sm:$0xff]
    %v2423 = vld [vmem:[#allocation11 + $0x38] sm:$0xff]
    %v2424 = vld [vmem:[#allocation11 + $0x40] sm:$0xff]
    %v2425 = vld [vmem:[#allocation11 + $0x48] sm:$0xff]
    %v2426 = vld [vmem:[#allocation11 + $0x50] sm:$0xff]
    %v2427 = vld [vmem:[#allocation11 + $0x58] sm:$0xff]
    %v2428 = vld [vmem:[#allocation11 + $0x60] sm:$0xff]
    %v2429 = vld [vmem:[#allocation11 + $0x68] sm:$0xff]
    %v2430 = vld [vmem:[#allocation11 + $0x70] sm:$0xff]
    %v2431 = vld [vmem:[#allocation11 + $0x78] sm:$0xff]
    %v2432 = vpack.c.bf16 %v2412, %v2412
    %v2433 = vld [vmem:[#allocation11 + $0x80] sm:$0xff]
    %v2434 = vld [vmem:[#allocation11 + $0x88] sm:$0xff]
    %v2435 = vld [vmem:[#allocation11 + $0x90] sm:$0xff]
    %v2436 = vld [vmem:[#allocation11 + $0x98] sm:$0xff]
    %v2437 = vld [vmem:[#allocation11 + $0xa0] sm:$0xff]
    %v2438 = vld [vmem:[#allocation11 + $0xa8] sm:$0xff]
    %v2439 = vld [vmem:[#allocation11 + $0xb0] sm:$0xff]
    %v2440 = vld [vmem:[#allocation11 + $0xb8] sm:$0xff]
    %v2441 = vld [vmem:[#allocation11 + $0xc0] sm:$0xff]
    %v2442 = vld [vmem:[#allocation11 + $0xc8] sm:$0xff]
    %v2443 = vld [vmem:[#allocation11 + $0xd0] sm:$0xff]
    %v2444 = vld [vmem:[#allocation11 + $0xd8] sm:$0xff]
    %v2445 = vld [vmem:[#allocation11 + $0xe0] sm:$0xff]
    %v2446 = vld [vmem:[#allocation11 + $0xe8] sm:$0xff]
    %v2447 = vld [vmem:[#allocation11 + $0xf0] sm:$0xff]
    %v2448 = vld [vmem:[#allocation11 + $0xf8] sm:$0xff]
    %v2465 = vunpack.c.l.b16 %v2433
    %v2466 = vunpack.c.h.b16 %v2433
    %v2467 = vunpack.c.l.b16 %v2434
    %v2468 = vunpack.c.h.b16 %v2434
    %v2469 = vunpack.c.l.b16 %v2435
    %v2470 = vunpack.c.h.b16 %v2435
    %v2471 = vunpack.c.l.b16 %v2436
    %v2472 = vunpack.c.h.b16 %v2436
    %v2473 = vunpack.c.l.b16 %v2437
    %v2474 = vunpack.c.h.b16 %v2437
    %v2475 = vunpack.c.l.b16 %v2438
    %v2476 = vunpack.c.h.b16 %v2438
    %v2477 = vunpack.c.l.b16 %v2439
    %v2478 = vunpack.c.h.b16 %v2439
    %v2479 = vunpack.c.l.b16 %v2440
    %v2480 = vunpack.c.h.b16 %v2440
    %v2481 = vunpack.c.l.b16 %v2441
    %v2482 = vunpack.c.h.b16 %v2441
    %v2483 = vunpack.c.l.b16 %v2442
    %v2484 = vunpack.c.h.b16 %v2442
    %v2485 = vunpack.c.l.b16 %v2443
    %v2486 = vunpack.c.h.b16 %v2443
    %v2487 = vunpack.c.l.b16 %v2444
    %v2488 = vunpack.c.h.b16 %v2444
    %v2489 = vunpack.c.l.b16 %v2445
    %v2490 = vunpack.c.h.b16 %v2445
    %v2491 = vunpack.c.l.b16 %v2446
    %v2492 = vunpack.c.h.b16 %v2446
    %v2493 = vunpack.c.l.b16 %v2447
    %v2494 = vunpack.c.h.b16 %v2447
    %v2495 = vunpack.c.l.b16 %v2448
    %v2496 = vunpack.c.h.b16 %v2448
    %v2497 = vpack.c.b16 %v2467, %v2465
    %v2498 = vpack.c.b16 %v2468, %v2466
    %v2499 = vpack.c.b16 %v2471, %v2469
    %v2500 = vpack.c.b16 %v2472, %v2470
    %v2501 = vpack.c.b16 %v2475, %v2473
    %v2502 = vpack.c.b16 %v2476, %v2474
    %v2503 = vpack.c.b16 %v2479, %v2477
    %v2504 = vpack.c.b16 %v2480, %v2478
    %v2505 = vpack.c.b16 %v2483, %v2481
    %v2506 = vpack.c.b16 %v2484, %v2482
    %v2507 = vpack.c.b16 %v2487, %v2485
    %v2508 = vpack.c.b16 %v2488, %v2486
    %v2509 = vpack.c.b16 %v2491, %v2489
    %v2510 = vpack.c.b16 %v2492, %v2490
    %v2511 = vpack.c.b16 %v2495, %v2493
    %v2512 = vpack.c.b16 %v2496, %v2494
    %2529 = vmatprep.subr.bf16.mxu0 %v2498
    %2530 = vmatpush1.bf16.msra.mxu0 %v2497
    %2531 = vmatprep.subr.bf16.mxu0 %v2500
    %2532 = vmatpush1.bf16.msra.mxu0 %v2499
    %2533 = vmatprep.subr.bf16.mxu0 %v2502
    %2534 = vmatpush1.bf16.msra.mxu0 %v2501
    %2535 = vmatprep.subr.bf16.mxu0 %v2504
    %2536 = vmatpush1.bf16.msra.mxu0 %v2503
    %2537 = vmatprep.subr.bf16.mxu0 %v2506
    %2538 = vmatpush1.bf16.msra.mxu0 %v2505
    %2539 = vmatprep.subr.bf16.mxu0 %v2508
    %2540 = vmatpush1.bf16.msra.mxu0 %v2507
    %2541 = vmatprep.subr.bf16.mxu0 %v2510
    %2542 = vmatpush1.bf16.msra.mxu0 %v2509
    %2543 = vmatprep.subr.bf16.mxu0 %v2512
    %2544 = vmatpush1.bf16.msra.mxu0 %v2511
    %2545 = vmatprep.subr.bf16.mxu0 0
    %2546 = vmatpush1.bf16.msra.mxu0 0
    %2547 = vmatprep.subr.bf16.mxu0 0
    %2548 = vmatpush1.bf16.msra.mxu0 0
    %2549 = vmatprep.subr.bf16.mxu0 0
    %2550 = vmatpush1.bf16.msra.mxu0 0
    %2551 = vmatprep.subr.bf16.mxu0 0
    %2552 = vmatpush1.bf16.msra.mxu0 0
    %2553 = vmatprep.subr.bf16.mxu0 0
    %2554 = vmatpush1.bf16.msra.mxu0 0
    %2555 = vmatprep.subr.bf16.mxu0 0
    %2556 = vmatpush1.bf16.msra.mxu0 0
    %2557 = vmatprep.subr.bf16.mxu0 0
    %2558 = vmatpush1.bf16.msra.mxu0 0
    %2559 = vmatprep.subr.bf16.mxu0 0
    %2560 = vmatpush1.bf16.msra.mxu0 0
    %2561 = vmatprep.mubr.bf16.mxu0 0
    %2562 = vmatmul.mubr.bf16.gmra.mrb[0].mxu0 %v2432
    %v2563 = vpop.f32.mrb[0].mxu0
    %v2564 = vadd.f32 0.0, %v2563
    %v2565 = vpop.f32.mrb[0].mxu0
    %v2566 = vadd.f32 0.0, %v2565
    %v2567 = vpop.f32.mrb[0].mxu0
    %v2568 = vpop.f32.mrb[0].mxu0
    %2569 = vdwg.mxu0
    %v2586 = vunpack.c.l.b16 %v2416
    %v2587 = vunpack.c.h.b16 %v2416
    %v2588 = vunpack.c.l.b16 %v2417
    %v2589 = vunpack.c.h.b16 %v2417
    %v2590 = vunpack.c.l.b16 %v2418
    %v2591 = vunpack.c.h.b16 %v2418
    %v2592 = vunpack.c.l.b16 %v2419
    %v2593 = vunpack.c.h.b16 %v2419
    %v2594 = vunpack.c.l.b16 %v2420
    %v2595 = vunpack.c.h.b16 %v2420
    %v2596 = vunpack.c.l.b16 %v2421
    %v2597 = vunpack.c.h.b16 %v2421
    %v2598 = vunpack.c.l.b16 %v2422
    %v2599 = vunpack.c.h.b16 %v2422
    %v2600 = vunpack.c.l.b16 %v2423
    %v2601 = vunpack.c.h.b16 %v2423
    %v2602 = vunpack.c.l.b16 %v2424
    %v2603 = vunpack.c.h.b16 %v2424
    %v2604 = vunpack.c.l.b16 %v2425
    %v2605 = vunpack.c.h.b16 %v2425
    %v2606 = vunpack.c.l.b16 %v2426
    %v2607 = vunpack.c.h.b16 %v2426
    %v2608 = vunpack.c.l.b16 %v2427
    %v2609 = vunpack.c.h.b16 %v2427
    %v2610 = vunpack.c.l.b16 %v2428
    %v2611 = vunpack.c.h.b16 %v2428
    %v2612 = vunpack.c.l.b16 %v2429
    %v2613 = vunpack.c.h.b16 %v2429
    %v2614 = vunpack.c.l.b16 %v2430
    %v2615 = vunpack.c.h.b16 %v2430
    %v2616 = vunpack.c.l.b16 %v2431
    %v2617 = vunpack.c.h.b16 %v2431
    %v2618 = vpack.c.b16 %v2588, %v2586
    %v2619 = vpack.c.b16 %v2589, %v2587
    %v2620 = vpack.c.b16 %v2592, %v2590
    %v2621 = vpack.c.b16 %v2593, %v2591
    %v2622 = vpack.c.b16 %v2596, %v2594
    %v2623 = vpack.c.b16 %v2597, %v2595
    %v2624 = vpack.c.b16 %v2600, %v2598
    %v2625 = vpack.c.b16 %v2601, %v2599
    %v2626 = vpack.c.b16 %v2604, %v2602
    %v2627 = vpack.c.b16 %v2605, %v2603
    %v2628 = vpack.c.b16 %v2608, %v2606
    %v2629 = vpack.c.b16 %v2609, %v2607
    %v2630 = vpack.c.b16 %v2612, %v2610
    %v2631 = vpack.c.b16 %v2613, %v2611
    %v2632 = vpack.c.b16 %v2616, %v2614
    %v2633 = vpack.c.b16 %v2617, %v2615
    %2650 = vmatprep.subr.bf16.mxu0 %v2619
    %2651 = vmatpush1.bf16.msra.mxu0 %v2618
    %2652 = vmatprep.subr.bf16.mxu0 %v2621
    %2653 = vmatpush1.bf16.msra.mxu0 %v2620
    %2654 = vmatprep.subr.bf16.mxu0 %v2623
    %2655 = vmatpush1.bf16.msra.mxu0 %v2622
    %2656 = vmatprep.subr.bf16.mxu0 %v2625
    %2657 = vmatpush1.bf16.msra.mxu0 %v2624
    %2658 = vmatprep.subr.bf16.mxu0 %v2627
    %2659 = vmatpush1.bf16.msra.mxu0 %v2626
    %2660 = vmatprep.subr.bf16.mxu0 %v2629
    %2661 = vmatpush1.bf16.msra.mxu0 %v2628
    %2662 = vmatprep.subr.bf16.mxu0 %v2631
    %2663 = vmatpush1.bf16.msra.mxu0 %v2630
    %2664 = vmatprep.subr.bf16.mxu0 %v2633
    %2665 = vmatpush1.bf16.msra.mxu0 %v2632
    %2666 = vmatprep.subr.bf16.mxu0 0
    %2667 = vmatpush1.bf16.msra.mxu0 0
    %2668 = vmatprep.subr.bf16.mxu0 0
    %2669 = vmatpush1.bf16.msra.mxu0 0
    %2670 = vmatprep.subr.bf16.mxu0 0
    %2671 = vmatpush1.bf16.msra.mxu0 0
    %2672 = vmatprep.subr.bf16.mxu0 0
    %2673 = vmatpush1.bf16.msra.mxu0 0
    %2674 = vmatprep.subr.bf16.mxu0 0
    %2675 = vmatpush1.bf16.msra.mxu0 0
    %2676 = vmatprep.subr.bf16.mxu0 0
    %2677 = vmatpush1.bf16.msra.mxu0 0
    %2678 = vmatprep.subr.bf16.mxu0 0
    %2679 = vmatpush1.bf16.msra.mxu0 0
    %2680 = vmatprep.subr.bf16.mxu0 0
    %2681 = vmatpush1.bf16.msra.mxu0 0
    %2682 = vmatprep.mubr.bf16.mxu0 0
    %2683 = vmatmul.mubr.bf16.gmra.mrb[0].mxu0 %v2415
    %v2684 = vpop.f32.mrb[0].mxu0
    %v2685 = vadd.f32 %v2564, %v2684
    %v2686 = vpop.f32.mrb[0].mxu0
    %v2687 = vadd.f32 %v2566, %v2686
    %v2688 = vpop.f32.mrb[0].mxu0
    %v2689 = vpop.f32.mrb[0].mxu0
    %2690 = vdwg.mxu0
    %v2691 = vld [vmem:[%s9] sm:$0x3]
    %v2693 = vlaneseq
    %v2694 = vshrl.u32 %v2693, 7
    %v2695 = vsub.s32 0, %v2694
    %v2696 = vrot.slane %v2691, %v2695
    %v2697 = vlaneseq
    %v2698 = vshrl.u32 %v2697, 7
    %v2699 = vsub.s32 1, %v2698
    %v2700 = vrot.slane %v2691, %v2699
    %v2703 = vadd.f32 %v2685, %v2696
    %v2704 = vadd.f32 %v2687, %v2700
    %v2705 = vtanh.pop %v2703
    %v2706 = vtanh.pop %v2704
    %v2707 = vmul.f32 %v638, %v2705
    %v2708 = vmul.f32 %v639, %v2706
    %v2709 = vpack.c.bf16 %v2707, %v2707
    %v2710 = vpack.c.bf16 %v2708, %v2708
    %v2711 = vld [vmem:[#allocation12] sm:$0xff]
    %v2712 = vld [vmem:[#allocation12 + $0x8] sm:$0xff]
    %v2713 = vld [vmem:[#allocation12 + $0x10] sm:$0xff]
    %v2714 = vld [vmem:[#allocation12 + $0x18] sm:$0xff]
    %v2715 = vld [vmem:[#allocation12 + $0x20] sm:$0xff]
    %v2716 = vld [vmem:[#allocation12 + $0x28] sm:$0xff]
    %v2717 = vld [vmem:[#allocation12 + $0x30] sm:$0xff]
    %v2718 = vld [vmem:[#allocation12 + $0x38] sm:$0xff]
    %v2719 = vld [vmem:[#allocation12 + $0x40] sm:$0xff]
    %v2720 = vld [vmem:[#allocation12 + $0x48] sm:$0xff]
    %v2721 = vld [vmem:[#allocation12 + $0x50] sm:$0xff]
    %v2722 = vld [vmem:[#allocation12 + $0x58] sm:$0xff]
    %v2723 = vld [vmem:[#allocation12 + $0x60] sm:$0xff]
    %v2724 = vld [vmem:[#allocation12 + $0x68] sm:$0xff]
    %v2725 = vld [vmem:[#allocation12 + $0x70] sm:$0xff]
    %v2726 = vld [vmem:[#allocation12 + $0x78] sm:$0xff]
    %v2727 = vld [vmem:[#allocation12 + $0x80] sm:$0xff]
    %v2728 = vld [vmem:[#allocation12 + $0x88] sm:$0xff]
    %v2729 = vld [vmem:[#allocation12 + $0x90] sm:$0xff]
    %v2730 = vld [vmem:[#allocation12 + $0x98] sm:$0xff]
    %v2731 = vld [vmem:[#allocation12 + $0xa0] sm:$0xff]
    %v2732 = vld [vmem:[#allocation12 + $0xa8] sm:$0xff]
    %v2733 = vld [vmem:[#allocation12 + $0xb0] sm:$0xff]
    %v2734 = vld [vmem:[#allocation12 + $0xb8] sm:$0xff]
    %v2735 = vld [vmem:[#allocation12 + $0xc0] sm:$0xff]
    %v2736 = vld [vmem:[#allocation12 + $0xc8] sm:$0xff]
    %v2737 = vld [vmem:[#allocation12 + $0xd0] sm:$0xff]
    %v2738 = vld [vmem:[#allocation12 + $0xd8] sm:$0xff]
    %v2739 = vld [vmem:[#allocation12 + $0xe0] sm:$0xff]
    %v2740 = vld [vmem:[#allocation12 + $0xe8] sm:$0xff]
    %v2741 = vld [vmem:[#allocation12 + $0xf0] sm:$0xff]
    %v2742 = vld [vmem:[#allocation12 + $0xf8] sm:$0xff]
    %v2743 = vld [vmem:[%s11] sm:$0x3]
    %v2745 = vlaneseq
    %v2746 = vshrl.u32 %v2745, 7
    %v2747 = vsub.s32 0, %v2746
    %v2748 = vrot.slane %v2743, %v2747
    %v2749 = vlaneseq
    %v2750 = vshrl.u32 %v2749, 7
    %v2751 = vsub.s32 1, %v2750
    %v2752 = vrot.slane %v2743, %v2751
    %v2787 = vunpack.c.l.b16 %v2711
    %v2788 = vunpack.c.h.b16 %v2711
    %v2789 = vunpack.c.l.b16 %v2712
    %v2790 = vunpack.c.h.b16 %v2712
    %v2791 = vunpack.c.l.b16 %v2713
    %v2792 = vunpack.c.h.b16 %v2713
    %v2793 = vunpack.c.l.b16 %v2714
    %v2794 = vunpack.c.h.b16 %v2714
    %v2795 = vunpack.c.l.b16 %v2715
    %v2796 = vunpack.c.h.b16 %v2715
    %v2797 = vunpack.c.l.b16 %v2716
    %v2798 = vunpack.c.h.b16 %v2716
    %v2799 = vunpack.c.l.b16 %v2717
    %v2800 = vunpack.c.h.b16 %v2717
    %v2801 = vunpack.c.l.b16 %v2718
    %v2802 = vunpack.c.h.b16 %v2718
    %v2803 = vunpack.c.l.b16 %v2719
    %v2804 = vunpack.c.h.b16 %v2719
    %v2805 = vunpack.c.l.b16 %v2720
    %v2806 = vunpack.c.h.b16 %v2720
    %v2807 = vunpack.c.l.b16 %v2721
    %v2808 = vunpack.c.h.b16 %v2721
    %v2809 = vunpack.c.l.b16 %v2722
    %v2810 = vunpack.c.h.b16 %v2722
    %v2811 = vunpack.c.l.b16 %v2723
    %v2812 = vunpack.c.h.b16 %v2723
    %v2813 = vunpack.c.l.b16 %v2724
    %v2814 = vunpack.c.h.b16 %v2724
    %v2815 = vunpack.c.l.b16 %v2725
    %v2816 = vunpack.c.h.b16 %v2725
    %v2817 = vunpack.c.l.b16 %v2726
    %v2818 = vunpack.c.h.b16 %v2726
    %v2819 = vunpack.c.l.b16 %v2727
    %v2820 = vunpack.c.h.b16 %v2727
    %v2821 = vunpack.c.l.b16 %v2728
    %v2822 = vunpack.c.h.b16 %v2728
    %v2823 = vunpack.c.l.b16 %v2729
    %v2824 = vunpack.c.h.b16 %v2729
    %v2825 = vunpack.c.l.b16 %v2730
    %v2826 = vunpack.c.h.b16 %v2730
    %v2827 = vunpack.c.l.b16 %v2731
    %v2828 = vunpack.c.h.b16 %v2731
    %v2829 = vunpack.c.l.b16 %v2732
    %v2830 = vunpack.c.h.b16 %v2732
    %v2831 = vunpack.c.l.b16 %v2733
    %v2832 = vunpack.c.h.b16 %v2733
    %v2833 = vunpack.c.l.b16 %v2734
    %v2834 = vunpack.c.h.b16 %v2734
    %v2835 = vunpack.c.l.b16 %v2735
    %v2836 = vunpack.c.h.b16 %v2735
    %v2837 = vunpack.c.l.b16 %v2736
    %v2838 = vunpack.c.h.b16 %v2736
    %v2839 = vunpack.c.l.b16 %v2737
    %v2840 = vunpack.c.h.b16 %v2737
    %v2841 = vunpack.c.l.b16 %v2738
    %v2842 = vunpack.c.h.b16 %v2738
    %v2843 = vunpack.c.l.b16 %v2739
    %v2844 = vunpack.c.h.b16 %v2739
    %v2845 = vunpack.c.l.b16 %v2740
    %v2846 = vunpack.c.h.b16 %v2740
    %v2847 = vunpack.c.l.b16 %v2741
    %v2848 = vunpack.c.h.b16 %v2741
    %v2849 = vunpack.c.l.b16 %v2742
    %v2850 = vunpack.c.h.b16 %v2742
    %v2851 = vpack.c.b16 %v2789, %v2787
    %v2852 = vpack.c.b16 %v2790, %v2788
    %v2853 = vpack.c.b16 %v2793, %v2791
    %v2854 = vpack.c.b16 %v2794, %v2792
    %v2855 = vpack.c.b16 %v2797, %v2795
    %v2856 = vpack.c.b16 %v2798, %v2796
    %v2857 = vpack.c.b16 %v2801, %v2799
    %v2858 = vpack.c.b16 %v2802, %v2800
    %v2859 = vpack.c.b16 %v2805, %v2803
    %v2860 = vpack.c.b16 %v2806, %v2804
    %v2861 = vpack.c.b16 %v2809, %v2807
    %v2862 = vpack.c.b16 %v2810, %v2808
    %v2863 = vpack.c.b16 %v2813, %v2811
    %v2864 = vpack.c.b16 %v2814, %v2812
    %v2865 = vpack.c.b16 %v2817, %v2815
    %v2866 = vpack.c.b16 %v2818, %v2816
    %v2867 = vpack.c.b16 %v2821, %v2819
    %v2868 = vpack.c.b16 %v2822, %v2820
    %v2869 = vpack.c.b16 %v2825, %v2823
    %v2870 = vpack.c.b16 %v2826, %v2824
    %v2871 = vpack.c.b16 %v2829, %v2827
    %v2872 = vpack.c.b16 %v2830, %v2828
    %v2873 = vpack.c.b16 %v2833, %v2831
    %v2874 = vpack.c.b16 %v2834, %v2832
    %v2875 = vpack.c.b16 %v2837, %v2835
    %v2876 = vpack.c.b16 %v2838, %v2836
    %v2877 = vpack.c.b16 %v2841, %v2839
    %v2878 = vpack.c.b16 %v2842, %v2840
    %v2879 = vpack.c.b16 %v2845, %v2843
    %v2880 = vpack.c.b16 %v2846, %v2844
    %v2881 = vpack.c.b16 %v2849, %v2847
    %v2882 = vpack.c.b16 %v2850, %v2848
    %2915 = vmatprep.subr.bf16.mxu0 %v2852
    %2916 = vmatpush1.bf16.msra.mxu0 %v2851
    %2917 = vmatprep.subr.bf16.mxu0 %v2854
    %2918 = vmatpush1.bf16.msra.mxu0 %v2853
    %2919 = vmatprep.subr.bf16.mxu0 %v2856
    %2920 = vmatpush1.bf16.msra.mxu0 %v2855
    %2921 = vmatprep.subr.bf16.mxu0 %v2858
    %2922 = vmatpush1.bf16.msra.mxu0 %v2857
    %2923 = vmatprep.subr.bf16.mxu0 %v2860
    %2924 = vmatpush1.bf16.msra.mxu0 %v2859
    %2925 = vmatprep.subr.bf16.mxu0 %v2862
    %2926 = vmatpush1.bf16.msra.mxu0 %v2861
    %2927 = vmatprep.subr.bf16.mxu0 %v2864
    %2928 = vmatpush1.bf16.msra.mxu0 %v2863
    %2929 = vmatprep.subr.bf16.mxu0 %v2866
    %2930 = vmatpush1.bf16.msra.mxu0 %v2865
    %2931 = vmatprep.subr.bf16.mxu0 %v2868
    %2932 = vmatpush1.bf16.msra.mxu0 %v2867
    %2933 = vmatprep.subr.bf16.mxu0 %v2870
    %2934 = vmatpush1.bf16.msra.mxu0 %v2869
    %2935 = vmatprep.subr.bf16.mxu0 %v2872
    %2936 = vmatpush1.bf16.msra.mxu0 %v2871
    %2937 = vmatprep.subr.bf16.mxu0 %v2874
    %2938 = vmatpush1.bf16.msra.mxu0 %v2873
    %2939 = vmatprep.subr.bf16.mxu0 %v2876
    %2940 = vmatpush1.bf16.msra.mxu0 %v2875
    %2941 = vmatprep.subr.bf16.mxu0 %v2878
    %2942 = vmatpush1.bf16.msra.mxu0 %v2877
    %2943 = vmatprep.subr.bf16.mxu0 %v2880
    %2944 = vmatpush1.bf16.msra.mxu0 %v2879
    %2945 = vmatprep.subr.bf16.mxu0 %v2882
    %2946 = vmatpush1.bf16.msra.mxu0 %v2881
    %2947 = vmatprep.mubr.bf16.mxu0 %v2710
    %2948 = vmatmul.mubr.bf16.gmra.mrb[0].mxu0 %v2709
    %v2949 = vpop.f32.mrb[0].mxu0
    %v2950 = vadd.f32 %v2748, %v2949
    %v2951 = vpop.f32.mrb[0].mxu0
    %v2952 = vadd.f32 %v2752, %v2951
    %v2953 = vpop.f32.mrb[0].mxu0
    %v2954 = vpop.f32.mrb[0].mxu0
    %2955 = vdwg.mxu0
    %v2956 = vtanh.pop %v2950
    %v2957 = vtanh.pop %v2952
    %v2958 = vpack.c.bf16 %v2956, %v2956
    %v2959 = vpack.c.bf16 %v2957, %v2957
    %v2960 = vld [vmem:[#allocation14] sm:$0xf]
    %v2961 = vld [vmem:[#allocation14 + $0x4] sm:$0xf]
    %v2962 = vld [vmem:[#allocation14 + $0x8] sm:$0xf]
    %v2963 = vld [vmem:[#allocation14 + $0xc] sm:$0xf]
    %v2964 = vld [vmem:[#allocation14 + $0x10] sm:$0xf]
    %v2965 = vld [vmem:[#allocation14 + $0x14] sm:$0xf]
    %v2966 = vld [vmem:[#allocation14 + $0x18] sm:$0xf]
    %v2967 = vld [vmem:[#allocation14 + $0x1c] sm:$0xf]
    %v2968 = vld [vmem:[#allocation14 + $0x20] sm:$0xf]
    %v2969 = vld [vmem:[#allocation14 + $0x24] sm:$0xf]
    %v2970 = vld [vmem:[#allocation14 + $0x28] sm:$0xf]
    %v2971 = vld [vmem:[#allocation14 + $0x2c] sm:$0xf]
    %v2972 = vld [vmem:[#allocation14 + $0x30] sm:$0xf]
    %v2973 = vld [vmem:[#allocation14 + $0x34] sm:$0xf]
    %v2974 = vld [vmem:[#allocation14 + $0x38] sm:$0xf]
    %v2975 = vld [vmem:[#allocation14 + $0x3c] sm:$0xf]
    %v2976 = vld [vmem:[#allocation14 + $0x40] sm:$0xf]
    %v2977 = vld [vmem:[#allocation14 + $0x44] sm:$0xf]
    %v2978 = vld [vmem:[#allocation14 + $0x48] sm:$0xf]
    %v2979 = vld [vmem:[#allocation14 + $0x4c] sm:$0xf]
    %v2980 = vld [vmem:[#allocation14 + $0x50] sm:$0xf]
    %v2981 = vld [vmem:[#allocation14 + $0x54] sm:$0xf]
    %v2982 = vld [vmem:[#allocation14 + $0x58] sm:$0xf]
    %v2983 = vld [vmem:[#allocation14 + $0x5c] sm:$0xf]
    %v2984 = vld [vmem:[#allocation14 + $0x60] sm:$0xf]
    %v2985 = vld [vmem:[#allocation14 + $0x64] sm:$0xf]
    %v2986 = vld [vmem:[#allocation14 + $0x68] sm:$0xf]
    %v2987 = vld [vmem:[#allocation14 + $0x6c] sm:$0xf]
    %v2988 = vld [vmem:[#allocation14 + $0x70] sm:$0xf]
    %v2989 = vld [vmem:[#allocation14 + $0x74] sm:$0xf]
    %v2990 = vld [vmem:[#allocation14 + $0x78] sm:$0xf]
    %v2991 = vld [vmem:[#allocation14 + $0x7c] sm:$0xf]
    %v2992 = vld [vmem:[%s13] sm:$0x1]
    %v2994 = vlaneseq
    %v2995 = vshrl.u32 %v2994, 7
    %v2996 = vsub.s32 0, %v2995
    %v2997 = vrot.slane %v2992, %v2996
    %v3031 = vunpack.c.l.b16 %v2960
    %v3032 = vunpack.c.l.b16 %v2961
    %v3033 = vunpack.c.l.b16 %v2962
    %v3034 = vunpack.c.l.b16 %v2963
    %v3035 = vunpack.c.l.b16 %v2964
    %v3036 = vunpack.c.l.b16 %v2965
    %v3037 = vunpack.c.l.b16 %v2966
    %v3038 = vunpack.c.l.b16 %v2967
    %v3039 = vunpack.c.l.b16 %v2968
    %v3040 = vunpack.c.l.b16 %v2969
    %v3041 = vunpack.c.l.b16 %v2970
    %v3042 = vunpack.c.l.b16 %v2971
    %v3043 = vunpack.c.l.b16 %v2972
    %v3044 = vunpack.c.l.b16 %v2973
    %v3045 = vunpack.c.l.b16 %v2974
    %v3046 = vunpack.c.l.b16 %v2975
    %v3047 = vunpack.c.l.b16 %v2976
    %v3048 = vunpack.c.l.b16 %v2977
    %v3049 = vunpack.c.l.b16 %v2978
    %v3050 = vunpack.c.l.b16 %v2979
    %v3051 = vunpack.c.l.b16 %v2980
    %v3052 = vunpack.c.l.b16 %v2981
    %v3053 = vunpack.c.l.b16 %v2982
    %v3054 = vunpack.c.l.b16 %v2983
    %v3055 = vunpack.c.l.b16 %v2984
    %v3056 = vunpack.c.l.b16 %v2985
    %v3057 = vunpack.c.l.b16 %v2986
    %v3058 = vunpack.c.l.b16 %v2987
    %v3059 = vunpack.c.l.b16 %v2988
    %v3060 = vunpack.c.l.b16 %v2989
    %v3061 = vunpack.c.l.b16 %v2990
    %v3062 = vunpack.c.l.b16 %v2991
    %v3063 = vpack.c.b16 %v3032, %v3031
    %v3064 = vpack.c.b16 %v3034, %v3033
    %v3065 = vpack.c.b16 %v3036, %v3035
    %v3066 = vpack.c.b16 %v3038, %v3037
    %v3067 = vpack.c.b16 %v3040, %v3039
    %v3068 = vpack.c.b16 %v3042, %v3041
    %v3069 = vpack.c.b16 %v3044, %v3043
    %v3070 = vpack.c.b16 %v3046, %v3045
    %v3071 = vpack.c.b16 %v3048, %v3047
    %v3072 = vpack.c.b16 %v3050, %v3049
    %v3073 = vpack.c.b16 %v3052, %v3051
    %v3074 = vpack.c.b16 %v3054, %v3053
    %v3075 = vpack.c.b16 %v3056, %v3055
    %v3076 = vpack.c.b16 %v3058, %v3057
    %v3077 = vpack.c.b16 %v3060, %v3059
    %v3078 = vpack.c.b16 %v3062, %v3061
    %3095 = vmatprep.subr.bf16.mxu0 0
    %3096 = vmatpush1.bf16.msra.mxu0 %v3063
    %3097 = vmatprep.subr.bf16.mxu0 0
    %3098 = vmatpush1.bf16.msra.mxu0 %v3064
    %3099 = vmatprep.subr.bf16.mxu0 0
    %3100 = vmatpush1.bf16.msra.mxu0 %v3065
    %3101 = vmatprep.subr.bf16.mxu0 0
    %3102 = vmatpush1.bf16.msra.mxu0 %v3066
    %3103 = vmatprep.subr.bf16.mxu0 0
    %3104 = vmatpush1.bf16.msra.mxu0 %v3067
    %3105 = vmatprep.subr.bf16.mxu0 0
    %3106 = vmatpush1.bf16.msra.mxu0 %v3068
    %3107 = vmatprep.subr.bf16.mxu0 0
    %3108 = vmatpush1.bf16.msra.mxu0 %v3069
    %3109 = vmatprep.subr.bf16.mxu0 0
    %3110 = vmatpush1.bf16.msra.mxu0 %v3070
    %3111 = vmatprep.subr.bf16.mxu0 0
    %3112 = vmatpush1.bf16.msra.mxu0 %v3071
    %3113 = vmatprep.subr.bf16.mxu0 0
    %3114 = vmatpush1.bf16.msra.mxu0 %v3072
    %3115 = vmatprep.subr.bf16.mxu0 0
    %3116 = vmatpush1.bf16.msra.mxu0 %v3073
    %3117 = vmatprep.subr.bf16.mxu0 0
    %3118 = vmatpush1.bf16.msra.mxu0 %v3074
    %3119 = vmatprep.subr.bf16.mxu0 0
    %3120 = vmatpush1.bf16.msra.mxu0 %v3075
    %3121 = vmatprep.subr.bf16.mxu0 0
    %3122 = vmatpush1.bf16.msra.mxu0 %v3076
    %3123 = vmatprep.subr.bf16.mxu0 0
    %3124 = vmatpush1.bf16.msra.mxu0 %v3077
    %3125 = vmatprep.subr.bf16.mxu0 0
    %3126 = vmatpush1.bf16.msra.mxu0 %v3078
    %3127 = vmatprep.mubr.bf16.mxu0 %v2959
    %3128 = vmatmul.mubr.bf16.gmra.mrb[0].mxu0 %v2958
    %v3129 = vpop.f32.mrb[0].mxu0
    %v3130 = vadd.f32 %v2997, %v3129
    %v3131 = vpop.f32.mrb[0].mxu0
    %v3132 = vpop.f32.mrb[0].mxu0
    %v3133 = vpop.f32.mrb[0].mxu0
    %3134 = vdwg.mxu0
    %3135 = vst [vmem:[#allocation15] sm:$0xff] %v3130
    // Predicated region
    $region86: #{vqa_forward.1} parent=1 // pred_check
      _
    $region87: #{vqa_forward.1} parent=1 // pred_check_branch
      %3137 = sbr.rel (0) target = $region89
    $region88: #{vqa_forward.1} parent=1 // pred_region
      %s3139 = ssub.s32 128, 128
      %3140 = vsyncadd [#allocation5], %s3139
      %s3142 = sshll.u32 [#allocation15], 4
      %s3143 = int_to_ptr.vmem [resolvable:$true] %s3142
      %3145 = dma.vmem_to_hbm [thread:$0]  %s3143, 128, %s14, [#allocation5]
    $region89: #{vqa_forward.1} parent=1 // pred_fallthru
      _
    // Predicated region
    $region90: #{vqa_forward.1} parent=1 // pred_check
      _
    $region91: #{vqa_forward.1} parent=1 // pred_check_branch
      %3147 = sbr.rel (0) target = $region93
    $region92: #{vqa_forward.1} parent=1 // pred_region
      %3148 = dma.done [#allocation5], 128
    $region93: #{vqa_forward.1} parent=1 // pred_fallthru
      _
    %3149 = vsyncpa [#allocation4], 1
    %3150 = vsyncpa [#allocation7], 1
    %3151 = vsyncpa [#allocation10], 1
    %3152 = vsyncpa [#allocation13], 1
    %3153 = vsyncpa [#allocation5], 1

</llo_original>
